<compile_context>
chip_gen: v5e
topology: v5e:2x2
jax: 0.10.0
libtpu: 0.0.40
codegen_flags: <defaults>
</compile_context>

<pallas_src>
import functools

import jax
import jax.numpy as jnp
from jax.experimental import pallas as pl
from jax.experimental.pallas import tpu as pltpu


def _round_up(x, m):
    return (x + m - 1) // m * m


def mlp_kernel(x_ref, wf_ref, bdw_ref, w2_ref, o_ref, *, ext, offsets, nout):
    """One batch-tile per grid step; batch folded onto the lane axis.

    x_ref  : (Cin,  Lin )  halo+slack padded, batch-folded flattened input
    wf_ref : (9, Ch, Cin)  per-tap fc1 weights, W1_t = diag(wdw[:,t]) @ W1
    bdw_ref: (Ch, 1)       depthwise bias
    w2_ref : (Cout, Ch)    fc2 1x1-conv weight
    o_ref  : (Cout, Nout)  padded-grid output slab (halo/slack dropped by the wrapper)
    """
    ch = wf_ref.shape[1]

    def tap(t):
        s = ext + offsets[t]                       # static, >= 0 by construction
        xt = x_ref[:, s:s + nout]                  # (Cin, Nout) static lane slice
        return jnp.dot(wf_ref[t], xt, preferred_element_type=jnp.float32)

    # Depthwise 3x3 folded onto the MXU.  Three independent partial accumulators keep
    # the VPU add chain shallow; the first starts from the (hoisted) bias broadcast.
    acc_a = jnp.broadcast_to(bdw_ref[...], (ch, nout)) + tap(0) + tap(1) + tap(2)
    acc_b = tap(3) + tap(4) + tap(5)
    acc_c = tap(6) + tap(7) + tap(8)

    a = jnp.maximum(acc_a + (acc_b + acc_c), 0.0)  # ReLU; Dropout(p=0.0) == identity

    # fc2 (1x1 conv) == channel matmul; single wide lane-dense store (Nout % 128 == 0).
    out = jnp.dot(w2_ref[...], a, preferred_element_type=jnp.float32)
    o_ref[...] = out.astype(o_ref.dtype)


@functools.partial(jax.jit, static_argnames=("batch_tile",))
def mlp_forward(x_nchw, w1, wdw, bdw, w2, *, batch_tile=None):
    """x_nchw: (N, Cin, H, W) -> (N, Cout, H, W).

    Weights are the PyTorch conv weights with trivial dims squeezed:
      w1 (Ch, Cin), wdw (Ch, 3, 3), bdw (Ch,), w2 (Cout, Ch).
    batch_tile=None -> one grid step (v5e/v6e); batch_tile=2 -> 2 parallel steps (v7x).
    """
    n, cin, h, w = x_nchw.shape
    ch = w1.shape[0]
    cout = w2.shape[0]
    hp, wp = h + 2, w + 2
    lp = hp * wp
    ext = wp + 1                         # max |tap offset| on the flattened padded grid
    lslab = lp + 2 * ext                 # per-image lane slab (data + slack both sides)

    bt = n if batch_tile is None else batch_tile
    assert n % bt == 0 and n // bt >= 1
    steps = n // bt

    nout = _round_up(bt * lslab, 128)    # lane-dense (unmasked) store width
    lin = nout + 2 * ext                 # per-step input lane width (tap slack included)

    # One-time halo pad (fc1 has no bias -> fc1(pad(x)) == pad(fc1(x))), flatten spatial
    # onto lanes, add per-image slack, then fold the batch tile onto the lane axis.
    xp = jnp.pad(x_nchw, ((0, 0), (0, 0), (1, 1), (1, 1))).reshape(n, cin, lp)
    slabs = jnp.pad(xp, ((0, 0), (0, 0), (ext, ext)))                     # (n, cin, lslab)
    x_blk = slabs.reshape(steps, bt, cin, lslab).transpose(0, 2, 1, 3)
    x_blk = x_blk.reshape(steps, cin, bt * lslab)
    x_blk = jnp.pad(x_blk, ((0, 0), (0, 0), (0, lin - bt * lslab)))       # (steps, cin, lin)

    # Pre-fold the nine depthwise taps into fc1: W1_t = diag(wdw[:, t]) @ W1.
    wfold = wdw.reshape(ch, 9).transpose(1, 0)[:, :, None] * w1[None, :, :]  # (9, ch, cin)

    offsets = tuple(dy * wp + dx for dy in (-1, 0, 1) for dx in (-1, 0, 1))
    kernel = functools.partial(mlp_kernel, ext=ext, offsets=offsets, nout=nout)

    out_blk = pl.pallas_call(
        kernel,
        out_shape=jax.ShapeDtypeStruct((steps, cout, nout), x_nchw.dtype),
        grid=(steps,),
        in_specs=[
            pl.BlockSpec((None, cin, lin), lambda i: (i, 0, 0)),
            pl.BlockSpec((9, ch, cin), lambda i: (0, 0, 0)),
            pl.BlockSpec((ch, 1), lambda i: (0, 0)),
            pl.BlockSpec((cout, ch), lambda i: (0, 0)),
        ],
        out_specs=pl.BlockSpec((None, cout, nout), lambda i: (i, 0, 0)),
        compiler_params=pltpu.CompilerParams(
            dimension_semantics=("parallel",)),
    )(x_blk, wfold, bdw.reshape(ch, 1), w2)

    # Unfold batch from the lane axis, drop per-image slack/garbage lanes and the halo.
    out = out_blk[:, :, :bt * lslab].reshape(steps, cout, bt, lslab)
    out = out.transpose(0, 2, 1, 3).reshape(n, cout, lslab)[:, :, :lp]
    return out.reshape(n, cout, hp, wp)[:, :, 1:-1, 1:-1]


def ref_forward(x_nchw, w1, wdw, bdw, w2):
    """Pure-JAX reference: direct transcription of the PyTorch Mlp forward (NCHW)."""
    n, cin, h, w = x_nchw.shape
    hid = jnp.einsum("oc,nchw->nohw", w1, x_nchw)
    hp = jnp.pad(hid, ((0, 0), (0, 0), (1, 1), (1, 1)))
    acc = jnp.zeros_like(hid) + bdw[None, :, None, None]
    for ky in range(3):
        for kx in range(3):
            acc = acc + wdw[None, :, ky, kx, None, None] * hp[:, :, ky:ky + h, kx:kx + w]
    a = jnp.maximum(acc, 0.0)
    return jnp.einsum("oc,nchw->nohw", w2, a)


if __name__ == "__main__":
    # Shapes implied by the module: NCHW feature map, Mlp(dim, hidden = mlp_ratio * dim).
    N, DIM, H, W = 4, 16, 16, 16
    HIDDEN = 4 * DIM            # mlp_ratio = 4.0
    OUT = DIM                   # out_features defaults to in_features

    key = jax.random.PRNGKey(0)
    kx, k1, kd, kb, k2 = jax.random.split(key, 5)
    x = jax.random.normal(kx, (N, DIM, H, W), jnp.float32)
    # PyTorch parameter shapes with trivial dims squeezed:
    w1 = 0.1 * jax.random.normal(k1, (HIDDEN, DIM), jnp.float32)    # fc1.conv.weight (Ch,Cin,1,1)
    wdw = 0.1 * jax.random.normal(kd, (HIDDEN, 3, 3), jnp.float32)  # dwconv.weight   (Ch,1,3,3)
    bdw = 0.1 * jax.random.normal(kb, (HIDDEN,), jnp.float32)       # dwconv.bias     (Ch,)
    w2 = 0.1 * jax.random.normal(k2, (OUT, HIDDEN), jnp.float32)    # fc2.conv.weight (Cout,Ch,1,1)

    ref = jax.block_until_ready(ref_forward(x, w1, wdw, bdw, w2))

    # Single-step path (v5e/v6e default): whole batch folded onto the lane axis.
    out1 = jax.block_until_ready(mlp_forward(x, w1, wdw, bdw, w2))
    assert out1.shape == (N, OUT, H, W), out1.shape
    err1 = float(jnp.max(jnp.abs(out1 - ref)))
    assert jnp.allclose(out1, ref, atol=2e-4, rtol=2e-4), f"max |diff| = {err1}"

    # Two-step "parallel" grid path (v7x, one batch pair per TensorCore).
    out2 = jax.block_until_ready(mlp_forward(x, w1, wdw, bdw, w2, batch_tile=2))
    err2 = float(jnp.max(jnp.abs(out2 - ref)))
    assert jnp.allclose(out2, ref, atol=2e-4, rtol=2e-4), f"max |diff| = {err2}"

    print("KERNEL_OK")
</pallas_src>

<mosaic_0001>
module attributes {stable_mosaic.version = 11 : i64} {
  func.func @mlp_kernel(%arg0: i32, %arg1: memref<1x16x1574xf32, #tpu.memory_space<vmem>>, %arg2: memref<9x64x16xf32, #tpu.memory_space<vmem>>, %arg3: memref<64x1xf32, #tpu.memory_space<vmem>>, %arg4: memref<16x64xf32, #tpu.memory_space<vmem>>, %arg5: memref<1x16x1536xf32, #tpu.memory_space<vmem>>) attributes {dimension_semantics = [#tpu.dimension_semantics<parallel>], iteration_bounds = array<i64: 1>, scalar_prefetch = 0 : i64, scratch_operands = 0 : i64, tpu.core_type = #tpu.core_type<tc>, window_params = [{transform_indices = @transform_0, window_bounds = array<i64: 1, 16, 1574>}, {pipeline_mode = #tpu.pipeline_mode<synchronous>, transform_indices = @transform_1, window_bounds = array<i64: 9, 64, 16>}, {pipeline_mode = #tpu.pipeline_mode<synchronous>, transform_indices = @transform_2, window_bounds = array<i64: 64, 1>}, {pipeline_mode = #tpu.pipeline_mode<synchronous>, transform_indices = @transform_3, window_bounds = array<i64: 16, 64>}, {transform_indices = @transform_4, window_bounds = array<i64: 1, 16, 1536>}]} {
    %c0 = arith.constant 0 : index
    %c0_0 = arith.constant 0 : index
    %0 = vector.load %arg3[%c0, %c0_0] : memref<64x1xf32, #tpu.memory_space<vmem>>, vector<64x1xf32>
    %1 = vector.shape_cast %0 : vector<64x1xf32> to vector<64x1xf32>
    %2 = vector.broadcast %1 : vector<64x1xf32> to vector<64x1536xf32>
    %c0_1 = arith.constant 0 : index
    %c0_2 = arith.constant 0 : index
    %c0_3 = arith.constant 0 : index
    %3 = vector.load %arg1[%c0_1, %c0_2, %c0_3] : memref<1x16x1574xf32, #tpu.memory_space<vmem>>, vector<1x16x1536xf32>
    %4 = vector.shape_cast %3 : vector<1x16x1536xf32> to vector<16x1536xf32>
    %c0_4 = arith.constant 0 : index
    %c0_5 = arith.constant 0 : index
    %c0_6 = arith.constant 0 : index
    %5 = vector.load %arg2[%c0_4, %c0_5, %c0_6] : memref<9x64x16xf32, #tpu.memory_space<vmem>>, vector<1x64x16xf32>
    %6 = vector.shape_cast %5 : vector<1x64x16xf32> to vector<64x16xf32>
    %cst = arith.constant dense<0.000000e+00> : vector<64x1536xf32>
    %7 = tpu.matmul %6, %4, %cst {dimension_numbers = #tpu.dot_dimension_numbers<[1], [0], [0], [1], [0, 0, 1, 1], [], []>} : vector<64x16xf32>, vector<16x1536xf32>, vector<64x1536xf32> -> vector<64x1536xf32>
    %8 = arith.addf %2, %7 : vector<64x1536xf32>
    %c0_7 = arith.constant 0 : index
    %c0_8 = arith.constant 0 : index
    %c1 = arith.constant 1 : index
    %9 = vector.load %arg1[%c0_7, %c0_8, %c1] : memref<1x16x1574xf32, #tpu.memory_space<vmem>>, vector<1x16x1536xf32>
    %10 = vector.shape_cast %9 : vector<1x16x1536xf32> to vector<16x1536xf32>
    %c1_9 = arith.constant 1 : index
    %c0_10 = arith.constant 0 : index
    %c0_11 = arith.constant 0 : index
    %11 = vector.load %arg2[%c1_9, %c0_10, %c0_11] : memref<9x64x16xf32, #tpu.memory_space<vmem>>, vector<1x64x16xf32>
    %12 = vector.shape_cast %11 : vector<1x64x16xf32> to vector<64x16xf32>
    %cst_12 = arith.constant dense<0.000000e+00> : vector<64x1536xf32>
    %13 = tpu.matmul %12, %10, %cst_12 {dimension_numbers = #tpu.dot_dimension_numbers<[1], [0], [0], [1], [0, 0, 1, 1], [], []>} : vector<64x16xf32>, vector<16x1536xf32>, vector<64x1536xf32> -> vector<64x1536xf32>
    %14 = arith.addf %8, %13 : vector<64x1536xf32>
    %c0_13 = arith.constant 0 : index
    %c0_14 = arith.constant 0 : index
    %c2 = arith.constant 2 : index
    %15 = vector.load %arg1[%c0_13, %c0_14, %c2] : memref<1x16x1574xf32, #tpu.memory_space<vmem>>, vector<1x16x1536xf32>
    %16 = vector.shape_cast %15 : vector<1x16x1536xf32> to vector<16x1536xf32>
    %c2_15 = arith.constant 2 : index
    %c0_16 = arith.constant 0 : index
    %c0_17 = arith.constant 0 : index
    %17 = vector.load %arg2[%c2_15, %c0_16, %c0_17] : memref<9x64x16xf32, #tpu.memory_space<vmem>>, vector<1x64x16xf32>
    %18 = vector.shape_cast %17 : vector<1x64x16xf32> to vector<64x16xf32>
    %cst_18 = arith.constant dense<0.000000e+00> : vector<64x1536xf32>
    %19 = tpu.matmul %18, %16, %cst_18 {dimension_numbers = #tpu.dot_dimension_numbers<[1], [0], [0], [1], [0, 0, 1, 1], [], []>} : vector<64x16xf32>, vector<16x1536xf32>, vector<64x1536xf32> -> vector<64x1536xf32>
    %20 = arith.addf %14, %19 : vector<64x1536xf32>
    %c0_19 = arith.constant 0 : index
    %c0_20 = arith.constant 0 : index
    %c18 = arith.constant 18 : index
    %21 = vector.load %arg1[%c0_19, %c0_20, %c18] : memref<1x16x1574xf32, #tpu.memory_space<vmem>>, vector<1x16x1536xf32>
    %22 = vector.shape_cast %21 : vector<1x16x1536xf32> to vector<16x1536xf32>
    %c3 = arith.constant 3 : index
    %c0_21 = arith.constant 0 : index
    %c0_22 = arith.constant 0 : index
    %23 = vector.load %arg2[%c3, %c0_21, %c0_22] : memref<9x64x16xf32, #tpu.memory_space<vmem>>, vector<1x64x16xf32>
    %24 = vector.shape_cast %23 : vector<1x64x16xf32> to vector<64x16xf32>
    %cst_23 = arith.constant dense<0.000000e+00> : vector<64x1536xf32>
    %25 = tpu.matmul %24, %22, %cst_23 {dimension_numbers = #tpu.dot_dimension_numbers<[1], [0], [0], [1], [0, 0, 1, 1], [], []>} : vector<64x16xf32>, vector<16x1536xf32>, vector<64x1536xf32> -> vector<64x1536xf32>
    %c0_24 = arith.constant 0 : index
    %c0_25 = arith.constant 0 : index
    %c19 = arith.constant 19 : index
    %26 = vector.load %arg1[%c0_24, %c0_25, %c19] : memref<1x16x1574xf32, #tpu.memory_space<vmem>>, vector<1x16x1536xf32>
    %27 = vector.shape_cast %26 : vector<1x16x1536xf32> to vector<16x1536xf32>
    %c4 = arith.constant 4 : index
    %c0_26 = arith.constant 0 : index
    %c0_27 = arith.constant 0 : index
    %28 = vector.load %arg2[%c4, %c0_26, %c0_27] : memref<9x64x16xf32, #tpu.memory_space<vmem>>, vector<1x64x16xf32>
    %29 = vector.shape_cast %28 : vector<1x64x16xf32> to vector<64x16xf32>
    %cst_28 = arith.constant dense<0.000000e+00> : vector<64x1536xf32>
    %30 = tpu.matmul %29, %27, %cst_28 {dimension_numbers = #tpu.dot_dimension_numbers<[1], [0], [0], [1], [0, 0, 1, 1], [], []>} : vector<64x16xf32>, vector<16x1536xf32>, vector<64x1536xf32> -> vector<64x1536xf32>
    %31 = arith.addf %25, %30 : vector<64x1536xf32>
    %c0_29 = arith.constant 0 : index
    %c0_30 = arith.constant 0 : index
    %c20 = arith.constant 20 : index
    %32 = vector.load %arg1[%c0_29, %c0_30, %c20] : memref<1x16x1574xf32, #tpu.memory_space<vmem>>, vector<1x16x1536xf32>
    %33 = vector.shape_cast %32 : vector<1x16x1536xf32> to vector<16x1536xf32>
    %c5 = arith.constant 5 : index
    %c0_31 = arith.constant 0 : index
    %c0_32 = arith.constant 0 : index
    %34 = vector.load %arg2[%c5, %c0_31, %c0_32] : memref<9x64x16xf32, #tpu.memory_space<vmem>>, vector<1x64x16xf32>
    %35 = vector.shape_cast %34 : vector<1x64x16xf32> to vector<64x16xf32>
    %cst_33 = arith.constant dense<0.000000e+00> : vector<64x1536xf32>
    %36 = tpu.matmul %35, %33, %cst_33 {dimension_numbers = #tpu.dot_dimension_numbers<[1], [0], [0], [1], [0, 0, 1, 1], [], []>} : vector<64x16xf32>, vector<16x1536xf32>, vector<64x1536xf32> -> vector<64x1536xf32>
    %37 = arith.addf %31, %36 : vector<64x1536xf32>
    %c0_34 = arith.constant 0 : index
    %c0_35 = arith.constant 0 : index
    %c36 = arith.constant 36 : index
    %38 = vector.load %arg1[%c0_34, %c0_35, %c36] : memref<1x16x1574xf32, #tpu.memory_space<vmem>>, vector<1x16x1536xf32>
    %39 = vector.shape_cast %38 : vector<1x16x1536xf32> to vector<16x1536xf32>
    %c6 = arith.constant 6 : index
    %c0_36 = arith.constant 0 : index
    %c0_37 = arith.constant 0 : index
    %40 = vector.load %arg2[%c6, %c0_36, %c0_37] : memref<9x64x16xf32, #tpu.memory_space<vmem>>, vector<1x64x16xf32>
    %41 = vector.shape_cast %40 : vector<1x64x16xf32> to vector<64x16xf32>
    %cst_38 = arith.constant dense<0.000000e+00> : vector<64x1536xf32>
    %42 = tpu.matmul %41, %39, %cst_38 {dimension_numbers = #tpu.dot_dimension_numbers<[1], [0], [0], [1], [0, 0, 1, 1], [], []>} : vector<64x16xf32>, vector<16x1536xf32>, vector<64x1536xf32> -> vector<64x1536xf32>
    %c0_39 = arith.constant 0 : index
    %c0_40 = arith.constant 0 : index
    %c37 = arith.constant 37 : index
    %43 = vector.load %arg1[%c0_39, %c0_40, %c37] : memref<1x16x1574xf32, #tpu.memory_space<vmem>>, vector<1x16x1536xf32>
    %44 = vector.shape_cast %43 : vector<1x16x1536xf32> to vector<16x1536xf32>
    %c7 = arith.constant 7 : index
    %c0_41 = arith.constant 0 : index
    %c0_42 = arith.constant 0 : index
    %45 = vector.load %arg2[%c7, %c0_41, %c0_42] : memref<9x64x16xf32, #tpu.memory_space<vmem>>, vector<1x64x16xf32>
    %46 = vector.shape_cast %45 : vector<1x64x16xf32> to vector<64x16xf32>
    %cst_43 = arith.constant dense<0.000000e+00> : vector<64x1536xf32>
    %47 = tpu.matmul %46, %44, %cst_43 {dimension_numbers = #tpu.dot_dimension_numbers<[1], [0], [0], [1], [0, 0, 1, 1], [], []>} : vector<64x16xf32>, vector<16x1536xf32>, vector<64x1536xf32> -> vector<64x1536xf32>
    %48 = arith.addf %42, %47 : vector<64x1536xf32>
    %c0_44 = arith.constant 0 : index
    %c0_45 = arith.constant 0 : index
    %c38 = arith.constant 38 : index
    %49 = vector.load %arg1[%c0_44, %c0_45, %c38] : memref<1x16x1574xf32, #tpu.memory_space<vmem>>, vector<1x16x1536xf32>
    %50 = vector.shape_cast %49 : vector<1x16x1536xf32> to vector<16x1536xf32>
    %c8 = arith.constant 8 : index
    %c0_46 = arith.constant 0 : index
    %c0_47 = arith.constant 0 : index
    %51 = vector.load %arg2[%c8, %c0_46, %c0_47] : memref<9x64x16xf32, #tpu.memory_space<vmem>>, vector<1x64x16xf32>
    %52 = vector.shape_cast %51 : vector<1x64x16xf32> to vector<64x16xf32>
    %cst_48 = arith.constant dense<0.000000e+00> : vector<64x1536xf32>
    %53 = tpu.matmul %52, %50, %cst_48 {dimension_numbers = #tpu.dot_dimension_numbers<[1], [0], [0], [1], [0, 0, 1, 1], [], []>} : vector<64x16xf32>, vector<16x1536xf32>, vector<64x1536xf32> -> vector<64x1536xf32>
    %54 = arith.addf %48, %53 : vector<64x1536xf32>
    %55 = arith.addf %37, %54 : vector<64x1536xf32>
    %56 = arith.addf %20, %55 : vector<64x1536xf32>
    %cst_49 = arith.constant 0.000000e+00 : f32
    %57 = vector.broadcast %cst_49 : f32 to vector<64x1536xf32>
    %58 = arith.maximumf %56, %57 : vector<64x1536xf32>
    %c0_50 = arith.constant 0 : index
    %c0_51 = arith.constant 0 : index
    %59 = vector.load %arg4[%c0_50, %c0_51] : memref<16x64xf32, #tpu.memory_space<vmem>>, vector<16x64xf32>
    %cst_52 = arith.constant dense<0.000000e+00> : vector<16x1536xf32>
    %60 = tpu.matmul %59, %58, %cst_52 {dimension_numbers = #tpu.dot_dimension_numbers<[1], [0], [0], [1], [0, 0, 1, 1], [], []>} : vector<16x64xf32>, vector<64x1536xf32>, vector<16x1536xf32> -> vector<16x1536xf32>
    %c0_53 = arith.constant 0 : index
    %c0_54 = arith.constant 0 : index
    %c0_55 = arith.constant 0 : index
    %61 = vector.load %arg5[%c0_53, %c0_54, %c0_55] : memref<1x16x1536xf32, #tpu.memory_space<vmem>>, vector<1x16x1536xf32>
    %62 = vector.shape_cast %61 : vector<1x16x1536xf32> to vector<16x1536xf32>
    %63 = vector.shape_cast %60 : vector<16x1536xf32> to vector<1x16x1536xf32>
    tpu.vector_store %arg5[%c0_53, %c0_54, %c0_55], %63 {strides = array<i32>} : memref<1x16x1536xf32, #tpu.memory_space<vmem>>, vector<1x16x1536xf32>,
    return
  }
  func.func @transform_0(%arg0: i32) -> (i32, i32, i32) {
    %c0_i32 = arith.constant 0 : i32
    %c0_i32_0 = arith.constant 0 : i32
    %c0_i32_1 = arith.constant 0 : i32
    return %arg0, %c0_i32, %c0_i32_0 : i32, i32, i32
  }
  func.func @transform_1(%arg0: i32) -> (i32, i32, i32) {
    %c0_i32 = arith.constant 0 : i32
    %c0_i32_0 = arith.constant 0 : i32
    %c0_i32_1 = arith.constant 0 : i32
    %c0_i32_2 = arith.constant 0 : i32
    return %c0_i32, %c0_i32_0, %c0_i32_1 : i32, i32, i32
  }
  func.func @transform_2(%arg0: i32) -> (i32, i32) {
    %c0_i32 = arith.constant 0 : i32
    %c0_i32_0 = arith.constant 0 : i32
    %c0_i32_1 = arith.constant 0 : i32
    return %c0_i32, %c0_i32_0 : i32, i32
  }
  func.func @transform_3(%arg0: i32) -> (i32, i32) {
    %c0_i32 = arith.constant 0 : i32
    %c0_i32_0 = arith.constant 0 : i32
    %c0_i32_1 = arith.constant 0 : i32
    return %c0_i32, %c0_i32_0 : i32, i32
  }
  func.func @transform_4(%arg0: i32) -> (i32, i32, i32) {
    %c0_i32 = arith.constant 0 : i32
    %c0_i32_0 = arith.constant 0 : i32
    %c0_i32_1 = arith.constant 0 : i32
    return %arg0, %c0_i32, %c0_i32_0 : i32, i32, i32
  }
}

</mosaic_0001>

<llo_original>
// kernel: mlp_forward.1
$region0: #{mlp_forward.1}
  #allocation0 [shape = 'u32[]', space=smem, size = 0x4, offset = 0x4, fixed_abs, tag = 'smem constant byte address 0x4 - core index']
  #allocation1 [shape = 'u32[72,128]{1,0:T(1,128)}', space=vmem, size = 0x9000, scoped, tag = 'internal scratch']
  %s0 = inlined_call_operand.vmem [shape: f32[1,16,1574], index: 0, kind: input, shape index: {}]
  %s1 = inlined_call_operand.vmem [shape: f32[9,64,16], index: 1, kind: input, shape index: {}]
  %s2 = inlined_call_operand.vmem [shape: f32[64,1], index: 2, kind: input, shape index: {}]
  %s3 = inlined_call_operand.vmem [shape: f32[16,64], index: 3, kind: input, shape index: {}]
  %s4 = inlined_call_operand.vmem [shape: f32[1,16,1536], index: 4, kind: output, shape index: {}]
  %s5 = sld [smem:[#allocation0]]
  $region26: #{mlp_forward.1} parent=0
    _
  %s7 = ssub.s32 1, %s5
  %s8 = scalar_select 0, %s7, %s5
  // Predicated region
  $region2: #{mlp_forward.1} parent=0 // pred_check
    _
  $region3: #{mlp_forward.1} parent=0 // pred_check_branch
    %10 = sbr.rel (0) target = $region5
  $region4: #{mlp_forward.1} parent=0 // pred_region
    _
  $region5: #{mlp_forward.1} parent=0 // pred_fallthru
    _
  // Predicated region
  $region6: #{mlp_forward.1} parent=0 // pred_check
    _
  $region7: #{mlp_forward.1} parent=0 // pred_check_branch
    %12 = sbr.rel (0) target = $region9
  $region8: #{mlp_forward.1} parent=0 // pred_region
    _
  $region9: #{mlp_forward.1} parent=0 // pred_fallthru
    _
  // Predicated region
  $region10: #{mlp_forward.1} parent=0 // pred_check
    _
  $region11: #{mlp_forward.1} parent=0 // pred_check_branch
    %14 = sbr.rel (0) target = $region13
  $region12: #{mlp_forward.1} parent=0 // pred_region
    _
  $region13: #{mlp_forward.1} parent=0 // pred_fallthru
    _
  // Predicated region
  $region14: #{mlp_forward.1} parent=0 // pred_check
    _
  $region15: #{mlp_forward.1} parent=0 // pred_check_branch
    %16 = sbr.rel (0) target = $region17
  $region16: #{mlp_forward.1} parent=0 // pred_region
    _
  $region17: #{mlp_forward.1} parent=0 // pred_fallthru
    _
  %v17 = vld [vmem:[%s2] sm:$0xff]
  %v18 = vld [vmem:[%s2 + $0x8] sm:$0xff]
  %v19 = vld [vmem:[%s2 + $0x10] sm:$0xff]
  %v20 = vld [vmem:[%s2 + $0x18] sm:$0xff]
  %v21 = vld [vmem:[%s2 + $0x20] sm:$0xff]
  %v22 = vld [vmem:[%s2 + $0x28] sm:$0xff]
  %v23 = vld [vmem:[%s2 + $0x30] sm:$0xff]
  %v24 = vld [vmem:[%s2 + $0x38] sm:$0xff]
  %26 = vset.pattern.permute.xlu0 0
  %27 = vperm.xlu0 %26, %v17
  %v28 = vpop.permute.xlu0 %27
  %31 = vset.pattern.permute.xlu0 0
  %32 = vperm.xlu0 %31, %v18
  %v33 = vpop.permute.xlu0 %32
  %36 = vset.pattern.permute.xlu0 0
  %37 = vperm.xlu0 %36, %v19
  %v38 = vpop.permute.xlu0 %37
  %41 = vset.pattern.permute.xlu0 0
  %42 = vperm.xlu0 %41, %v20
  %v43 = vpop.permute.xlu0 %42
  %46 = vset.pattern.permute.xlu0 0
  %47 = vperm.xlu0 %46, %v21
  %v48 = vpop.permute.xlu0 %47
  %51 = vset.pattern.permute.xlu0 0
  %52 = vperm.xlu0 %51, %v22
  %v53 = vpop.permute.xlu0 %52
  %56 = vset.pattern.permute.xlu0 0
  %57 = vperm.xlu0 %56, %v23
  %v58 = vpop.permute.xlu0 %57
  %61 = vset.pattern.permute.xlu0 0
  %62 = vperm.xlu0 %61, %v24
  %v63 = vpop.permute.xlu0 %62
  %v65 = vld [vmem:[%s0] sm:$0xff]
  %v66 = vld [vmem:[%s0 + $0x8] sm:$0xff]
  %v67 = vld [vmem:[%s0 + $0x10] sm:$0xff]
  %v68 = vld [vmem:[%s0 + $0x18] sm:$0xff]
  %v69 = vld [vmem:[%s0 + $0x20] sm:$0xff]
  %v70 = vld [vmem:[%s0 + $0x28] sm:$0xff]
  %v71 = vld [vmem:[%s0 + $0x30] sm:$0xff]
  %v72 = vld [vmem:[%s0 + $0x38] sm:$0xff]
  %v73 = vld [vmem:[%s0 + $0x40] sm:$0xff]
  %v74 = vld [vmem:[%s0 + $0x48] sm:$0xff]
  %v75 = vld [vmem:[%s0 + $0x50] sm:$0xff]
  %v76 = vld [vmem:[%s0 + $0x58] sm:$0xff]
  %v77 = vld [vmem:[%s0 + $0x68] sm:$0xff]
  %v78 = vld [vmem:[%s0 + $0x70] sm:$0xff]
  %v79 = vld [vmem:[%s0 + $0x78] sm:$0xff]
  %v80 = vld [vmem:[%s0 + $0x80] sm:$0xff]
  %v81 = vld [vmem:[%s0 + $0x88] sm:$0xff]
  %v82 = vld [vmem:[%s0 + $0x90] sm:$0xff]
  %v83 = vld [vmem:[%s0 + $0x98] sm:$0xff]
  %v84 = vld [vmem:[%s0 + $0xa0] sm:$0xff]
  %v85 = vld [vmem:[%s0 + $0xa8] sm:$0xff]
  %v86 = vld [vmem:[%s0 + $0xb0] sm:$0xff]
  %v87 = vld [vmem:[%s0 + $0xb8] sm:$0xff]
  %v88 = vld [vmem:[%s0 + $0xc0] sm:$0xff]
  %v89 = vld [vmem:[%s1] sm:$0xff]
  %v90 = vld [vmem:[%s1 + $0x8] sm:$0xff]
  %v91 = vld [vmem:[%s1 + $0x10] sm:$0xff]
  %v92 = vld [vmem:[%s1 + $0x18] sm:$0xff]
  %v93 = vld [vmem:[%s1 + $0x20] sm:$0xff]
  %v94 = vld [vmem:[%s1 + $0x28] sm:$0xff]
  %v95 = vld [vmem:[%s1 + $0x30] sm:$0xff]
  %v96 = vld [vmem:[%s1 + $0x38] sm:$0xff]
  %vm97 = vcmask 130048
  %v99 = vsel %vm97, %v89, 0
  %v102 = vsel %vm97, %v90, 0
  %v105 = vsel %vm97, %v91, 0
  %v108 = vsel %vm97, %v92, 0
  %v111 = vsel %vm97, %v93, 0
  %v114 = vsel %vm97, %v94, 0
  %v117 = vsel %vm97, %v95, 0
  %v120 = vsel %vm97, %v96, 0
  %122 = vmatpush.msra.mxu0 0.0
  %123 = vmatpush.msra.mxu0 0.0
  %124 = vmatpush.msra.mxu0 0.0
  %125 = vmatpush.msra.mxu0 0.0
  %126 = vmatpush.msra.mxu0 0.0
  %127 = vmatpush.msra.mxu0 0.0
  %128 = vmatpush.msra.mxu0 0.0
  %129 = vmatpush.msra.mxu0 0.0
  %130 = vmatpush.msra.mxu0 0.0
  %131 = vmatpush.msra.mxu0 0.0
  %132 = vmatpush.msra.mxu0 0.0
  %133 = vmatpush.msra.mxu0 0.0
  %134 = vmatpush.msra.mxu0 0.0
  %135 = vmatpush.msra.mxu0 0.0
  %136 = vmatpush.msra.mxu0 %v77
  %137 = vmatpush.msra.mxu0 %v65
  %138 = vmatmul.f32.gmra.mxu0 %v99
  %v139 = vpop.f32.mrf.mxu0
  %v140 = vadd.f32 0.0, %v139
  %141 = vmatmul.f32.gmra.mxu0 %v102
  %v142 = vpop.f32.mrf.mxu0
  %v143 = vadd.f32 0.0, %v142
  %144 = vmatmul.f32.gmra.mxu0 %v105
  %v145 = vpop.f32.mrf.mxu0
  %v146 = vadd.f32 0.0, %v145
  %147 = vmatmul.f32.gmra.mxu0 %v108
  %v148 = vpop.f32.mrf.mxu0
  %v149 = vadd.f32 0.0, %v148
  %150 = vmatmul.f32.gmra.mxu0 %v111
  %v151 = vpop.f32.mrf.mxu0
  %v152 = vadd.f32 0.0, %v151
  %153 = vmatmul.f32.gmra.mxu0 %v114
  %v154 = vpop.f32.mrf.mxu0
  %v155 = vadd.f32 0.0, %v154
  %156 = vmatmul.f32.gmra.mxu0 %v117
  %v157 = vpop.f32.mrf.mxu0
  %v158 = vadd.f32 0.0, %v157
  %159 = vmatmul.f32.gmra.mxu0 %v120
  %v160 = vpop.f32.mrf.mxu0
  %v161 = vadd.f32 0.0, %v160
  %162 = vdwg.mxu0
  %163 = vmatpush.msra.mxu0 0.0
  %164 = vmatpush.msra.mxu0 0.0
  %165 = vmatpush.msra.mxu0 0.0
  %166 = vmatpush.msra.mxu0 0.0
  %167 = vmatpush.msra.mxu0 0.0
  %168 = vmatpush.msra.mxu0 0.0
  %169 = vmatpush.msra.mxu0 0.0
  %170 = vmatpush.msra.mxu0 0.0
  %171 = vmatpush.msra.mxu0 0.0
  %172 = vmatpush.msra.mxu0 0.0
  %173 = vmatpush.msra.mxu0 0.0
  %174 = vmatpush.msra.mxu0 0.0
  %175 = vmatpush.msra.mxu0 0.0
  %176 = vmatpush.msra.mxu0 0.0
  %177 = vmatpush.msra.mxu0 %v78
  %178 = vmatpush.msra.mxu0 %v66
  %179 = vmatmul.f32.gmra.mxu0 %v99
  %v180 = vpop.f32.mrf.mxu0
  %v181 = vadd.f32 0.0, %v180
  %182 = vmatmul.f32.gmra.mxu0 %v102
  %v183 = vpop.f32.mrf.mxu0
  %v184 = vadd.f32 0.0, %v183
  %185 = vmatmul.f32.gmra.mxu0 %v105
  %v186 = vpop.f32.mrf.mxu0
  %v187 = vadd.f32 0.0, %v186
  %188 = vmatmul.f32.gmra.mxu0 %v108
  %v189 = vpop.f32.mrf.mxu0
  %v190 = vadd.f32 0.0, %v189
  %191 = vmatmul.f32.gmra.mxu0 %v111
  %v192 = vpop.f32.mrf.mxu0
  %v193 = vadd.f32 0.0, %v192
  %194 = vmatmul.f32.gmra.mxu0 %v114
  %v195 = vpop.f32.mrf.mxu0
  %v196 = vadd.f32 0.0, %v195
  %197 = vmatmul.f32.gmra.mxu0 %v117
  %v198 = vpop.f32.mrf.mxu0
  %v199 = vadd.f32 0.0, %v198
  %200 = vmatmul.f32.gmra.mxu0 %v120
  %v201 = vpop.f32.mrf.mxu0
  %v202 = vadd.f32 0.0, %v201
  %203 = vdwg.mxu0
  %204 = vmatpush.msra.mxu0 0.0
  %205 = vmatpush.msra.mxu0 0.0
  %206 = vmatpush.msra.mxu0 0.0
  %207 = vmatpush.msra.mxu0 0.0
  %208 = vmatpush.msra.mxu0 0.0
  %209 = vmatpush.msra.mxu0 0.0
  %210 = vmatpush.msra.mxu0 0.0
  %211 = vmatpush.msra.mxu0 0.0
  %212 = vmatpush.msra.mxu0 0.0
  %213 = vmatpush.msra.mxu0 0.0
  %214 = vmatpush.msra.mxu0 0.0
  %215 = vmatpush.msra.mxu0 0.0
  %216 = vmatpush.msra.mxu0 0.0
  %217 = vmatpush.msra.mxu0 0.0
  %218 = vmatpush.msra.mxu0 %v79
  %219 = vmatpush.msra.mxu0 %v67
  %220 = vmatmul.f32.gmra.mxu0 %v99
  %v221 = vpop.f32.mrf.mxu0
  %v222 = vadd.f32 0.0, %v221
  %223 = vmatmul.f32.gmra.mxu0 %v102
  %v224 = vpop.f32.mrf.mxu0
  %v225 = vadd.f32 0.0, %v224
  %226 = vmatmul.f32.gmra.mxu0 %v105
  %v227 = vpop.f32.mrf.mxu0
  %v228 = vadd.f32 0.0, %v227
  %229 = vmatmul.f32.gmra.mxu0 %v108
  %v230 = vpop.f32.mrf.mxu0
  %v231 = vadd.f32 0.0, %v230
  %232 = vmatmul.f32.gmra.mxu0 %v111
  %v233 = vpop.f32.mrf.mxu0
  %v234 = vadd.f32 0.0, %v233
  %235 = vmatmul.f32.gmra.mxu0 %v114
  %v236 = vpop.f32.mrf.mxu0
  %v237 = vadd.f32 0.0, %v236
  %238 = vmatmul.f32.gmra.mxu0 %v117
  %v239 = vpop.f32.mrf.mxu0
  %v240 = vadd.f32 0.0, %v239
  %241 = vmatmul.f32.gmra.mxu0 %v120
  %v242 = vpop.f32.mrf.mxu0
  %v243 = vadd.f32 0.0, %v242
  %244 = vdwg.mxu0
  %245 = vmatpush.msra.mxu0 0.0
  %246 = vmatpush.msra.mxu0 0.0
  %247 = vmatpush.msra.mxu0 0.0
  %248 = vmatpush.msra.mxu0 0.0
  %249 = vmatpush.msra.mxu0 0.0
  %250 = vmatpush.msra.mxu0 0.0
  %251 = vmatpush.msra.mxu0 0.0
  %252 = vmatpush.msra.mxu0 0.0
  %253 = vmatpush.msra.mxu0 0.0
  %254 = vmatpush.msra.mxu0 0.0
  %255 = vmatpush.msra.mxu0 0.0
  %256 = vmatpush.msra.mxu0 0.0
  %257 = vmatpush.msra.mxu0 0.0
  %258 = vmatpush.msra.mxu0 0.0
  %259 = vmatpush.msra.mxu0 %v80
  %260 = vmatpush.msra.mxu0 %v68
  %261 = vmatmul.f32.gmra.mxu0 %v99
  %v262 = vpop.f32.mrf.mxu0
  %v263 = vadd.f32 0.0, %v262
  %264 = vmatmul.f32.gmra.mxu0 %v102
  %v265 = vpop.f32.mrf.mxu0
  %v266 = vadd.f32 0.0, %v265
  %267 = vmatmul.f32.gmra.mxu0 %v105
  %v268 = vpop.f32.mrf.mxu0
  %v269 = vadd.f32 0.0, %v268
  %270 = vmatmul.f32.gmra.mxu0 %v108
  %v271 = vpop.f32.mrf.mxu0
  %v272 = vadd.f32 0.0, %v271
  %273 = vmatmul.f32.gmra.mxu0 %v111
  %v274 = vpop.f32.mrf.mxu0
  %v275 = vadd.f32 0.0, %v274
  %276 = vmatmul.f32.gmra.mxu0 %v114
  %v277 = vpop.f32.mrf.mxu0
  %v278 = vadd.f32 0.0, %v277
  %279 = vmatmul.f32.gmra.mxu0 %v117
  %v280 = vpop.f32.mrf.mxu0
  %v281 = vadd.f32 0.0, %v280
  %282 = vmatmul.f32.gmra.mxu0 %v120
  %v283 = vpop.f32.mrf.mxu0
  %v284 = vadd.f32 0.0, %v283
  %285 = vdwg.mxu0
  %286 = vmatpush.msra.mxu0 0.0
  %287 = vmatpush.msra.mxu0 0.0
  %288 = vmatpush.msra.mxu0 0.0
  %289 = vmatpush.msra.mxu0 0.0
  %290 = vmatpush.msra.mxu0 0.0
  %291 = vmatpush.msra.mxu0 0.0
  %292 = vmatpush.msra.mxu0 0.0
  %293 = vmatpush.msra.mxu0 0.0
  %294 = vmatpush.msra.mxu0 0.0
  %295 = vmatpush.msra.mxu0 0.0
  %296 = vmatpush.msra.mxu0 0.0
  %297 = vmatpush.msra.mxu0 0.0
  %298 = vmatpush.msra.mxu0 0.0
  %299 = vmatpush.msra.mxu0 0.0
  %300 = vmatpush.msra.mxu0 %v81
  %301 = vmatpush.msra.mxu0 %v69
  %302 = vmatmul.f32.gmra.mxu0 %v99
  %v303 = vpop.f32.mrf.mxu0
  %v304 = vadd.f32 0.0, %v303
  %305 = vmatmul.f32.gmra.mxu0 %v102
  %v306 = vpop.f32.mrf.mxu0
  %v307 = vadd.f32 0.0, %v306
  %308 = vmatmul.f32.gmra.mxu0 %v105
  %v309 = vpop.f32.mrf.mxu0
  %v310 = vadd.f32 0.0, %v309
  %311 = vmatmul.f32.gmra.mxu0 %v108
  %v312 = vpop.f32.mrf.mxu0
  %v313 = vadd.f32 0.0, %v312
  %314 = vmatmul.f32.gmra.mxu0 %v111
  %v315 = vpop.f32.mrf.mxu0
  %v316 = vadd.f32 0.0, %v315
  %317 = vmatmul.f32.gmra.mxu0 %v114
  %v318 = vpop.f32.mrf.mxu0
  %v319 = vadd.f32 0.0, %v318
  %320 = vmatmul.f32.gmra.mxu0 %v117
  %v321 = vpop.f32.mrf.mxu0
  %v322 = vadd.f32 0.0, %v321
  %323 = vmatmul.f32.gmra.mxu0 %v120
  %v324 = vpop.f32.mrf.mxu0
  %v325 = vadd.f32 0.0, %v324
  %326 = vdwg.mxu0
  %327 = vmatpush.msra.mxu0 0.0
  %328 = vmatpush.msra.mxu0 0.0
  %329 = vmatpush.msra.mxu0 0.0
  %330 = vmatpush.msra.mxu0 0.0
  %331 = vmatpush.msra.mxu0 0.0
  %332 = vmatpush.msra.mxu0 0.0
  %333 = vmatpush.msra.mxu0 0.0
  %334 = vmatpush.msra.mxu0 0.0
  %335 = vmatpush.msra.mxu0 0.0
  %336 = vmatpush.msra.mxu0 0.0
  %337 = vmatpush.msra.mxu0 0.0
  %338 = vmatpush.msra.mxu0 0.0
  %339 = vmatpush.msra.mxu0 0.0
  %340 = vmatpush.msra.mxu0 0.0
  %341 = vmatpush.msra.mxu0 %v82
  %342 = vmatpush.msra.mxu0 %v70
  %343 = vmatmul.f32.gmra.mxu0 %v99
  %v344 = vpop.f32.mrf.mxu0
  %v345 = vadd.f32 0.0, %v344
  %346 = vmatmul.f32.gmra.mxu0 %v102
  %v347 = vpop.f32.mrf.mxu0
  %v348 = vadd.f32 0.0, %v347
  %349 = vmatmul.f32.gmra.mxu0 %v105
  %v350 = vpop.f32.mrf.mxu0
  %v351 = vadd.f32 0.0, %v350
  %352 = vmatmul.f32.gmra.mxu0 %v108
  %v353 = vpop.f32.mrf.mxu0
  %v354 = vadd.f32 0.0, %v353
  %355 = vmatmul.f32.gmra.mxu0 %v111
  %v356 = vpop.f32.mrf.mxu0
  %v357 = vadd.f32 0.0, %v356
  %358 = vmatmul.f32.gmra.mxu0 %v114
  %v359 = vpop.f32.mrf.mxu0
  %v360 = vadd.f32 0.0, %v359
  %361 = vmatmul.f32.gmra.mxu0 %v117
  %v362 = vpop.f32.mrf.mxu0
  %v363 = vadd.f32 0.0, %v362
  %364 = vmatmul.f32.gmra.mxu0 %v120
  %v365 = vpop.f32.mrf.mxu0
  %v366 = vadd.f32 0.0, %v365
  %367 = vdwg.mxu0
  %368 = vmatpush.msra.mxu0 0.0
  %369 = vmatpush.msra.mxu0 0.0
  %370 = vmatpush.msra.mxu0 0.0
  %371 = vmatpush.msra.mxu0 0.0
  %372 = vmatpush.msra.mxu0 0.0
  %373 = vmatpush.msra.mxu0 0.0
  %374 = vmatpush.msra.mxu0 0.0
  %375 = vmatpush.msra.mxu0 0.0
  %376 = vmatpush.msra.mxu0 0.0
  %377 = vmatpush.msra.mxu0 0.0
  %378 = vmatpush.msra.mxu0 0.0
  %379 = vmatpush.msra.mxu0 0.0
  %380 = vmatpush.msra.mxu0 0.0
  %381 = vmatpush.msra.mxu0 0.0
  %382 = vmatpush.msra.mxu0 %v83
  %383 = vmatpush.msra.mxu0 %v71
  %384 = vmatmul.f32.gmra.mxu0 %v99
  %v385 = vpop.f32.mrf.mxu0
  %v386 = vadd.f32 0.0, %v385
  %387 = vmatmul.f32.gmra.mxu0 %v102
  %v388 = vpop.f32.mrf.mxu0
  %v389 = vadd.f32 0.0, %v388
  %390 = vmatmul.f32.gmra.mxu0 %v105
  %v391 = vpop.f32.mrf.mxu0
  %v392 = vadd.f32 0.0, %v391
  %393 = vmatmul.f32.gmra.mxu0 %v108
  %v394 = vpop.f32.mrf.mxu0
  %v395 = vadd.f32 0.0, %v394
  %396 = vmatmul.f32.gmra.mxu0 %v111
  %v397 = vpop.f32.mrf.mxu0
  %v398 = vadd.f32 0.0, %v397
  %399 = vmatmul.f32.gmra.mxu0 %v114
  %v400 = vpop.f32.mrf.mxu0
  %v401 = vadd.f32 0.0, %v400
  %402 = vmatmul.f32.gmra.mxu0 %v117
  %v403 = vpop.f32.mrf.mxu0
  %v404 = vadd.f32 0.0, %v403
  %405 = vmatmul.f32.gmra.mxu0 %v120
  %v406 = vpop.f32.mrf.mxu0
  %v407 = vadd.f32 0.0, %v406
  %408 = vdwg.mxu0
  %409 = vmatpush.msra.mxu0 0.0
  %410 = vmatpush.msra.mxu0 0.0
  %411 = vmatpush.msra.mxu0 0.0
  %412 = vmatpush.msra.mxu0 0.0
  %413 = vmatpush.msra.mxu0 0.0
  %414 = vmatpush.msra.mxu0 0.0
  %415 = vmatpush.msra.mxu0 0.0
  %416 = vmatpush.msra.mxu0 0.0
  %417 = vmatpush.msra.mxu0 0.0
  %418 = vmatpush.msra.mxu0 0.0
  %419 = vmatpush.msra.mxu0 0.0
  %420 = vmatpush.msra.mxu0 0.0
  %421 = vmatpush.msra.mxu0 0.0
  %422 = vmatpush.msra.mxu0 0.0
  %423 = vmatpush.msra.mxu0 %v84
  %424 = vmatpush.msra.mxu0 %v72
  %425 = vmatmul.f32.gmra.mxu0 %v99
  %v426 = vpop.f32.mrf.mxu0
  %v427 = vadd.f32 0.0, %v426
  %428 = vmatmul.f32.gmra.mxu0 %v102
  %v429 = vpop.f32.mrf.mxu0
  %v430 = vadd.f32 0.0, %v429
  %431 = vmatmul.f32.gmra.mxu0 %v105
  %v432 = vpop.f32.mrf.mxu0
  %v433 = vadd.f32 0.0, %v432
  %434 = vmatmul.f32.gmra.mxu0 %v108
  %v435 = vpop.f32.mrf.mxu0
  %v436 = vadd.f32 0.0, %v435
  %437 = vmatmul.f32.gmra.mxu0 %v111
  %v438 = vpop.f32.mrf.mxu0
  %v439 = vadd.f32 0.0, %v438
  %440 = vmatmul.f32.gmra.mxu0 %v114
  %v441 = vpop.f32.mrf.mxu0
  %v442 = vadd.f32 0.0, %v441
  %443 = vmatmul.f32.gmra.mxu0 %v117
  %v444 = vpop.f32.mrf.mxu0
  %v445 = vadd.f32 0.0, %v444
  %446 = vmatmul.f32.gmra.mxu0 %v120
  %v447 = vpop.f32.mrf.mxu0
  %v448 = vadd.f32 0.0, %v447
  %449 = vdwg.mxu0
  %450 = vmatpush.msra.mxu0 0.0
  %451 = vmatpush.msra.mxu0 0.0
  %452 = vmatpush.msra.mxu0 0.0
  %453 = vmatpush.msra.mxu0 0.0
  %454 = vmatpush.msra.mxu0 0.0
  %455 = vmatpush.msra.mxu0 0.0
  %456 = vmatpush.msra.mxu0 0.0
  %457 = vmatpush.msra.mxu0 0.0
  %458 = vmatpush.msra.mxu0 0.0
  %459 = vmatpush.msra.mxu0 0.0
  %460 = vmatpush.msra.mxu0 0.0
  %461 = vmatpush.msra.mxu0 0.0
  %462 = vmatpush.msra.mxu0 0.0
  %463 = vmatpush.msra.mxu0 0.0
  %464 = vmatpush.msra.mxu0 %v85
  %465 = vmatpush.msra.mxu0 %v73
  %466 = vmatmul.f32.gmra.mxu0 %v99
  %v467 = vpop.f32.mrf.mxu0
  %v468 = vadd.f32 0.0, %v467
  %469 = vmatmul.f32.gmra.mxu0 %v102
  %v470 = vpop.f32.mrf.mxu0
  %v471 = vadd.f32 0.0, %v470
  %472 = vmatmul.f32.gmra.mxu0 %v105
  %v473 = vpop.f32.mrf.mxu0
  %v474 = vadd.f32 0.0, %v473
  %475 = vmatmul.f32.gmra.mxu0 %v108
  %v476 = vpop.f32.mrf.mxu0
  %v477 = vadd.f32 0.0, %v476
  %478 = vmatmul.f32.gmra.mxu0 %v111
  %v479 = vpop.f32.mrf.mxu0
  %v480 = vadd.f32 0.0, %v479
  %481 = vmatmul.f32.gmra.mxu0 %v114
  %v482 = vpop.f32.mrf.mxu0
  %v483 = vadd.f32 0.0, %v482
  %484 = vmatmul.f32.gmra.mxu0 %v117
  %v485 = vpop.f32.mrf.mxu0
  %v486 = vadd.f32 0.0, %v485
  %487 = vmatmul.f32.gmra.mxu0 %v120
  %v488 = vpop.f32.mrf.mxu0
  %v489 = vadd.f32 0.0, %v488
  %490 = vdwg.mxu0
  %491 = vmatpush.msra.mxu0 0.0
  %492 = vmatpush.msra.mxu0 0.0
  %493 = vmatpush.msra.mxu0 0.0
  %494 = vmatpush.msra.mxu0 0.0
  %495 = vmatpush.msra.mxu0 0.0
  %496 = vmatpush.msra.mxu0 0.0
  %497 = vmatpush.msra.mxu0 0.0
  %498 = vmatpush.msra.mxu0 0.0
  %499 = vmatpush.msra.mxu0 0.0
  %500 = vmatpush.msra.mxu0 0.0
  %501 = vmatpush.msra.mxu0 0.0
  %502 = vmatpush.msra.mxu0 0.0
  %503 = vmatpush.msra.mxu0 0.0
  %504 = vmatpush.msra.mxu0 0.0
  %505 = vmatpush.msra.mxu0 %v86
  %506 = vmatpush.msra.mxu0 %v74
  %507 = vmatmul.f32.gmra.mxu0 %v99
  %v508 = vpop.f32.mrf.mxu0
  %v509 = vadd.f32 0.0, %v508
  %510 = vmatmul.f32.gmra.mxu0 %v102
  %v511 = vpop.f32.mrf.mxu0
  %v512 = vadd.f32 0.0, %v511
  %513 = vmatmul.f32.gmra.mxu0 %v105
  %v514 = vpop.f32.mrf.mxu0
  %v515 = vadd.f32 0.0, %v514
  %516 = vmatmul.f32.gmra.mxu0 %v108
  %v517 = vpop.f32.mrf.mxu0
  %v518 = vadd.f32 0.0, %v517
  %519 = vmatmul.f32.gmra.mxu0 %v111
  %v520 = vpop.f32.mrf.mxu0
  %v521 = vadd.f32 0.0, %v520
  %522 = vmatmul.f32.gmra.mxu0 %v114
  %v523 = vpop.f32.mrf.mxu0
  %v524 = vadd.f32 0.0, %v523
  %525 = vmatmul.f32.gmra.mxu0 %v117
  %v526 = vpop.f32.mrf.mxu0
  %v527 = vadd.f32 0.0, %v526
  %528 = vmatmul.f32.gmra.mxu0 %v120
  %v529 = vpop.f32.mrf.mxu0
  %v530 = vadd.f32 0.0, %v529
  %531 = vdwg.mxu0
  %532 = vmatpush.msra.mxu0 0.0
  %533 = vmatpush.msra.mxu0 0.0
  %534 = vmatpush.msra.mxu0 0.0
  %535 = vmatpush.msra.mxu0 0.0
  %536 = vmatpush.msra.mxu0 0.0
  %537 = vmatpush.msra.mxu0 0.0
  %538 = vmatpush.msra.mxu0 0.0
  %539 = vmatpush.msra.mxu0 0.0
  %540 = vmatpush.msra.mxu0 0.0
  %541 = vmatpush.msra.mxu0 0.0
  %542 = vmatpush.msra.mxu0 0.0
  %543 = vmatpush.msra.mxu0 0.0
  %544 = vmatpush.msra.mxu0 0.0
  %545 = vmatpush.msra.mxu0 0.0
  %546 = vmatpush.msra.mxu0 %v87
  %547 = vmatpush.msra.mxu0 %v75
  %548 = vmatmul.f32.gmra.mxu0 %v99
  %v549 = vpop.f32.mrf.mxu0
  %v550 = vadd.f32 0.0, %v549
  %551 = vmatmul.f32.gmra.mxu0 %v102
  %v552 = vpop.f32.mrf.mxu0
  %v553 = vadd.f32 0.0, %v552
  %554 = vmatmul.f32.gmra.mxu0 %v105
  %v555 = vpop.f32.mrf.mxu0
  %v556 = vadd.f32 0.0, %v555
  %557 = vmatmul.f32.gmra.mxu0 %v108
  %v558 = vpop.f32.mrf.mxu0
  %v559 = vadd.f32 0.0, %v558
  %560 = vmatmul.f32.gmra.mxu0 %v111
  %v561 = vpop.f32.mrf.mxu0
  %v562 = vadd.f32 0.0, %v561
  %563 = vmatmul.f32.gmra.mxu0 %v114
  %v564 = vpop.f32.mrf.mxu0
  %v565 = vadd.f32 0.0, %v564
  %566 = vmatmul.f32.gmra.mxu0 %v117
  %v567 = vpop.f32.mrf.mxu0
  %v568 = vadd.f32 0.0, %v567
  %569 = vmatmul.f32.gmra.mxu0 %v120
  %v570 = vpop.f32.mrf.mxu0
  %v571 = vadd.f32 0.0, %v570
  %572 = vdwg.mxu0
  %573 = vmatpush.msra.mxu0 0.0
  %574 = vmatpush.msra.mxu0 0.0
  %575 = vmatpush.msra.mxu0 0.0
  %576 = vmatpush.msra.mxu0 0.0
  %577 = vmatpush.msra.mxu0 0.0
  %578 = vmatpush.msra.mxu0 0.0
  %579 = vmatpush.msra.mxu0 0.0
  %580 = vmatpush.msra.mxu0 0.0
  %581 = vmatpush.msra.mxu0 0.0
  %582 = vmatpush.msra.mxu0 0.0
  %583 = vmatpush.msra.mxu0 0.0
  %584 = vmatpush.msra.mxu0 0.0
  %585 = vmatpush.msra.mxu0 0.0
  %586 = vmatpush.msra.mxu0 0.0
  %587 = vmatpush.msra.mxu0 %v88
  %588 = vmatpush.msra.mxu0 %v76
  %589 = vmatmul.f32.gmra.mxu0 %v99
  %v590 = vpop.f32.mrf.mxu0
  %v591 = vadd.f32 0.0, %v590
  %592 = vmatmul.f32.gmra.mxu0 %v102
  %v593 = vpop.f32.mrf.mxu0
  %v594 = vadd.f32 0.0, %v593
  %595 = vmatmul.f32.gmra.mxu0 %v105
  %v596 = vpop.f32.mrf.mxu0
  %v597 = vadd.f32 0.0, %v596
  %598 = vmatmul.f32.gmra.mxu0 %v108
  %v599 = vpop.f32.mrf.mxu0
  %v600 = vadd.f32 0.0, %v599
  %601 = vmatmul.f32.gmra.mxu0 %v111
  %v602 = vpop.f32.mrf.mxu0
  %v603 = vadd.f32 0.0, %v602
  %604 = vmatmul.f32.gmra.mxu0 %v114
  %v605 = vpop.f32.mrf.mxu0
  %v606 = vadd.f32 0.0, %v605
  %607 = vmatmul.f32.gmra.mxu0 %v117
  %v608 = vpop.f32.mrf.mxu0
  %v609 = vadd.f32 0.0, %v608
  %610 = vmatmul.f32.gmra.mxu0 %v120
  %v611 = vpop.f32.mrf.mxu0
  %v612 = vadd.f32 0.0, %v611
  %613 = vdwg.mxu0
  %v614 = vadd.f32 %v28, %v140
  %v615 = vadd.f32 %v28, %v181
  %v616 = vadd.f32 %v28, %v222
  %v617 = vadd.f32 %v28, %v263
  %v618 = vadd.f32 %v28, %v304
  %v619 = vadd.f32 %v28, %v345
  %v620 = vadd.f32 %v28, %v386
  %v621 = vadd.f32 %v28, %v427
  %v622 = vadd.f32 %v28, %v468
  %v623 = vadd.f32 %v28, %v509
  %v624 = vadd.f32 %v28, %v550
  %v625 = vadd.f32 %v28, %v591
  %v626 = vadd.f32 %v33, %v143
  %v627 = vadd.f32 %v33, %v184
  %v628 = vadd.f32 %v33, %v225
  %v629 = vadd.f32 %v33, %v266
  %v630 = vadd.f32 %v33, %v307
  %v631 = vadd.f32 %v33, %v348
  %v632 = vadd.f32 %v33, %v389
  %v633 = vadd.f32 %v33, %v430
  %v634 = vadd.f32 %v33, %v471
  %v635 = vadd.f32 %v33, %v512
  %v636 = vadd.f32 %v33, %v553
  %v637 = vadd.f32 %v33, %v594
  %v638 = vadd.f32 %v38, %v146
  %v639 = vadd.f32 %v38, %v187
  %v640 = vadd.f32 %v38, %v228
  %v641 = vadd.f32 %v38, %v269
  %v642 = vadd.f32 %v38, %v310
  %v643 = vadd.f32 %v38, %v351
  %v644 = vadd.f32 %v38, %v392
  %v645 = vadd.f32 %v38, %v433
  %v646 = vadd.f32 %v38, %v474
  %v647 = vadd.f32 %v38, %v515
  %v648 = vadd.f32 %v38, %v556
  %v649 = vadd.f32 %v38, %v597
  %v650 = vadd.f32 %v43, %v149
  %v651 = vadd.f32 %v43, %v190
  %v652 = vadd.f32 %v43, %v231
  %v653 = vadd.f32 %v43, %v272
  %v654 = vadd.f32 %v43, %v313
  %v655 = vadd.f32 %v43, %v354
  %v656 = vadd.f32 %v43, %v395
  %v657 = vadd.f32 %v43, %v436
  %v658 = vadd.f32 %v43, %v477
  %v659 = vadd.f32 %v43, %v518
  %v660 = vadd.f32 %v43, %v559
  %v661 = vadd.f32 %v43, %v600
  %v662 = vadd.f32 %v48, %v152
  %v663 = vadd.f32 %v48, %v193
  %v664 = vadd.f32 %v48, %v234
  %v665 = vadd.f32 %v48, %v275
  %v666 = vadd.f32 %v48, %v316
  %v667 = vadd.f32 %v48, %v357
  %v668 = vadd.f32 %v48, %v398
  %v669 = vadd.f32 %v48, %v439
  %v670 = vadd.f32 %v48, %v480
  %v671 = vadd.f32 %v48, %v521
  %v672 = vadd.f32 %v48, %v562
  %v673 = vadd.f32 %v48, %v603
  %v674 = vadd.f32 %v53, %v155
  %v675 = vadd.f32 %v53, %v196
  %v676 = vadd.f32 %v53, %v237
  %v677 = vadd.f32 %v53, %v278
  %v678 = vadd.f32 %v53, %v319
  %v679 = vadd.f32 %v53, %v360
  %v680 = vadd.f32 %v53, %v401
  %v681 = vadd.f32 %v53, %v442
  %v682 = vadd.f32 %v53, %v483
  %v683 = vadd.f32 %v53, %v524
  %v684 = vadd.f32 %v53, %v565
  %v685 = vadd.f32 %v53, %v606
  %v686 = vadd.f32 %v58, %v158
  %v687 = vadd.f32 %v58, %v199
  %v688 = vadd.f32 %v58, %v240
  %v689 = vadd.f32 %v58, %v281
  %v690 = vadd.f32 %v58, %v322
  %v691 = vadd.f32 %v58, %v363
  %v692 = vadd.f32 %v58, %v404
  %v693 = vadd.f32 %v58, %v445
  %v694 = vadd.f32 %v58, %v486
  %v695 = vadd.f32 %v58, %v527
  %v696 = vadd.f32 %v58, %v568
  %v697 = vadd.f32 %v58, %v609
  %v698 = vadd.f32 %v63, %v161
  %v699 = vadd.f32 %v63, %v202
  %v700 = vadd.f32 %v63, %v243
  %v701 = vadd.f32 %v63, %v284
  %v702 = vadd.f32 %v63, %v325
  %v703 = vadd.f32 %v63, %v366
  %v704 = vadd.f32 %v63, %v407
  %v705 = vadd.f32 %v63, %v448
  %v706 = vadd.f32 %v63, %v489
  %v707 = vadd.f32 %v63, %v530
  %v708 = vadd.f32 %v63, %v571
  %v709 = vadd.f32 %v63, %v612
  %v710 = vld [vmem:[%s0] sm:$0xff]
  %v711 = vld [vmem:[%s0 + $0x8] sm:$0xff]
  %v712 = vld [vmem:[%s0 + $0x10] sm:$0xff]
  %v713 = vld [vmem:[%s0 + $0x18] sm:$0xff]
  %v714 = vld [vmem:[%s0 + $0x20] sm:$0xff]
  %v715 = vld [vmem:[%s0 + $0x28] sm:$0xff]
  %v716 = vld [vmem:[%s0 + $0x30] sm:$0xff]
  %v717 = vld [vmem:[%s0 + $0x38] sm:$0xff]
  %v718 = vld [vmem:[%s0 + $0x40] sm:$0xff]
  %v719 = vld [vmem:[%s0 + $0x48] sm:$0xff]
  %v720 = vld [vmem:[%s0 + $0x50] sm:$0xff]
  %v721 = vld [vmem:[%s0 + $0x58] sm:$0xff]
  %v722 = vld [vmem:[%s0 + $0x60] sm:$0xff]
  %v723 = vld [vmem:[%s0 + $0x68] sm:$0xff]
  %v724 = vld [vmem:[%s0 + $0x70] sm:$0xff]
  %v725 = vld [vmem:[%s0 + $0x78] sm:$0xff]
  %v726 = vld [vmem:[%s0 + $0x80] sm:$0xff]
  %v727 = vld [vmem:[%s0 + $0x88] sm:$0xff]
  %v728 = vld [vmem:[%s0 + $0x90] sm:$0xff]
  %v729 = vld [vmem:[%s0 + $0x98] sm:$0xff]
  %v730 = vld [vmem:[%s0 + $0xa0] sm:$0xff]
  %v731 = vld [vmem:[%s0 + $0xa8] sm:$0xff]
  %v732 = vld [vmem:[%s0 + $0xb0] sm:$0xff]
  %v733 = vld [vmem:[%s0 + $0xb8] sm:$0xff]
  %v734 = vld [vmem:[%s0 + $0xc0] sm:$0xff]
  %v735 = vld [vmem:[%s0 + $0xc8] sm:$0xff]
  %s736 = scalar_lea.vmem %s1, 64
  %v737 = vld [vmem:[%s736] sm:$0xff]
  %v738 = vld [vmem:[%s736 + $0x8] sm:$0xff]
  %v739 = vld [vmem:[%s736 + $0x10] sm:$0xff]
  %v740 = vld [vmem:[%s736 + $0x18] sm:$0xff]
  %v741 = vld [vmem:[%s736 + $0x20] sm:$0xff]
  %v742 = vld [vmem:[%s736 + $0x28] sm:$0xff]
  %v743 = vld [vmem:[%s736 + $0x30] sm:$0xff]
  %v744 = vld [vmem:[%s736 + $0x38] sm:$0xff]
  %771 = vrot.lane.b32.xlu0 %v710, 127
  %v772 = vpop.permute.xlu0 %771
  %773 = vrot.lane.b32.xlu0 %v711, 127
  %v774 = vpop.permute.xlu0 %773
  %775 = vrot.lane.b32.xlu0 %v712, 127
  %v776 = vpop.permute.xlu0 %775
  %777 = vrot.lane.b32.xlu0 %v713, 127
  %v778 = vpop.permute.xlu0 %777
  %779 = vrot.lane.b32.xlu0 %v714, 127
  %v780 = vpop.permute.xlu0 %779
  %781 = vrot.lane.b32.xlu0 %v715, 127
  %v782 = vpop.permute.xlu0 %781
  %783 = vrot.lane.b32.xlu0 %v716, 127
  %v784 = vpop.permute.xlu0 %783
  %785 = vrot.lane.b32.xlu0 %v717, 127
  %v786 = vpop.permute.xlu0 %785
  %787 = vrot.lane.b32.xlu0 %v718, 127
  %v788 = vpop.permute.xlu0 %787
  %789 = vrot.lane.b32.xlu0 %v719, 127
  %v790 = vpop.permute.xlu0 %789
  %791 = vrot.lane.b32.xlu0 %v720, 127
  %v792 = vpop.permute.xlu0 %791
  %793 = vrot.lane.b32.xlu0 %v721, 127
  %v794 = vpop.permute.xlu0 %793
  %795 = vrot.lane.b32.xlu0 %v722, 127
  %v796 = vpop.permute.xlu0 %795
  %797 = vrot.lane.b32.xlu0 %v723, 127
  %v798 = vpop.permute.xlu0 %797
  %799 = vrot.lane.b32.xlu0 %v724, 127
  %v800 = vpop.permute.xlu0 %799
  %801 = vrot.lane.b32.xlu0 %v725, 127
  %v802 = vpop.permute.xlu0 %801
  %803 = vrot.lane.b32.xlu0 %v726, 127
  %v804 = vpop.permute.xlu0 %803
  %805 = vrot.lane.b32.xlu0 %v727, 127
  %v806 = vpop.permute.xlu0 %805
  %807 = vrot.lane.b32.xlu0 %v728, 127
  %v808 = vpop.permute.xlu0 %807
  %809 = vrot.lane.b32.xlu0 %v729, 127
  %v810 = vpop.permute.xlu0 %809
  %811 = vrot.lane.b32.xlu0 %v730, 127
  %v812 = vpop.permute.xlu0 %811
  %813 = vrot.lane.b32.xlu0 %v731, 127
  %v814 = vpop.permute.xlu0 %813
  %815 = vrot.lane.b32.xlu0 %v732, 127
  %v816 = vpop.permute.xlu0 %815
  %817 = vrot.lane.b32.xlu0 %v733, 127
  %v818 = vpop.permute.xlu0 %817
  %819 = vrot.lane.b32.xlu0 %v734, 127
  %v820 = vpop.permute.xlu0 %819
  %821 = vrot.lane.b32.xlu0 %v735, 127
  %v822 = vpop.permute.xlu0 %821
  %vm823 = vcmask 1039360
  %v824 = vsel %vm823, %v772, %v774
  %v825 = vsel %vm823, %v774, %v776
  %v826 = vsel %vm823, %v776, %v778
  %v827 = vsel %vm823, %v778, %v780
  %v828 = vsel %vm823, %v780, %v782
  %v829 = vsel %vm823, %v782, %v784
  %v830 = vsel %vm823, %v784, %v786
  %v831 = vsel %vm823, %v786, %v788
  %v832 = vsel %vm823, %v788, %v790
  %v833 = vsel %vm823, %v790, %v792
  %v834 = vsel %vm823, %v792, %v794
  %v835 = vsel %vm823, %v794, %v796
  %v836 = vsel %vm823, %v798, %v800
  %v837 = vsel %vm823, %v800, %v802
  %v838 = vsel %vm823, %v802, %v804
  %v839 = vsel %vm823, %v804, %v806
  %v840 = vsel %vm823, %v806, %v808
  %v841 = vsel %vm823, %v808, %v810
  %v842 = vsel %vm823, %v810, %v812
  %v843 = vsel %vm823, %v812, %v814
  %v844 = vsel %vm823, %v814, %v816
  %v845 = vsel %vm823, %v816, %v818
  %v846 = vsel %vm823, %v818, %v820
  %v847 = vsel %vm823, %v820, %v822
  %v873 = vsel %vm97, %v737, 0
  %v876 = vsel %vm97, %v738, 0
  %v879 = vsel %vm97, %v739, 0
  %v882 = vsel %vm97, %v740, 0
  %v885 = vsel %vm97, %v741, 0
  %v888 = vsel %vm97, %v742, 0
  %v891 = vsel %vm97, %v743, 0
  %v894 = vsel %vm97, %v744, 0
  %896 = vmatpush.msra.mxu0 0.0
  %897 = vmatpush.msra.mxu0 0.0
  %898 = vmatpush.msra.mxu0 0.0
  %899 = vmatpush.msra.mxu0 0.0
  %900 = vmatpush.msra.mxu0 0.0
  %901 = vmatpush.msra.mxu0 0.0
  %902 = vmatpush.msra.mxu0 0.0
  %903 = vmatpush.msra.mxu0 0.0
  %904 = vmatpush.msra.mxu0 0.0
  %905 = vmatpush.msra.mxu0 0.0
  %906 = vmatpush.msra.mxu0 0.0
  %907 = vmatpush.msra.mxu0 0.0
  %908 = vmatpush.msra.mxu0 0.0
  %909 = vmatpush.msra.mxu0 0.0
  %910 = vmatpush.msra.mxu0 %v836
  %911 = vmatpush.msra.mxu0 %v824
  %912 = vmatmul.f32.gmra.mxu0 %v873
  %v913 = vpop.f32.mrf.mxu0
  %v914 = vadd.f32 0.0, %v913
  %915 = vmatmul.f32.gmra.mxu0 %v876
  %v916 = vpop.f32.mrf.mxu0
  %v917 = vadd.f32 0.0, %v916
  %918 = vmatmul.f32.gmra.mxu0 %v879
  %v919 = vpop.f32.mrf.mxu0
  %v920 = vadd.f32 0.0, %v919
  %921 = vmatmul.f32.gmra.mxu0 %v882
  %v922 = vpop.f32.mrf.mxu0
  %v923 = vadd.f32 0.0, %v922
  %924 = vmatmul.f32.gmra.mxu0 %v885
  %v925 = vpop.f32.mrf.mxu0
  %v926 = vadd.f32 0.0, %v925
  %927 = vmatmul.f32.gmra.mxu0 %v888
  %v928 = vpop.f32.mrf.mxu0
  %v929 = vadd.f32 0.0, %v928
  %930 = vmatmul.f32.gmra.mxu0 %v891
  %v931 = vpop.f32.mrf.mxu0
  %v932 = vadd.f32 0.0, %v931
  %933 = vmatmul.f32.gmra.mxu0 %v894
  %v934 = vpop.f32.mrf.mxu0
  %v935 = vadd.f32 0.0, %v934
  %936 = vdwg.mxu0
  %937 = vmatpush.msra.mxu0 0.0
  %938 = vmatpush.msra.mxu0 0.0
  %939 = vmatpush.msra.mxu0 0.0
  %940 = vmatpush.msra.mxu0 0.0
  %941 = vmatpush.msra.mxu0 0.0
  %942 = vmatpush.msra.mxu0 0.0
  %943 = vmatpush.msra.mxu0 0.0
  %944 = vmatpush.msra.mxu0 0.0
  %945 = vmatpush.msra.mxu0 0.0
  %946 = vmatpush.msra.mxu0 0.0
  %947 = vmatpush.msra.mxu0 0.0
  %948 = vmatpush.msra.mxu0 0.0
  %949 = vmatpush.msra.mxu0 0.0
  %950 = vmatpush.msra.mxu0 0.0
  %951 = vmatpush.msra.mxu0 %v837
  %952 = vmatpush.msra.mxu0 %v825
  %953 = vmatmul.f32.gmra.mxu0 %v873
  %v954 = vpop.f32.mrf.mxu0
  %v955 = vadd.f32 0.0, %v954
  %956 = vmatmul.f32.gmra.mxu0 %v876
  %v957 = vpop.f32.mrf.mxu0
  %v958 = vadd.f32 0.0, %v957
  %959 = vmatmul.f32.gmra.mxu0 %v879
  %v960 = vpop.f32.mrf.mxu0
  %v961 = vadd.f32 0.0, %v960
  %962 = vmatmul.f32.gmra.mxu0 %v882
  %v963 = vpop.f32.mrf.mxu0
  %v964 = vadd.f32 0.0, %v963
  %965 = vmatmul.f32.gmra.mxu0 %v885
  %v966 = vpop.f32.mrf.mxu0
  %v967 = vadd.f32 0.0, %v966
  %968 = vmatmul.f32.gmra.mxu0 %v888
  %v969 = vpop.f32.mrf.mxu0
  %v970 = vadd.f32 0.0, %v969
  %971 = vmatmul.f32.gmra.mxu0 %v891
  %v972 = vpop.f32.mrf.mxu0
  %v973 = vadd.f32 0.0, %v972
  %974 = vmatmul.f32.gmra.mxu0 %v894
  %v975 = vpop.f32.mrf.mxu0
  %v976 = vadd.f32 0.0, %v975
  %977 = vdwg.mxu0
  %978 = vmatpush.msra.mxu0 0.0
  %979 = vmatpush.msra.mxu0 0.0
  %980 = vmatpush.msra.mxu0 0.0
  %981 = vmatpush.msra.mxu0 0.0
  %982 = vmatpush.msra.mxu0 0.0
  %983 = vmatpush.msra.mxu0 0.0
  %984 = vmatpush.msra.mxu0 0.0
  %985 = vmatpush.msra.mxu0 0.0
  %986 = vmatpush.msra.mxu0 0.0
  %987 = vmatpush.msra.mxu0 0.0
  %988 = vmatpush.msra.mxu0 0.0
  %989 = vmatpush.msra.mxu0 0.0
  %990 = vmatpush.msra.mxu0 0.0
  %991 = vmatpush.msra.mxu0 0.0
  %992 = vmatpush.msra.mxu0 %v838
  %993 = vmatpush.msra.mxu0 %v826
  %994 = vmatmul.f32.gmra.mxu0 %v873
  %v995 = vpop.f32.mrf.mxu0
  %v996 = vadd.f32 0.0, %v995
  %997 = vmatmul.f32.gmra.mxu0 %v876
  %v998 = vpop.f32.mrf.mxu0
  %v999 = vadd.f32 0.0, %v998
  %1000 = vmatmul.f32.gmra.mxu0 %v879
  %v1001 = vpop.f32.mrf.mxu0
  %v1002 = vadd.f32 0.0, %v1001
  %1003 = vmatmul.f32.gmra.mxu0 %v882
  %v1004 = vpop.f32.mrf.mxu0
  %v1005 = vadd.f32 0.0, %v1004
  %1006 = vmatmul.f32.gmra.mxu0 %v885
  %v1007 = vpop.f32.mrf.mxu0
  %v1008 = vadd.f32 0.0, %v1007
  %1009 = vmatmul.f32.gmra.mxu0 %v888
  %v1010 = vpop.f32.mrf.mxu0
  %v1011 = vadd.f32 0.0, %v1010
  %1012 = vmatmul.f32.gmra.mxu0 %v891
  %v1013 = vpop.f32.mrf.mxu0
  %v1014 = vadd.f32 0.0, %v1013
  %1015 = vmatmul.f32.gmra.mxu0 %v894
  %v1016 = vpop.f32.mrf.mxu0
  %v1017 = vadd.f32 0.0, %v1016
  %1018 = vdwg.mxu0
  %1019 = vmatpush.msra.mxu0 0.0
  %1020 = vmatpush.msra.mxu0 0.0
  %1021 = vmatpush.msra.mxu0 0.0
  %1022 = vmatpush.msra.mxu0 0.0
  %1023 = vmatpush.msra.mxu0 0.0
  %1024 = vmatpush.msra.mxu0 0.0
  %1025 = vmatpush.msra.mxu0 0.0
  %1026 = vmatpush.msra.mxu0 0.0
  %1027 = vmatpush.msra.mxu0 0.0
  %1028 = vmatpush.msra.mxu0 0.0
  %1029 = vmatpush.msra.mxu0 0.0
  %1030 = vmatpush.msra.mxu0 0.0
  %1031 = vmatpush.msra.mxu0 0.0
  %1032 = vmatpush.msra.mxu0 0.0
  %1033 = vmatpush.msra.mxu0 %v839
  %1034 = vmatpush.msra.mxu0 %v827
  %1035 = vmatmul.f32.gmra.mxu0 %v873
  %v1036 = vpop.f32.mrf.mxu0
  %v1037 = vadd.f32 0.0, %v1036
  %1038 = vmatmul.f32.gmra.mxu0 %v876
  %v1039 = vpop.f32.mrf.mxu0
  %v1040 = vadd.f32 0.0, %v1039
  %1041 = vmatmul.f32.gmra.mxu0 %v879
  %v1042 = vpop.f32.mrf.mxu0
  %v1043 = vadd.f32 0.0, %v1042
  %1044 = vmatmul.f32.gmra.mxu0 %v882
  %v1045 = vpop.f32.mrf.mxu0
  %v1046 = vadd.f32 0.0, %v1045
  %1047 = vmatmul.f32.gmra.mxu0 %v885
  %v1048 = vpop.f32.mrf.mxu0
  %v1049 = vadd.f32 0.0, %v1048
  %1050 = vmatmul.f32.gmra.mxu0 %v888
  %v1051 = vpop.f32.mrf.mxu0
  %v1052 = vadd.f32 0.0, %v1051
  %1053 = vmatmul.f32.gmra.mxu0 %v891
  %v1054 = vpop.f32.mrf.mxu0
  %v1055 = vadd.f32 0.0, %v1054
  %1056 = vmatmul.f32.gmra.mxu0 %v894
  %v1057 = vpop.f32.mrf.mxu0
  %v1058 = vadd.f32 0.0, %v1057
  %1059 = vdwg.mxu0
  %1060 = vmatpush.msra.mxu0 0.0
  %1061 = vmatpush.msra.mxu0 0.0
  %1062 = vmatpush.msra.mxu0 0.0
  %1063 = vmatpush.msra.mxu0 0.0
  %1064 = vmatpush.msra.mxu0 0.0
  %1065 = vmatpush.msra.mxu0 0.0
  %1066 = vmatpush.msra.mxu0 0.0
  %1067 = vmatpush.msra.mxu0 0.0
  %1068 = vmatpush.msra.mxu0 0.0
  %1069 = vmatpush.msra.mxu0 0.0
  %1070 = vmatpush.msra.mxu0 0.0
  %1071 = vmatpush.msra.mxu0 0.0
  %1072 = vmatpush.msra.mxu0 0.0
  %1073 = vmatpush.msra.mxu0 0.0
  %1074 = vmatpush.msra.mxu0 %v840
  %1075 = vmatpush.msra.mxu0 %v828
  %1076 = vmatmul.f32.gmra.mxu0 %v873
  %v1077 = vpop.f32.mrf.mxu0
  %v1078 = vadd.f32 0.0, %v1077
  %1079 = vmatmul.f32.gmra.mxu0 %v876
  %v1080 = vpop.f32.mrf.mxu0
  %v1081 = vadd.f32 0.0, %v1080
  %1082 = vmatmul.f32.gmra.mxu0 %v879
  %v1083 = vpop.f32.mrf.mxu0
  %v1084 = vadd.f32 0.0, %v1083
  %1085 = vmatmul.f32.gmra.mxu0 %v882
  %v1086 = vpop.f32.mrf.mxu0
  %v1087 = vadd.f32 0.0, %v1086
  %1088 = vmatmul.f32.gmra.mxu0 %v885
  %v1089 = vpop.f32.mrf.mxu0
  %v1090 = vadd.f32 0.0, %v1089
  %1091 = vmatmul.f32.gmra.mxu0 %v888
  %v1092 = vpop.f32.mrf.mxu0
  %v1093 = vadd.f32 0.0, %v1092
  %1094 = vmatmul.f32.gmra.mxu0 %v891
  %v1095 = vpop.f32.mrf.mxu0
  %v1096 = vadd.f32 0.0, %v1095
  %1097 = vmatmul.f32.gmra.mxu0 %v894
  %v1098 = vpop.f32.mrf.mxu0
  %v1099 = vadd.f32 0.0, %v1098
  %1100 = vdwg.mxu0
  %1101 = vmatpush.msra.mxu0 0.0
  %1102 = vmatpush.msra.mxu0 0.0
  %1103 = vmatpush.msra.mxu0 0.0
  %1104 = vmatpush.msra.mxu0 0.0
  %1105 = vmatpush.msra.mxu0 0.0
  %1106 = vmatpush.msra.mxu0 0.0
  %1107 = vmatpush.msra.mxu0 0.0
  %1108 = vmatpush.msra.mxu0 0.0
  %1109 = vmatpush.msra.mxu0 0.0
  %1110 = vmatpush.msra.mxu0 0.0
  %1111 = vmatpush.msra.mxu0 0.0
  %1112 = vmatpush.msra.mxu0 0.0
  %1113 = vmatpush.msra.mxu0 0.0
  %1114 = vmatpush.msra.mxu0 0.0
  %1115 = vmatpush.msra.mxu0 %v841
  %1116 = vmatpush.msra.mxu0 %v829
  %1117 = vmatmul.f32.gmra.mxu0 %v873
  %v1118 = vpop.f32.mrf.mxu0
  %v1119 = vadd.f32 0.0, %v1118
  %1120 = vmatmul.f32.gmra.mxu0 %v876
  %v1121 = vpop.f32.mrf.mxu0
  %v1122 = vadd.f32 0.0, %v1121
  %1123 = vmatmul.f32.gmra.mxu0 %v879
  %v1124 = vpop.f32.mrf.mxu0
  %v1125 = vadd.f32 0.0, %v1124
  %1126 = vmatmul.f32.gmra.mxu0 %v882
  %v1127 = vpop.f32.mrf.mxu0
  %v1128 = vadd.f32 0.0, %v1127
  %1129 = vmatmul.f32.gmra.mxu0 %v885
  %v1130 = vpop.f32.mrf.mxu0
  %v1131 = vadd.f32 0.0, %v1130
  %1132 = vmatmul.f32.gmra.mxu0 %v888
  %v1133 = vpop.f32.mrf.mxu0
  %v1134 = vadd.f32 0.0, %v1133
  %1135 = vmatmul.f32.gmra.mxu0 %v891
  %v1136 = vpop.f32.mrf.mxu0
  %v1137 = vadd.f32 0.0, %v1136
  %1138 = vmatmul.f32.gmra.mxu0 %v894
  %v1139 = vpop.f32.mrf.mxu0
  %v1140 = vadd.f32 0.0, %v1139
  %1141 = vdwg.mxu0
  %1142 = vmatpush.msra.mxu0 0.0
  %1143 = vmatpush.msra.mxu0 0.0
  %1144 = vmatpush.msra.mxu0 0.0
  %1145 = vmatpush.msra.mxu0 0.0
  %1146 = vmatpush.msra.mxu0 0.0
  %1147 = vmatpush.msra.mxu0 0.0
  %1148 = vmatpush.msra.mxu0 0.0
  %1149 = vmatpush.msra.mxu0 0.0
  %1150 = vmatpush.msra.mxu0 0.0
  %1151 = vmatpush.msra.mxu0 0.0
  %1152 = vmatpush.msra.mxu0 0.0
  %1153 = vmatpush.msra.mxu0 0.0
  %1154 = vmatpush.msra.mxu0 0.0
  %1155 = vmatpush.msra.mxu0 0.0
  %1156 = vmatpush.msra.mxu0 %v842
  %1157 = vmatpush.msra.mxu0 %v830
  %1158 = vmatmul.f32.gmra.mxu0 %v873
  %v1159 = vpop.f32.mrf.mxu0
  %v1160 = vadd.f32 0.0, %v1159
  %1161 = vmatmul.f32.gmra.mxu0 %v876
  %v1162 = vpop.f32.mrf.mxu0
  %v1163 = vadd.f32 0.0, %v1162
  %1164 = vmatmul.f32.gmra.mxu0 %v879
  %v1165 = vpop.f32.mrf.mxu0
  %v1166 = vadd.f32 0.0, %v1165
  %1167 = vmatmul.f32.gmra.mxu0 %v882
  %v1168 = vpop.f32.mrf.mxu0
  %v1169 = vadd.f32 0.0, %v1168
  %1170 = vmatmul.f32.gmra.mxu0 %v885
  %v1171 = vpop.f32.mrf.mxu0
  %v1172 = vadd.f32 0.0, %v1171
  %1173 = vmatmul.f32.gmra.mxu0 %v888
  %v1174 = vpop.f32.mrf.mxu0
  %v1175 = vadd.f32 0.0, %v1174
  %1176 = vmatmul.f32.gmra.mxu0 %v891
  %v1177 = vpop.f32.mrf.mxu0
  %v1178 = vadd.f32 0.0, %v1177
  %1179 = vmatmul.f32.gmra.mxu0 %v894
  %v1180 = vpop.f32.mrf.mxu0
  %v1181 = vadd.f32 0.0, %v1180
  %1182 = vdwg.mxu0
  %1183 = vmatpush.msra.mxu0 0.0
  %1184 = vmatpush.msra.mxu0 0.0
  %1185 = vmatpush.msra.mxu0 0.0
  %1186 = vmatpush.msra.mxu0 0.0
  %1187 = vmatpush.msra.mxu0 0.0
  %1188 = vmatpush.msra.mxu0 0.0
  %1189 = vmatpush.msra.mxu0 0.0
  %1190 = vmatpush.msra.mxu0 0.0
  %1191 = vmatpush.msra.mxu0 0.0
  %1192 = vmatpush.msra.mxu0 0.0
  %1193 = vmatpush.msra.mxu0 0.0
  %1194 = vmatpush.msra.mxu0 0.0
  %1195 = vmatpush.msra.mxu0 0.0
  %1196 = vmatpush.msra.mxu0 0.0
  %1197 = vmatpush.msra.mxu0 %v843
  %1198 = vmatpush.msra.mxu0 %v831
  %1199 = vmatmul.f32.gmra.mxu0 %v873
  %v1200 = vpop.f32.mrf.mxu0
  %v1201 = vadd.f32 0.0, %v1200
  %1202 = vmatmul.f32.gmra.mxu0 %v876
  %v1203 = vpop.f32.mrf.mxu0
  %v1204 = vadd.f32 0.0, %v1203
  %1205 = vmatmul.f32.gmra.mxu0 %v879
  %v1206 = vpop.f32.mrf.mxu0
  %v1207 = vadd.f32 0.0, %v1206
  %1208 = vmatmul.f32.gmra.mxu0 %v882
  %v1209 = vpop.f32.mrf.mxu0
  %v1210 = vadd.f32 0.0, %v1209
  %1211 = vmatmul.f32.gmra.mxu0 %v885
  %v1212 = vpop.f32.mrf.mxu0
  %v1213 = vadd.f32 0.0, %v1212
  %1214 = vmatmul.f32.gmra.mxu0 %v888
  %v1215 = vpop.f32.mrf.mxu0
  %v1216 = vadd.f32 0.0, %v1215
  %1217 = vmatmul.f32.gmra.mxu0 %v891
  %v1218 = vpop.f32.mrf.mxu0
  %v1219 = vadd.f32 0.0, %v1218
  %1220 = vmatmul.f32.gmra.mxu0 %v894
  %v1221 = vpop.f32.mrf.mxu0
  %v1222 = vadd.f32 0.0, %v1221
  %1223 = vdwg.mxu0
  %1224 = vmatpush.msra.mxu0 0.0
  %1225 = vmatpush.msra.mxu0 0.0
  %1226 = vmatpush.msra.mxu0 0.0
  %1227 = vmatpush.msra.mxu0 0.0
  %1228 = vmatpush.msra.mxu0 0.0
  %1229 = vmatpush.msra.mxu0 0.0
  %1230 = vmatpush.msra.mxu0 0.0
  %1231 = vmatpush.msra.mxu0 0.0
  %1232 = vmatpush.msra.mxu0 0.0
  %1233 = vmatpush.msra.mxu0 0.0
  %1234 = vmatpush.msra.mxu0 0.0
  %1235 = vmatpush.msra.mxu0 0.0
  %1236 = vmatpush.msra.mxu0 0.0
  %1237 = vmatpush.msra.mxu0 0.0
  %1238 = vmatpush.msra.mxu0 %v844
  %1239 = vmatpush.msra.mxu0 %v832
  %1240 = vmatmul.f32.gmra.mxu0 %v873
  %v1241 = vpop.f32.mrf.mxu0
  %v1242 = vadd.f32 0.0, %v1241
  %1243 = vmatmul.f32.gmra.mxu0 %v876
  %v1244 = vpop.f32.mrf.mxu0
  %v1245 = vadd.f32 0.0, %v1244
  %1246 = vmatmul.f32.gmra.mxu0 %v879
  %v1247 = vpop.f32.mrf.mxu0
  %v1248 = vadd.f32 0.0, %v1247
  %1249 = vmatmul.f32.gmra.mxu0 %v882
  %v1250 = vpop.f32.mrf.mxu0
  %v1251 = vadd.f32 0.0, %v1250
  %1252 = vmatmul.f32.gmra.mxu0 %v885
  %v1253 = vpop.f32.mrf.mxu0
  %v1254 = vadd.f32 0.0, %v1253
  %1255 = vmatmul.f32.gmra.mxu0 %v888
  %v1256 = vpop.f32.mrf.mxu0
  %v1257 = vadd.f32 0.0, %v1256
  %1258 = vmatmul.f32.gmra.mxu0 %v891
  %v1259 = vpop.f32.mrf.mxu0
  %v1260 = vadd.f32 0.0, %v1259
  %1261 = vmatmul.f32.gmra.mxu0 %v894
  %v1262 = vpop.f32.mrf.mxu0
  %v1263 = vadd.f32 0.0, %v1262
  %1264 = vdwg.mxu0
  %1265 = vmatpush.msra.mxu0 0.0
  %1266 = vmatpush.msra.mxu0 0.0
  %1267 = vmatpush.msra.mxu0 0.0
  %1268 = vmatpush.msra.mxu0 0.0
  %1269 = vmatpush.msra.mxu0 0.0
  %1270 = vmatpush.msra.mxu0 0.0
  %1271 = vmatpush.msra.mxu0 0.0
  %1272 = vmatpush.msra.mxu0 0.0
  %1273 = vmatpush.msra.mxu0 0.0
  %1274 = vmatpush.msra.mxu0 0.0
  %1275 = vmatpush.msra.mxu0 0.0
  %1276 = vmatpush.msra.mxu0 0.0
  %1277 = vmatpush.msra.mxu0 0.0
  %1278 = vmatpush.msra.mxu0 0.0
  %1279 = vmatpush.msra.mxu0 %v845
  %1280 = vmatpush.msra.mxu0 %v833
  %1281 = vmatmul.f32.gmra.mxu0 %v873
  %v1282 = vpop.f32.mrf.mxu0
  %v1283 = vadd.f32 0.0, %v1282
  %1284 = vmatmul.f32.gmra.mxu0 %v876
  %v1285 = vpop.f32.mrf.mxu0
  %v1286 = vadd.f32 0.0, %v1285
  %1287 = vmatmul.f32.gmra.mxu0 %v879
  %v1288 = vpop.f32.mrf.mxu0
  %v1289 = vadd.f32 0.0, %v1288
  %1290 = vmatmul.f32.gmra.mxu0 %v882
  %v1291 = vpop.f32.mrf.mxu0
  %v1292 = vadd.f32 0.0, %v1291
  %1293 = vmatmul.f32.gmra.mxu0 %v885
  %v1294 = vpop.f32.mrf.mxu0
  %v1295 = vadd.f32 0.0, %v1294
  %1296 = vmatmul.f32.gmra.mxu0 %v888
  %v1297 = vpop.f32.mrf.mxu0
  %v1298 = vadd.f32 0.0, %v1297
  %1299 = vmatmul.f32.gmra.mxu0 %v891
  %v1300 = vpop.f32.mrf.mxu0
  %v1301 = vadd.f32 0.0, %v1300
  %1302 = vmatmul.f32.gmra.mxu0 %v894
  %v1303 = vpop.f32.mrf.mxu0
  %v1304 = vadd.f32 0.0, %v1303
  %1305 = vdwg.mxu0
  %1306 = vmatpush.msra.mxu0 0.0
  %1307 = vmatpush.msra.mxu0 0.0
  %1308 = vmatpush.msra.mxu0 0.0
  %1309 = vmatpush.msra.mxu0 0.0
  %1310 = vmatpush.msra.mxu0 0.0
  %1311 = vmatpush.msra.mxu0 0.0
  %1312 = vmatpush.msra.mxu0 0.0
  %1313 = vmatpush.msra.mxu0 0.0
  %1314 = vmatpush.msra.mxu0 0.0
  %1315 = vmatpush.msra.mxu0 0.0
  %1316 = vmatpush.msra.mxu0 0.0
  %1317 = vmatpush.msra.mxu0 0.0
  %1318 = vmatpush.msra.mxu0 0.0
  %1319 = vmatpush.msra.mxu0 0.0
  %1320 = vmatpush.msra.mxu0 %v846
  %1321 = vmatpush.msra.mxu0 %v834
  %1322 = vmatmul.f32.gmra.mxu0 %v873
  %v1323 = vpop.f32.mrf.mxu0
  %v1324 = vadd.f32 0.0, %v1323
  %1325 = vmatmul.f32.gmra.mxu0 %v876
  %v1326 = vpop.f32.mrf.mxu0
  %v1327 = vadd.f32 0.0, %v1326
  %1328 = vmatmul.f32.gmra.mxu0 %v879
  %v1329 = vpop.f32.mrf.mxu0
  %v1330 = vadd.f32 0.0, %v1329
  %1331 = vmatmul.f32.gmra.mxu0 %v882
  %v1332 = vpop.f32.mrf.mxu0
  %v1333 = vadd.f32 0.0, %v1332
  %1334 = vmatmul.f32.gmra.mxu0 %v885
  %v1335 = vpop.f32.mrf.mxu0
  %v1336 = vadd.f32 0.0, %v1335
  %1337 = vmatmul.f32.gmra.mxu0 %v888
  %v1338 = vpop.f32.mrf.mxu0
  %v1339 = vadd.f32 0.0, %v1338
  %1340 = vmatmul.f32.gmra.mxu0 %v891
  %v1341 = vpop.f32.mrf.mxu0
  %v1342 = vadd.f32 0.0, %v1341
  %1343 = vmatmul.f32.gmra.mxu0 %v894
  %v1344 = vpop.f32.mrf.mxu0
  %v1345 = vadd.f32 0.0, %v1344
  %1346 = vdwg.mxu0
  %1347 = vmatpush.msra.mxu0 0.0
  %1348 = vmatpush.msra.mxu0 0.0
  %1349 = vmatpush.msra.mxu0 0.0
  %1350 = vmatpush.msra.mxu0 0.0
  %1351 = vmatpush.msra.mxu0 0.0
  %1352 = vmatpush.msra.mxu0 0.0
  %1353 = vmatpush.msra.mxu0 0.0
  %1354 = vmatpush.msra.mxu0 0.0
  %1355 = vmatpush.msra.mxu0 0.0
  %1356 = vmatpush.msra.mxu0 0.0
  %1357 = vmatpush.msra.mxu0 0.0
  %1358 = vmatpush.msra.mxu0 0.0
  %1359 = vmatpush.msra.mxu0 0.0
  %1360 = vmatpush.msra.mxu0 0.0
  %1361 = vmatpush.msra.mxu0 %v847
  %1362 = vmatpush.msra.mxu0 %v835
  %1363 = vmatmul.f32.gmra.mxu0 %v873
  %v1364 = vpop.f32.mrf.mxu0
  %v1365 = vadd.f32 0.0, %v1364
  %1366 = vmatmul.f32.gmra.mxu0 %v876
  %v1367 = vpop.f32.mrf.mxu0
  %v1368 = vadd.f32 0.0, %v1367
  %1369 = vmatmul.f32.gmra.mxu0 %v879
  %v1370 = vpop.f32.mrf.mxu0
  %v1371 = vadd.f32 0.0, %v1370
  %1372 = vmatmul.f32.gmra.mxu0 %v882
  %v1373 = vpop.f32.mrf.mxu0
  %v1374 = vadd.f32 0.0, %v1373
  %1375 = vmatmul.f32.gmra.mxu0 %v885
  %v1376 = vpop.f32.mrf.mxu0
  %v1377 = vadd.f32 0.0, %v1376
  %1378 = vmatmul.f32.gmra.mxu0 %v888
  %v1379 = vpop.f32.mrf.mxu0
  %v1380 = vadd.f32 0.0, %v1379
  %1381 = vmatmul.f32.gmra.mxu0 %v891
  %v1382 = vpop.f32.mrf.mxu0
  %v1383 = vadd.f32 0.0, %v1382
  %1384 = vmatmul.f32.gmra.mxu0 %v894
  %v1385 = vpop.f32.mrf.mxu0
  %v1386 = vadd.f32 0.0, %v1385
  %1387 = vdwg.mxu0
  %v1388 = vadd.f32 %v614, %v914
  %v1389 = vadd.f32 %v615, %v955
  %v1390 = vadd.f32 %v616, %v996
  %v1391 = vadd.f32 %v617, %v1037
  %v1392 = vadd.f32 %v618, %v1078
  %v1393 = vadd.f32 %v619, %v1119
  %v1394 = vadd.f32 %v620, %v1160
  %v1395 = vadd.f32 %v621, %v1201
  %v1396 = vadd.f32 %v622, %v1242
  %v1397 = vadd.f32 %v623, %v1283
  %v1398 = vadd.f32 %v624, %v1324
  %v1399 = vadd.f32 %v625, %v1365
  %v1400 = vadd.f32 %v626, %v917
  %v1401 = vadd.f32 %v627, %v958
  %v1402 = vadd.f32 %v628, %v999
  %v1403 = vadd.f32 %v629, %v1040
  %v1404 = vadd.f32 %v630, %v1081
  %v1405 = vadd.f32 %v631, %v1122
  %v1406 = vadd.f32 %v632, %v1163
  %v1407 = vadd.f32 %v633, %v1204
  %v1408 = vadd.f32 %v634, %v1245
  %v1409 = vadd.f32 %v635, %v1286
  %v1410 = vadd.f32 %v636, %v1327
  %v1411 = vadd.f32 %v637, %v1368
  %v1412 = vadd.f32 %v638, %v920
  %v1413 = vadd.f32 %v639, %v961
  %v1414 = vadd.f32 %v640, %v1002
  %v1415 = vadd.f32 %v641, %v1043
  %v1416 = vadd.f32 %v642, %v1084
  %v1417 = vadd.f32 %v643, %v1125
  %v1418 = vadd.f32 %v644, %v1166
  %v1419 = vadd.f32 %v645, %v1207
  %v1420 = vadd.f32 %v646, %v1248
  %v1421 = vadd.f32 %v647, %v1289
  %v1422 = vadd.f32 %v648, %v1330
  %v1423 = vadd.f32 %v649, %v1371
  %v1424 = vadd.f32 %v650, %v923
  %v1425 = vadd.f32 %v651, %v964
  %v1426 = vadd.f32 %v652, %v1005
  %v1427 = vadd.f32 %v653, %v1046
  %v1428 = vadd.f32 %v654, %v1087
  %v1429 = vadd.f32 %v655, %v1128
  %v1430 = vadd.f32 %v656, %v1169
  %v1431 = vadd.f32 %v657, %v1210
  %v1432 = vadd.f32 %v658, %v1251
  %v1433 = vadd.f32 %v659, %v1292
  %v1434 = vadd.f32 %v660, %v1333
  %v1435 = vadd.f32 %v661, %v1374
  %v1436 = vadd.f32 %v662, %v926
  %v1437 = vadd.f32 %v663, %v967
  %v1438 = vadd.f32 %v664, %v1008
  %v1439 = vadd.f32 %v665, %v1049
  %v1440 = vadd.f32 %v666, %v1090
  %v1441 = vadd.f32 %v667, %v1131
  %v1442 = vadd.f32 %v668, %v1172
  %v1443 = vadd.f32 %v669, %v1213
  %v1444 = vadd.f32 %v670, %v1254
  %v1445 = vadd.f32 %v671, %v1295
  %v1446 = vadd.f32 %v672, %v1336
  %v1447 = vadd.f32 %v673, %v1377
  %v1448 = vadd.f32 %v674, %v929
  %v1449 = vadd.f32 %v675, %v970
  %v1450 = vadd.f32 %v676, %v1011
  %v1451 = vadd.f32 %v677, %v1052
  %v1452 = vadd.f32 %v678, %v1093
  %v1453 = vadd.f32 %v679, %v1134
  %v1454 = vadd.f32 %v680, %v1175
  %v1455 = vadd.f32 %v681, %v1216
  %v1456 = vadd.f32 %v682, %v1257
  %v1457 = vadd.f32 %v683, %v1298
  %v1458 = vadd.f32 %v684, %v1339
  %v1459 = vadd.f32 %v685, %v1380
  %v1460 = vadd.f32 %v686, %v932
  %v1461 = vadd.f32 %v687, %v973
  %v1462 = vadd.f32 %v688, %v1014
  %v1463 = vadd.f32 %v689, %v1055
  %v1464 = vadd.f32 %v690, %v1096
  %v1465 = vadd.f32 %v691, %v1137
  %v1466 = vadd.f32 %v692, %v1178
  %v1467 = vadd.f32 %v693, %v1219
  %v1468 = vadd.f32 %v694, %v1260
  %v1469 = vadd.f32 %v695, %v1301
  %v1470 = vadd.f32 %v696, %v1342
  %v1471 = vadd.f32 %v697, %v1383
  %v1472 = vadd.f32 %v698, %v935
  %v1473 = vadd.f32 %v699, %v976
  %v1474 = vadd.f32 %v700, %v1017
  %v1475 = vadd.f32 %v701, %v1058
  %v1476 = vadd.f32 %v702, %v1099
  %v1477 = vadd.f32 %v703, %v1140
  %v1478 = vadd.f32 %v704, %v1181
  %v1479 = vadd.f32 %v705, %v1222
  %v1480 = vadd.f32 %v706, %v1263
  %v1481 = vadd.f32 %v707, %v1304
  %v1482 = vadd.f32 %v708, %v1345
  %v1483 = vadd.f32 %v709, %v1386
  %s1484 = scalar_lea.vmem %s1, 128
  %v1485 = vld [vmem:[%s1484] sm:$0xff]
  %v1486 = vld [vmem:[%s1484 + $0x8] sm:$0xff]
  %v1487 = vld [vmem:[%s1484 + $0x10] sm:$0xff]
  %v1488 = vld [vmem:[%s1484 + $0x18] sm:$0xff]
  %v1489 = vld [vmem:[%s1484 + $0x20] sm:$0xff]
  %v1490 = vld [vmem:[%s1484 + $0x28] sm:$0xff]
  %v1491 = vld [vmem:[%s1484 + $0x30] sm:$0xff]
  %v1492 = vld [vmem:[%s1484 + $0x38] sm:$0xff]
  %1493 = vrot.lane.b32.xlu0 %v710, 126
  %v1494 = vpop.permute.xlu0 %1493
  %1495 = vrot.lane.b32.xlu0 %v711, 126
  %v1496 = vpop.permute.xlu0 %1495
  %1497 = vrot.lane.b32.xlu0 %v712, 126
  %v1498 = vpop.permute.xlu0 %1497
  %1499 = vrot.lane.b32.xlu0 %v713, 126
  %v1500 = vpop.permute.xlu0 %1499
  %1501 = vrot.lane.b32.xlu0 %v714, 126
  %v1502 = vpop.permute.xlu0 %1501
  %1503 = vrot.lane.b32.xlu0 %v715, 126
  %v1504 = vpop.permute.xlu0 %1503
  %1505 = vrot.lane.b32.xlu0 %v716, 126
  %v1506 = vpop.permute.xlu0 %1505
  %1507 = vrot.lane.b32.xlu0 %v717, 126
  %v1508 = vpop.permute.xlu0 %1507
  %1509 = vrot.lane.b32.xlu0 %v718, 126
  %v1510 = vpop.permute.xlu0 %1509
  %1511 = vrot.lane.b32.xlu0 %v719, 126
  %v1512 = vpop.permute.xlu0 %1511
  %1513 = vrot.lane.b32.xlu0 %v720, 126
  %v1514 = vpop.permute.xlu0 %1513
  %1515 = vrot.lane.b32.xlu0 %v721, 126
  %v1516 = vpop.permute.xlu0 %1515
  %1517 = vrot.lane.b32.xlu0 %v722, 126
  %v1518 = vpop.permute.xlu0 %1517
  %1519 = vrot.lane.b32.xlu0 %v723, 126
  %v1520 = vpop.permute.xlu0 %1519
  %1521 = vrot.lane.b32.xlu0 %v724, 126
  %v1522 = vpop.permute.xlu0 %1521
  %1523 = vrot.lane.b32.xlu0 %v725, 126
  %v1524 = vpop.permute.xlu0 %1523
  %1525 = vrot.lane.b32.xlu0 %v726, 126
  %v1526 = vpop.permute.xlu0 %1525
  %1527 = vrot.lane.b32.xlu0 %v727, 126
  %v1528 = vpop.permute.xlu0 %1527
  %1529 = vrot.lane.b32.xlu0 %v728, 126
  %v1530 = vpop.permute.xlu0 %1529
  %1531 = vrot.lane.b32.xlu0 %v729, 126
  %v1532 = vpop.permute.xlu0 %1531
  %1533 = vrot.lane.b32.xlu0 %v730, 126
  %v1534 = vpop.permute.xlu0 %1533
  %1535 = vrot.lane.b32.xlu0 %v731, 126
  %v1536 = vpop.permute.xlu0 %1535
  %1537 = vrot.lane.b32.xlu0 %v732, 126
  %v1538 = vpop.permute.xlu0 %1537
  %1539 = vrot.lane.b32.xlu0 %v733, 126
  %v1540 = vpop.permute.xlu0 %1539
  %1541 = vrot.lane.b32.xlu0 %v734, 126
  %v1542 = vpop.permute.xlu0 %1541
  %1543 = vrot.lane.b32.xlu0 %v735, 126
  %v1544 = vpop.permute.xlu0 %1543
  %vm1545 = vcmask 1031168
  %v1546 = vsel %vm1545, %v1494, %v1496
  %v1547 = vsel %vm1545, %v1496, %v1498
  %v1548 = vsel %vm1545, %v1498, %v1500
  %v1549 = vsel %vm1545, %v1500, %v1502
  %v1550 = vsel %vm1545, %v1502, %v1504
  %v1551 = vsel %vm1545, %v1504, %v1506
  %v1552 = vsel %vm1545, %v1506, %v1508
  %v1553 = vsel %vm1545, %v1508, %v1510
  %v1554 = vsel %vm1545, %v1510, %v1512
  %v1555 = vsel %vm1545, %v1512, %v1514
  %v1556 = vsel %vm1545, %v1514, %v1516
  %v1557 = vsel %vm1545, %v1516, %v1518
  %v1558 = vsel %vm1545, %v1520, %v1522
  %v1559 = vsel %vm1545, %v1522, %v1524
  %v1560 = vsel %vm1545, %v1524, %v1526
  %v1561 = vsel %vm1545, %v1526, %v1528
  %v1562 = vsel %vm1545, %v1528, %v1530
  %v1563 = vsel %vm1545, %v1530, %v1532
  %v1564 = vsel %vm1545, %v1532, %v1534
  %v1565 = vsel %vm1545, %v1534, %v1536
  %v1566 = vsel %vm1545, %v1536, %v1538
  %v1567 = vsel %vm1545, %v1538, %v1540
  %v1568 = vsel %vm1545, %v1540, %v1542
  %v1569 = vsel %vm1545, %v1542, %v1544
  %v1595 = vsel %vm97, %v1485, 0
  %v1598 = vsel %vm97, %v1486, 0
  %v1601 = vsel %vm97, %v1487, 0
  %v1604 = vsel %vm97, %v1488, 0
  %v1607 = vsel %vm97, %v1489, 0
  %v1610 = vsel %vm97, %v1490, 0
  %v1613 = vsel %vm97, %v1491, 0
  %v1616 = vsel %vm97, %v1492, 0
  %1618 = vmatpush.msra.mxu0 0.0
  %1619 = vmatpush.msra.mxu0 0.0
  %1620 = vmatpush.msra.mxu0 0.0
  %1621 = vmatpush.msra.mxu0 0.0
  %1622 = vmatpush.msra.mxu0 0.0
  %1623 = vmatpush.msra.mxu0 0.0
  %1624 = vmatpush.msra.mxu0 0.0
  %1625 = vmatpush.msra.mxu0 0.0
  %1626 = vmatpush.msra.mxu0 0.0
  %1627 = vmatpush.msra.mxu0 0.0
  %1628 = vmatpush.msra.mxu0 0.0
  %1629 = vmatpush.msra.mxu0 0.0
  %1630 = vmatpush.msra.mxu0 0.0
  %1631 = vmatpush.msra.mxu0 0.0
  %1632 = vmatpush.msra.mxu0 %v1558
  %1633 = vmatpush.msra.mxu0 %v1546
  %1634 = vmatmul.f32.gmra.mxu0 %v1595
  %v1635 = vpop.f32.mrf.mxu0
  %v1636 = vadd.f32 0.0, %v1635
  %1637 = vmatmul.f32.gmra.mxu0 %v1598
  %v1638 = vpop.f32.mrf.mxu0
  %v1639 = vadd.f32 0.0, %v1638
  %1640 = vmatmul.f32.gmra.mxu0 %v1601
  %v1641 = vpop.f32.mrf.mxu0
  %v1642 = vadd.f32 0.0, %v1641
  %1643 = vmatmul.f32.gmra.mxu0 %v1604
  %v1644 = vpop.f32.mrf.mxu0
  %v1645 = vadd.f32 0.0, %v1644
  %1646 = vmatmul.f32.gmra.mxu0 %v1607
  %v1647 = vpop.f32.mrf.mxu0
  %v1648 = vadd.f32 0.0, %v1647
  %1649 = vmatmul.f32.gmra.mxu0 %v1610
  %v1650 = vpop.f32.mrf.mxu0
  %v1651 = vadd.f32 0.0, %v1650
  %1652 = vmatmul.f32.gmra.mxu0 %v1613
  %v1653 = vpop.f32.mrf.mxu0
  %v1654 = vadd.f32 0.0, %v1653
  %1655 = vmatmul.f32.gmra.mxu0 %v1616
  %v1656 = vpop.f32.mrf.mxu0
  %v1657 = vadd.f32 0.0, %v1656
  %1658 = vdwg.mxu0
  %1659 = vmatpush.msra.mxu0 0.0
  %1660 = vmatpush.msra.mxu0 0.0
  %1661 = vmatpush.msra.mxu0 0.0
  %1662 = vmatpush.msra.mxu0 0.0
  %1663 = vmatpush.msra.mxu0 0.0
  %1664 = vmatpush.msra.mxu0 0.0
  %1665 = vmatpush.msra.mxu0 0.0
  %1666 = vmatpush.msra.mxu0 0.0
  %1667 = vmatpush.msra.mxu0 0.0
  %1668 = vmatpush.msra.mxu0 0.0
  %1669 = vmatpush.msra.mxu0 0.0
  %1670 = vmatpush.msra.mxu0 0.0
  %1671 = vmatpush.msra.mxu0 0.0
  %1672 = vmatpush.msra.mxu0 0.0
  %1673 = vmatpush.msra.mxu0 %v1559
  %1674 = vmatpush.msra.mxu0 %v1547
  %1675 = vmatmul.f32.gmra.mxu0 %v1595
  %v1676 = vpop.f32.mrf.mxu0
  %v1677 = vadd.f32 0.0, %v1676
  %1678 = vmatmul.f32.gmra.mxu0 %v1598
  %v1679 = vpop.f32.mrf.mxu0
  %v1680 = vadd.f32 0.0, %v1679
  %1681 = vmatmul.f32.gmra.mxu0 %v1601
  %v1682 = vpop.f32.mrf.mxu0
  %v1683 = vadd.f32 0.0, %v1682
  %1684 = vmatmul.f32.gmra.mxu0 %v1604
  %v1685 = vpop.f32.mrf.mxu0
  %v1686 = vadd.f32 0.0, %v1685
  %1687 = vmatmul.f32.gmra.mxu0 %v1607
  %v1688 = vpop.f32.mrf.mxu0
  %v1689 = vadd.f32 0.0, %v1688
  %1690 = vmatmul.f32.gmra.mxu0 %v1610
  %v1691 = vpop.f32.mrf.mxu0
  %v1692 = vadd.f32 0.0, %v1691
  %1693 = vmatmul.f32.gmra.mxu0 %v1613
  %v1694 = vpop.f32.mrf.mxu0
  %v1695 = vadd.f32 0.0, %v1694
  %1696 = vmatmul.f32.gmra.mxu0 %v1616
  %v1697 = vpop.f32.mrf.mxu0
  %v1698 = vadd.f32 0.0, %v1697
  %1699 = vdwg.mxu0
  %1700 = vmatpush.msra.mxu0 0.0
  %1701 = vmatpush.msra.mxu0 0.0
  %1702 = vmatpush.msra.mxu0 0.0
  %1703 = vmatpush.msra.mxu0 0.0
  %1704 = vmatpush.msra.mxu0 0.0
  %1705 = vmatpush.msra.mxu0 0.0
  %1706 = vmatpush.msra.mxu0 0.0
  %1707 = vmatpush.msra.mxu0 0.0
  %1708 = vmatpush.msra.mxu0 0.0
  %1709 = vmatpush.msra.mxu0 0.0
  %1710 = vmatpush.msra.mxu0 0.0
  %1711 = vmatpush.msra.mxu0 0.0
  %1712 = vmatpush.msra.mxu0 0.0
  %1713 = vmatpush.msra.mxu0 0.0
  %1714 = vmatpush.msra.mxu0 %v1560
  %1715 = vmatpush.msra.mxu0 %v1548
  %1716 = vmatmul.f32.gmra.mxu0 %v1595
  %v1717 = vpop.f32.mrf.mxu0
  %v1718 = vadd.f32 0.0, %v1717
  %1719 = vmatmul.f32.gmra.mxu0 %v1598
  %v1720 = vpop.f32.mrf.mxu0
  %v1721 = vadd.f32 0.0, %v1720
  %1722 = vmatmul.f32.gmra.mxu0 %v1601
  %v1723 = vpop.f32.mrf.mxu0
  %v1724 = vadd.f32 0.0, %v1723
  %1725 = vmatmul.f32.gmra.mxu0 %v1604
  %v1726 = vpop.f32.mrf.mxu0
  %v1727 = vadd.f32 0.0, %v1726
  %1728 = vmatmul.f32.gmra.mxu0 %v1607
  %v1729 = vpop.f32.mrf.mxu0
  %v1730 = vadd.f32 0.0, %v1729
  %1731 = vmatmul.f32.gmra.mxu0 %v1610
  %v1732 = vpop.f32.mrf.mxu0
  %v1733 = vadd.f32 0.0, %v1732
  %1734 = vmatmul.f32.gmra.mxu0 %v1613
  %v1735 = vpop.f32.mrf.mxu0
  %v1736 = vadd.f32 0.0, %v1735
  %1737 = vmatmul.f32.gmra.mxu0 %v1616
  %v1738 = vpop.f32.mrf.mxu0
  %v1739 = vadd.f32 0.0, %v1738
  %1740 = vdwg.mxu0
  %1741 = vmatpush.msra.mxu0 0.0
  %1742 = vmatpush.msra.mxu0 0.0
  %1743 = vmatpush.msra.mxu0 0.0
  %1744 = vmatpush.msra.mxu0 0.0
  %1745 = vmatpush.msra.mxu0 0.0
  %1746 = vmatpush.msra.mxu0 0.0
  %1747 = vmatpush.msra.mxu0 0.0
  %1748 = vmatpush.msra.mxu0 0.0
  %1749 = vmatpush.msra.mxu0 0.0
  %1750 = vmatpush.msra.mxu0 0.0
  %1751 = vmatpush.msra.mxu0 0.0
  %1752 = vmatpush.msra.mxu0 0.0
  %1753 = vmatpush.msra.mxu0 0.0
  %1754 = vmatpush.msra.mxu0 0.0
  %1755 = vmatpush.msra.mxu0 %v1561
  %1756 = vmatpush.msra.mxu0 %v1549
  %1757 = vmatmul.f32.gmra.mxu0 %v1595
  %v1758 = vpop.f32.mrf.mxu0
  %v1759 = vadd.f32 0.0, %v1758
  %1760 = vmatmul.f32.gmra.mxu0 %v1598
  %v1761 = vpop.f32.mrf.mxu0
  %v1762 = vadd.f32 0.0, %v1761
  %1763 = vmatmul.f32.gmra.mxu0 %v1601
  %v1764 = vpop.f32.mrf.mxu0
  %v1765 = vadd.f32 0.0, %v1764
  %1766 = vmatmul.f32.gmra.mxu0 %v1604
  %v1767 = vpop.f32.mrf.mxu0
  %v1768 = vadd.f32 0.0, %v1767
  %1769 = vmatmul.f32.gmra.mxu0 %v1607
  %v1770 = vpop.f32.mrf.mxu0
  %v1771 = vadd.f32 0.0, %v1770
  %1772 = vmatmul.f32.gmra.mxu0 %v1610
  %v1773 = vpop.f32.mrf.mxu0
  %v1774 = vadd.f32 0.0, %v1773
  %1775 = vmatmul.f32.gmra.mxu0 %v1613
  %v1776 = vpop.f32.mrf.mxu0
  %v1777 = vadd.f32 0.0, %v1776
  %1778 = vmatmul.f32.gmra.mxu0 %v1616
  %v1779 = vpop.f32.mrf.mxu0
  %v1780 = vadd.f32 0.0, %v1779
  %1781 = vdwg.mxu0
  %1782 = vmatpush.msra.mxu0 0.0
  %1783 = vmatpush.msra.mxu0 0.0
  %1784 = vmatpush.msra.mxu0 0.0
  %1785 = vmatpush.msra.mxu0 0.0
  %1786 = vmatpush.msra.mxu0 0.0
  %1787 = vmatpush.msra.mxu0 0.0
  %1788 = vmatpush.msra.mxu0 0.0
  %1789 = vmatpush.msra.mxu0 0.0
  %1790 = vmatpush.msra.mxu0 0.0
  %1791 = vmatpush.msra.mxu0 0.0
  %1792 = vmatpush.msra.mxu0 0.0
  %1793 = vmatpush.msra.mxu0 0.0
  %1794 = vmatpush.msra.mxu0 0.0
  %1795 = vmatpush.msra.mxu0 0.0
  %1796 = vmatpush.msra.mxu0 %v1562
  %1797 = vmatpush.msra.mxu0 %v1550
  %1798 = vmatmul.f32.gmra.mxu0 %v1595
  %v1799 = vpop.f32.mrf.mxu0
  %v1800 = vadd.f32 0.0, %v1799
  %1801 = vmatmul.f32.gmra.mxu0 %v1598
  %v1802 = vpop.f32.mrf.mxu0
  %v1803 = vadd.f32 0.0, %v1802
  %1804 = vmatmul.f32.gmra.mxu0 %v1601
  %v1805 = vpop.f32.mrf.mxu0
  %v1806 = vadd.f32 0.0, %v1805
  %1807 = vmatmul.f32.gmra.mxu0 %v1604
  %v1808 = vpop.f32.mrf.mxu0
  %v1809 = vadd.f32 0.0, %v1808
  %1810 = vmatmul.f32.gmra.mxu0 %v1607
  %v1811 = vpop.f32.mrf.mxu0
  %v1812 = vadd.f32 0.0, %v1811
  %1813 = vmatmul.f32.gmra.mxu0 %v1610
  %v1814 = vpop.f32.mrf.mxu0
  %v1815 = vadd.f32 0.0, %v1814
  %1816 = vmatmul.f32.gmra.mxu0 %v1613
  %v1817 = vpop.f32.mrf.mxu0
  %v1818 = vadd.f32 0.0, %v1817
  %1819 = vmatmul.f32.gmra.mxu0 %v1616
  %v1820 = vpop.f32.mrf.mxu0
  %v1821 = vadd.f32 0.0, %v1820
  %1822 = vdwg.mxu0
  %1823 = vmatpush.msra.mxu0 0.0
  %1824 = vmatpush.msra.mxu0 0.0
  %1825 = vmatpush.msra.mxu0 0.0
  %1826 = vmatpush.msra.mxu0 0.0
  %1827 = vmatpush.msra.mxu0 0.0
  %1828 = vmatpush.msra.mxu0 0.0
  %1829 = vmatpush.msra.mxu0 0.0
  %1830 = vmatpush.msra.mxu0 0.0
  %1831 = vmatpush.msra.mxu0 0.0
  %1832 = vmatpush.msra.mxu0 0.0
  %1833 = vmatpush.msra.mxu0 0.0
  %1834 = vmatpush.msra.mxu0 0.0
  %1835 = vmatpush.msra.mxu0 0.0
  %1836 = vmatpush.msra.mxu0 0.0
  %1837 = vmatpush.msra.mxu0 %v1563
  %1838 = vmatpush.msra.mxu0 %v1551
  %1839 = vmatmul.f32.gmra.mxu0 %v1595
  %v1840 = vpop.f32.mrf.mxu0
  %v1841 = vadd.f32 0.0, %v1840
  %1842 = vmatmul.f32.gmra.mxu0 %v1598
  %v1843 = vpop.f32.mrf.mxu0
  %v1844 = vadd.f32 0.0, %v1843
  %1845 = vmatmul.f32.gmra.mxu0 %v1601
  %v1846 = vpop.f32.mrf.mxu0
  %v1847 = vadd.f32 0.0, %v1846
  %1848 = vmatmul.f32.gmra.mxu0 %v1604
  %v1849 = vpop.f32.mrf.mxu0
  %v1850 = vadd.f32 0.0, %v1849
  %1851 = vmatmul.f32.gmra.mxu0 %v1607
  %v1852 = vpop.f32.mrf.mxu0
  %v1853 = vadd.f32 0.0, %v1852
  %1854 = vmatmul.f32.gmra.mxu0 %v1610
  %v1855 = vpop.f32.mrf.mxu0
  %v1856 = vadd.f32 0.0, %v1855
  %1857 = vmatmul.f32.gmra.mxu0 %v1613
  %v1858 = vpop.f32.mrf.mxu0
  %v1859 = vadd.f32 0.0, %v1858
  %1860 = vmatmul.f32.gmra.mxu0 %v1616
  %v1861 = vpop.f32.mrf.mxu0
  %v1862 = vadd.f32 0.0, %v1861
  %1863 = vdwg.mxu0
  %1864 = vmatpush.msra.mxu0 0.0
  %1865 = vmatpush.msra.mxu0 0.0
  %1866 = vmatpush.msra.mxu0 0.0
  %1867 = vmatpush.msra.mxu0 0.0
  %1868 = vmatpush.msra.mxu0 0.0
  %1869 = vmatpush.msra.mxu0 0.0
  %1870 = vmatpush.msra.mxu0 0.0
  %1871 = vmatpush.msra.mxu0 0.0
  %1872 = vmatpush.msra.mxu0 0.0
  %1873 = vmatpush.msra.mxu0 0.0
  %1874 = vmatpush.msra.mxu0 0.0
  %1875 = vmatpush.msra.mxu0 0.0
  %1876 = vmatpush.msra.mxu0 0.0
  %1877 = vmatpush.msra.mxu0 0.0
  %1878 = vmatpush.msra.mxu0 %v1564
  %1879 = vmatpush.msra.mxu0 %v1552
  %1880 = vmatmul.f32.gmra.mxu0 %v1595
  %v1881 = vpop.f32.mrf.mxu0
  %v1882 = vadd.f32 0.0, %v1881
  %1883 = vmatmul.f32.gmra.mxu0 %v1598
  %v1884 = vpop.f32.mrf.mxu0
  %v1885 = vadd.f32 0.0, %v1884
  %1886 = vmatmul.f32.gmra.mxu0 %v1601
  %v1887 = vpop.f32.mrf.mxu0
  %v1888 = vadd.f32 0.0, %v1887
  %1889 = vmatmul.f32.gmra.mxu0 %v1604
  %v1890 = vpop.f32.mrf.mxu0
  %v1891 = vadd.f32 0.0, %v1890
  %1892 = vmatmul.f32.gmra.mxu0 %v1607
  %v1893 = vpop.f32.mrf.mxu0
  %v1894 = vadd.f32 0.0, %v1893
  %1895 = vmatmul.f32.gmra.mxu0 %v1610
  %v1896 = vpop.f32.mrf.mxu0
  %v1897 = vadd.f32 0.0, %v1896
  %1898 = vmatmul.f32.gmra.mxu0 %v1613
  %v1899 = vpop.f32.mrf.mxu0
  %v1900 = vadd.f32 0.0, %v1899
  %1901 = vmatmul.f32.gmra.mxu0 %v1616
  %v1902 = vpop.f32.mrf.mxu0
  %v1903 = vadd.f32 0.0, %v1902
  %1904 = vdwg.mxu0
  %1905 = vmatpush.msra.mxu0 0.0
  %1906 = vmatpush.msra.mxu0 0.0
  %1907 = vmatpush.msra.mxu0 0.0
  %1908 = vmatpush.msra.mxu0 0.0
  %1909 = vmatpush.msra.mxu0 0.0
  %1910 = vmatpush.msra.mxu0 0.0
  %1911 = vmatpush.msra.mxu0 0.0
  %1912 = vmatpush.msra.mxu0 0.0
  %1913 = vmatpush.msra.mxu0 0.0
  %1914 = vmatpush.msra.mxu0 0.0
  %1915 = vmatpush.msra.mxu0 0.0
  %1916 = vmatpush.msra.mxu0 0.0
  %1917 = vmatpush.msra.mxu0 0.0
  %1918 = vmatpush.msra.mxu0 0.0
  %1919 = vmatpush.msra.mxu0 %v1565
  %1920 = vmatpush.msra.mxu0 %v1553
  %1921 = vmatmul.f32.gmra.mxu0 %v1595
  %v1922 = vpop.f32.mrf.mxu0
  %v1923 = vadd.f32 0.0, %v1922
  %1924 = vmatmul.f32.gmra.mxu0 %v1598
  %v1925 = vpop.f32.mrf.mxu0
  %v1926 = vadd.f32 0.0, %v1925
  %1927 = vmatmul.f32.gmra.mxu0 %v1601
  %v1928 = vpop.f32.mrf.mxu0
  %v1929 = vadd.f32 0.0, %v1928
  %1930 = vmatmul.f32.gmra.mxu0 %v1604
  %v1931 = vpop.f32.mrf.mxu0
  %v1932 = vadd.f32 0.0, %v1931
  %1933 = vmatmul.f32.gmra.mxu0 %v1607
  %v1934 = vpop.f32.mrf.mxu0
  %v1935 = vadd.f32 0.0, %v1934
  %1936 = vmatmul.f32.gmra.mxu0 %v1610
  %v1937 = vpop.f32.mrf.mxu0
  %v1938 = vadd.f32 0.0, %v1937
  %1939 = vmatmul.f32.gmra.mxu0 %v1613
  %v1940 = vpop.f32.mrf.mxu0
  %v1941 = vadd.f32 0.0, %v1940
  %1942 = vmatmul.f32.gmra.mxu0 %v1616
  %v1943 = vpop.f32.mrf.mxu0
  %v1944 = vadd.f32 0.0, %v1943
  %1945 = vdwg.mxu0
  %1946 = vmatpush.msra.mxu0 0.0
  %1947 = vmatpush.msra.mxu0 0.0
  %1948 = vmatpush.msra.mxu0 0.0
  %1949 = vmatpush.msra.mxu0 0.0
  %1950 = vmatpush.msra.mxu0 0.0
  %1951 = vmatpush.msra.mxu0 0.0
  %1952 = vmatpush.msra.mxu0 0.0
  %1953 = vmatpush.msra.mxu0 0.0
  %1954 = vmatpush.msra.mxu0 0.0
  %1955 = vmatpush.msra.mxu0 0.0
  %1956 = vmatpush.msra.mxu0 0.0
  %1957 = vmatpush.msra.mxu0 0.0
  %1958 = vmatpush.msra.mxu0 0.0
  %1959 = vmatpush.msra.mxu0 0.0
  %1960 = vmatpush.msra.mxu0 %v1566
  %1961 = vmatpush.msra.mxu0 %v1554
  %1962 = vmatmul.f32.gmra.mxu0 %v1595
  %v1963 = vpop.f32.mrf.mxu0
  %v1964 = vadd.f32 0.0, %v1963
  %1965 = vmatmul.f32.gmra.mxu0 %v1598
  %v1966 = vpop.f32.mrf.mxu0
  %v1967 = vadd.f32 0.0, %v1966
  %1968 = vmatmul.f32.gmra.mxu0 %v1601
  %v1969 = vpop.f32.mrf.mxu0
  %v1970 = vadd.f32 0.0, %v1969
  %1971 = vmatmul.f32.gmra.mxu0 %v1604
  %v1972 = vpop.f32.mrf.mxu0
  %v1973 = vadd.f32 0.0, %v1972
  %1974 = vmatmul.f32.gmra.mxu0 %v1607
  %v1975 = vpop.f32.mrf.mxu0
  %v1976 = vadd.f32 0.0, %v1975
  %1977 = vmatmul.f32.gmra.mxu0 %v1610
  %v1978 = vpop.f32.mrf.mxu0
  %v1979 = vadd.f32 0.0, %v1978
  %1980 = vmatmul.f32.gmra.mxu0 %v1613
  %v1981 = vpop.f32.mrf.mxu0
  %v1982 = vadd.f32 0.0, %v1981
  %1983 = vmatmul.f32.gmra.mxu0 %v1616
  %v1984 = vpop.f32.mrf.mxu0
  %v1985 = vadd.f32 0.0, %v1984
  %1986 = vdwg.mxu0
  %1987 = vmatpush.msra.mxu0 0.0
  %1988 = vmatpush.msra.mxu0 0.0
  %1989 = vmatpush.msra.mxu0 0.0
  %1990 = vmatpush.msra.mxu0 0.0
  %1991 = vmatpush.msra.mxu0 0.0
  %1992 = vmatpush.msra.mxu0 0.0
  %1993 = vmatpush.msra.mxu0 0.0
  %1994 = vmatpush.msra.mxu0 0.0
  %1995 = vmatpush.msra.mxu0 0.0
  %1996 = vmatpush.msra.mxu0 0.0
  %1997 = vmatpush.msra.mxu0 0.0
  %1998 = vmatpush.msra.mxu0 0.0
  %1999 = vmatpush.msra.mxu0 0.0
  %2000 = vmatpush.msra.mxu0 0.0
  %2001 = vmatpush.msra.mxu0 %v1567
  %2002 = vmatpush.msra.mxu0 %v1555
  %2003 = vmatmul.f32.gmra.mxu0 %v1595
  %v2004 = vpop.f32.mrf.mxu0
  %v2005 = vadd.f32 0.0, %v2004
  %2006 = vmatmul.f32.gmra.mxu0 %v1598
  %v2007 = vpop.f32.mrf.mxu0
  %v2008 = vadd.f32 0.0, %v2007
  %2009 = vmatmul.f32.gmra.mxu0 %v1601
  %v2010 = vpop.f32.mrf.mxu0
  %v2011 = vadd.f32 0.0, %v2010
  %2012 = vmatmul.f32.gmra.mxu0 %v1604
  %v2013 = vpop.f32.mrf.mxu0
  %v2014 = vadd.f32 0.0, %v2013
  %2015 = vmatmul.f32.gmra.mxu0 %v1607
  %v2016 = vpop.f32.mrf.mxu0
  %v2017 = vadd.f32 0.0, %v2016
  %2018 = vmatmul.f32.gmra.mxu0 %v1610
  %v2019 = vpop.f32.mrf.mxu0
  %v2020 = vadd.f32 0.0, %v2019
  %2021 = vmatmul.f32.gmra.mxu0 %v1613
  %v2022 = vpop.f32.mrf.mxu0
  %v2023 = vadd.f32 0.0, %v2022
  %2024 = vmatmul.f32.gmra.mxu0 %v1616
  %v2025 = vpop.f32.mrf.mxu0
  %v2026 = vadd.f32 0.0, %v2025
  %2027 = vdwg.mxu0
  %2028 = vmatpush.msra.mxu0 0.0
  %2029 = vmatpush.msra.mxu0 0.0
  %2030 = vmatpush.msra.mxu0 0.0
  %2031 = vmatpush.msra.mxu0 0.0
  %2032 = vmatpush.msra.mxu0 0.0
  %2033 = vmatpush.msra.mxu0 0.0
  %2034 = vmatpush.msra.mxu0 0.0
  %2035 = vmatpush.msra.mxu0 0.0
  %2036 = vmatpush.msra.mxu0 0.0
  %2037 = vmatpush.msra.mxu0 0.0
  %2038 = vmatpush.msra.mxu0 0.0
  %2039 = vmatpush.msra.mxu0 0.0
  %2040 = vmatpush.msra.mxu0 0.0
  %2041 = vmatpush.msra.mxu0 0.0
  %2042 = vmatpush.msra.mxu0 %v1568
  %2043 = vmatpush.msra.mxu0 %v1556
  %2044 = vmatmul.f32.gmra.mxu0 %v1595
  %v2045 = vpop.f32.mrf.mxu0
  %v2046 = vadd.f32 0.0, %v2045
  %2047 = vmatmul.f32.gmra.mxu0 %v1598
  %v2048 = vpop.f32.mrf.mxu0
  %v2049 = vadd.f32 0.0, %v2048
  %2050 = vmatmul.f32.gmra.mxu0 %v1601
  %v2051 = vpop.f32.mrf.mxu0
  %v2052 = vadd.f32 0.0, %v2051
  %2053 = vmatmul.f32.gmra.mxu0 %v1604
  %v2054 = vpop.f32.mrf.mxu0
  %v2055 = vadd.f32 0.0, %v2054
  %2056 = vmatmul.f32.gmra.mxu0 %v1607
  %v2057 = vpop.f32.mrf.mxu0
  %v2058 = vadd.f32 0.0, %v2057
  %2059 = vmatmul.f32.gmra.mxu0 %v1610
  %v2060 = vpop.f32.mrf.mxu0
  %v2061 = vadd.f32 0.0, %v2060
  %2062 = vmatmul.f32.gmra.mxu0 %v1613
  %v2063 = vpop.f32.mrf.mxu0
  %v2064 = vadd.f32 0.0, %v2063
  %2065 = vmatmul.f32.gmra.mxu0 %v1616
  %v2066 = vpop.f32.mrf.mxu0
  %v2067 = vadd.f32 0.0, %v2066
  %2068 = vdwg.mxu0
  %2069 = vmatpush.msra.mxu0 0.0
  %2070 = vmatpush.msra.mxu0 0.0
  %2071 = vmatpush.msra.mxu0 0.0
  %2072 = vmatpush.msra.mxu0 0.0
  %2073 = vmatpush.msra.mxu0 0.0
  %2074 = vmatpush.msra.mxu0 0.0
  %2075 = vmatpush.msra.mxu0 0.0
  %2076 = vmatpush.msra.mxu0 0.0
  %2077 = vmatpush.msra.mxu0 0.0
  %2078 = vmatpush.msra.mxu0 0.0
  %2079 = vmatpush.msra.mxu0 0.0
  %2080 = vmatpush.msra.mxu0 0.0
  %2081 = vmatpush.msra.mxu0 0.0
  %2082 = vmatpush.msra.mxu0 0.0
  %2083 = vmatpush.msra.mxu0 %v1569
  %2084 = vmatpush.msra.mxu0 %v1557
  %2085 = vmatmul.f32.gmra.mxu0 %v1595
  %v2086 = vpop.f32.mrf.mxu0
  %v2087 = vadd.f32 0.0, %v2086
  %2088 = vmatmul.f32.gmra.mxu0 %v1598
  %v2089 = vpop.f32.mrf.mxu0
  %v2090 = vadd.f32 0.0, %v2089
  %2091 = vmatmul.f32.gmra.mxu0 %v1601
  %v2092 = vpop.f32.mrf.mxu0
  %v2093 = vadd.f32 0.0, %v2092
  %2094 = vmatmul.f32.gmra.mxu0 %v1604
  %v2095 = vpop.f32.mrf.mxu0
  %v2096 = vadd.f32 0.0, %v2095
  %2097 = vmatmul.f32.gmra.mxu0 %v1607
  %v2098 = vpop.f32.mrf.mxu0
  %v2099 = vadd.f32 0.0, %v2098
  %2100 = vmatmul.f32.gmra.mxu0 %v1610
  %v2101 = vpop.f32.mrf.mxu0
  %v2102 = vadd.f32 0.0, %v2101
  %2103 = vmatmul.f32.gmra.mxu0 %v1613
  %v2104 = vpop.f32.mrf.mxu0
  %v2105 = vadd.f32 0.0, %v2104
  %2106 = vmatmul.f32.gmra.mxu0 %v1616
  %v2107 = vpop.f32.mrf.mxu0
  %v2108 = vadd.f32 0.0, %v2107
  %2109 = vdwg.mxu0
  %v2110 = vadd.f32 %v1388, %v1636
  %v2111 = vadd.f32 %v1389, %v1677
  %v2112 = vadd.f32 %v1390, %v1718
  %v2113 = vadd.f32 %v1391, %v1759
  %v2114 = vadd.f32 %v1392, %v1800
  %v2115 = vadd.f32 %v1393, %v1841
  %v2116 = vadd.f32 %v1394, %v1882
  %v2117 = vadd.f32 %v1395, %v1923
  %v2118 = vadd.f32 %v1396, %v1964
  %v2119 = vadd.f32 %v1397, %v2005
  %v2120 = vadd.f32 %v1398, %v2046
  %v2121 = vadd.f32 %v1399, %v2087
  %v2122 = vadd.f32 %v1400, %v1639
  %v2123 = vadd.f32 %v1401, %v1680
  %v2124 = vadd.f32 %v1402, %v1721
  %v2125 = vadd.f32 %v1403, %v1762
  %v2126 = vadd.f32 %v1404, %v1803
  %v2127 = vadd.f32 %v1405, %v1844
  %v2128 = vadd.f32 %v1406, %v1885
  %v2129 = vadd.f32 %v1407, %v1926
  %v2130 = vadd.f32 %v1408, %v1967
  %v2131 = vadd.f32 %v1409, %v2008
  %v2132 = vadd.f32 %v1410, %v2049
  %v2133 = vadd.f32 %v1411, %v2090
  %v2134 = vadd.f32 %v1412, %v1642
  %v2135 = vadd.f32 %v1413, %v1683
  %v2136 = vadd.f32 %v1414, %v1724
  %v2137 = vadd.f32 %v1415, %v1765
  %v2138 = vadd.f32 %v1416, %v1806
  %v2139 = vadd.f32 %v1417, %v1847
  %v2140 = vadd.f32 %v1418, %v1888
  %v2141 = vadd.f32 %v1419, %v1929
  %v2142 = vadd.f32 %v1420, %v1970
  %v2143 = vadd.f32 %v1421, %v2011
  %v2144 = vadd.f32 %v1422, %v2052
  %v2145 = vadd.f32 %v1423, %v2093
  %v2146 = vadd.f32 %v1424, %v1645
  %v2147 = vadd.f32 %v1425, %v1686
  %v2148 = vadd.f32 %v1426, %v1727
  %v2149 = vadd.f32 %v1427, %v1768
  %v2150 = vadd.f32 %v1428, %v1809
  %v2151 = vadd.f32 %v1429, %v1850
  %v2152 = vadd.f32 %v1430, %v1891
  %v2153 = vadd.f32 %v1431, %v1932
  %v2154 = vadd.f32 %v1432, %v1973
  %v2155 = vadd.f32 %v1433, %v2014
  %v2156 = vadd.f32 %v1434, %v2055
  %v2157 = vadd.f32 %v1435, %v2096
  %v2158 = vadd.f32 %v1436, %v1648
  %v2159 = vadd.f32 %v1437, %v1689
  %v2160 = vadd.f32 %v1438, %v1730
  %v2161 = vadd.f32 %v1439, %v1771
  %v2162 = vadd.f32 %v1440, %v1812
  %v2163 = vadd.f32 %v1441, %v1853
  %v2164 = vadd.f32 %v1442, %v1894
  %v2165 = vadd.f32 %v1443, %v1935
  %v2166 = vadd.f32 %v1444, %v1976
  %v2167 = vadd.f32 %v1445, %v2017
  %v2168 = vadd.f32 %v1446, %v2058
  %v2169 = vadd.f32 %v1447, %v2099
  %v2170 = vadd.f32 %v1448, %v1651
  %v2171 = vadd.f32 %v1449, %v1692
  %v2172 = vadd.f32 %v1450, %v1733
  %v2173 = vadd.f32 %v1451, %v1774
  %v2174 = vadd.f32 %v1452, %v1815
  %v2175 = vadd.f32 %v1453, %v1856
  %v2176 = vadd.f32 %v1454, %v1897
  %v2177 = vadd.f32 %v1455, %v1938
  %v2178 = vadd.f32 %v1456, %v1979
  %v2179 = vadd.f32 %v1457, %v2020
  %v2180 = vadd.f32 %v1458, %v2061
  %v2181 = vadd.f32 %v1459, %v2102
  %v2182 = vadd.f32 %v1460, %v1654
  %v2183 = vadd.f32 %v1461, %v1695
  %v2184 = vadd.f32 %v1462, %v1736
  %v2185 = vadd.f32 %v1463, %v1777
  %v2186 = vadd.f32 %v1464, %v1818
  %v2187 = vadd.f32 %v1465, %v1859
  %v2188 = vadd.f32 %v1466, %v1900
  %v2189 = vadd.f32 %v1467, %v1941
  %v2190 = vadd.f32 %v1468, %v1982
  %v2191 = vadd.f32 %v1469, %v2023
  %v2192 = vadd.f32 %v1470, %v2064
  %v2193 = vadd.f32 %v1471, %v2105
  %v2194 = vadd.f32 %v1472, %v1657
  %v2195 = vadd.f32 %v1473, %v1698
  %v2196 = vadd.f32 %v1474, %v1739
  %v2197 = vadd.f32 %v1475, %v1780
  %v2198 = vadd.f32 %v1476, %v1821
  %v2199 = vadd.f32 %v1477, %v1862
  %v2200 = vadd.f32 %v1478, %v1903
  %v2201 = vadd.f32 %v1479, %v1944
  %v2202 = vadd.f32 %v1480, %v1985
  %v2203 = vadd.f32 %v1481, %v2026
  %v2204 = vadd.f32 %v1482, %v2067
  %v2205 = vadd.f32 %v1483, %v2108
  %s2206 = scalar_lea.vmem %s1, 192
  %v2207 = vld [vmem:[%s2206] sm:$0xff]
  %v2208 = vld [vmem:[%s2206 + $0x8] sm:$0xff]
  %v2209 = vld [vmem:[%s2206 + $0x10] sm:$0xff]
  %v2210 = vld [vmem:[%s2206 + $0x18] sm:$0xff]
  %v2211 = vld [vmem:[%s2206 + $0x20] sm:$0xff]
  %v2212 = vld [vmem:[%s2206 + $0x28] sm:$0xff]
  %v2213 = vld [vmem:[%s2206 + $0x30] sm:$0xff]
  %v2214 = vld [vmem:[%s2206 + $0x38] sm:$0xff]
  %s2215 = scalar_lea.vmem %s1, 256
  %v2216 = vld [vmem:[%s2215] sm:$0xff]
  %v2217 = vld [vmem:[%s2215 + $0x8] sm:$0xff]
  %v2218 = vld [vmem:[%s2215 + $0x10] sm:$0xff]
  %v2219 = vld [vmem:[%s2215 + $0x18] sm:$0xff]
  %v2220 = vld [vmem:[%s2215 + $0x20] sm:$0xff]
  %v2221 = vld [vmem:[%s2215 + $0x28] sm:$0xff]
  %v2222 = vld [vmem:[%s2215 + $0x30] sm:$0xff]
  %v2223 = vld [vmem:[%s2215 + $0x38] sm:$0xff]
  %2224 = vrot.lane.b32.xlu0 %v710, 109
  %v2225 = vpop.permute.xlu0 %2224
  %2226 = vrot.lane.b32.xlu0 %v711, 109
  %v2227 = vpop.permute.xlu0 %2226
  %2228 = vrot.lane.b32.xlu0 %v712, 109
  %v2229 = vpop.permute.xlu0 %2228
  %2230 = vrot.lane.b32.xlu0 %v713, 109
  %v2231 = vpop.permute.xlu0 %2230
  %2232 = vrot.lane.b32.xlu0 %v714, 109
  %v2233 = vpop.permute.xlu0 %2232
  %2234 = vrot.lane.b32.xlu0 %v715, 109
  %v2235 = vpop.permute.xlu0 %2234
  %2236 = vrot.lane.b32.xlu0 %v716, 109
  %v2237 = vpop.permute.xlu0 %2236
  %2238 = vrot.lane.b32.xlu0 %v717, 109
  %v2239 = vpop.permute.xlu0 %2238
  %2240 = vrot.lane.b32.xlu0 %v718, 109
  %v2241 = vpop.permute.xlu0 %2240
  %2242 = vrot.lane.b32.xlu0 %v719, 109
  %v2243 = vpop.permute.xlu0 %2242
  %2244 = vrot.lane.b32.xlu0 %v720, 109
  %v2245 = vpop.permute.xlu0 %2244
  %2246 = vrot.lane.b32.xlu0 %v721, 109
  %v2247 = vpop.permute.xlu0 %2246
  %2248 = vrot.lane.b32.xlu0 %v722, 109
  %v2249 = vpop.permute.xlu0 %2248
  %2250 = vrot.lane.b32.xlu0 %v723, 109
  %v2251 = vpop.permute.xlu0 %2250
  %2252 = vrot.lane.b32.xlu0 %v724, 109
  %v2253 = vpop.permute.xlu0 %2252
  %2254 = vrot.lane.b32.xlu0 %v725, 109
  %v2255 = vpop.permute.xlu0 %2254
  %2256 = vrot.lane.b32.xlu0 %v726, 109
  %v2257 = vpop.permute.xlu0 %2256
  %2258 = vrot.lane.b32.xlu0 %v727, 109
  %v2259 = vpop.permute.xlu0 %2258
  %2260 = vrot.lane.b32.xlu0 %v728, 109
  %v2261 = vpop.permute.xlu0 %2260
  %2262 = vrot.lane.b32.xlu0 %v729, 109
  %v2263 = vpop.permute.xlu0 %2262
  %2264 = vrot.lane.b32.xlu0 %v730, 109
  %v2265 = vpop.permute.xlu0 %2264
  %2266 = vrot.lane.b32.xlu0 %v731, 109
  %v2267 = vpop.permute.xlu0 %2266
  %2268 = vrot.lane.b32.xlu0 %v732, 109
  %v2269 = vpop.permute.xlu0 %2268
  %2270 = vrot.lane.b32.xlu0 %v733, 109
  %v2271 = vpop.permute.xlu0 %2270
  %2272 = vrot.lane.b32.xlu0 %v734, 109
  %v2273 = vpop.permute.xlu0 %2272
  %2274 = vrot.lane.b32.xlu0 %v735, 109
  %v2275 = vpop.permute.xlu0 %2274
  %vm2276 = vcmask 891904
  %v2277 = vsel %vm2276, %v2225, %v2227
  %v2278 = vsel %vm2276, %v2227, %v2229
  %v2279 = vsel %vm2276, %v2229, %v2231
  %v2280 = vsel %vm2276, %v2231, %v2233
  %v2281 = vsel %vm2276, %v2233, %v2235
  %v2282 = vsel %vm2276, %v2235, %v2237
  %v2283 = vsel %vm2276, %v2237, %v2239
  %v2284 = vsel %vm2276, %v2239, %v2241
  %v2285 = vsel %vm2276, %v2241, %v2243
  %v2286 = vsel %vm2276, %v2243, %v2245
  %v2287 = vsel %vm2276, %v2245, %v2247
  %v2288 = vsel %vm2276, %v2247, %v2249
  %v2289 = vsel %vm2276, %v2251, %v2253
  %v2290 = vsel %vm2276, %v2253, %v2255
  %v2291 = vsel %vm2276, %v2255, %v2257
  %v2292 = vsel %vm2276, %v2257, %v2259
  %v2293 = vsel %vm2276, %v2259, %v2261
  %v2294 = vsel %vm2276, %v2261, %v2263
  %v2295 = vsel %vm2276, %v2263, %v2265
  %v2296 = vsel %vm2276, %v2265, %v2267
  %v2297 = vsel %vm2276, %v2267, %v2269
  %v2298 = vsel %vm2276, %v2269, %v2271
  %v2299 = vsel %vm2276, %v2271, %v2273
  %v2300 = vsel %vm2276, %v2273, %v2275
  %v2326 = vsel %vm97, %v2216, 0
  %v2329 = vsel %vm97, %v2217, 0
  %v2332 = vsel %vm97, %v2218, 0
  %v2335 = vsel %vm97, %v2219, 0
  %v2338 = vsel %vm97, %v2220, 0
  %v2341 = vsel %vm97, %v2221, 0
  %v2344 = vsel %vm97, %v2222, 0
  %v2347 = vsel %vm97, %v2223, 0
  %2349 = vmatpush.msra.mxu0 0.0
  %2350 = vmatpush.msra.mxu0 0.0
  %2351 = vmatpush.msra.mxu0 0.0
  %2352 = vmatpush.msra.mxu0 0.0
  %2353 = vmatpush.msra.mxu0 0.0
  %2354 = vmatpush.msra.mxu0 0.0
  %2355 = vmatpush.msra.mxu0 0.0
  %2356 = vmatpush.msra.mxu0 0.0
  %2357 = vmatpush.msra.mxu0 0.0
  %2358 = vmatpush.msra.mxu0 0.0
  %2359 = vmatpush.msra.mxu0 0.0
  %2360 = vmatpush.msra.mxu0 0.0
  %2361 = vmatpush.msra.mxu0 0.0
  %2362 = vmatpush.msra.mxu0 0.0
  %2363 = vmatpush.msra.mxu0 %v2289
  %2364 = vmatpush.msra.mxu0 %v2277
  %2365 = vmatmul.f32.gmra.mxu0 %v2326
  %v2366 = vpop.f32.mrf.mxu0
  %v2367 = vadd.f32 0.0, %v2366
  %2368 = vmatmul.f32.gmra.mxu0 %v2329
  %v2369 = vpop.f32.mrf.mxu0
  %v2370 = vadd.f32 0.0, %v2369
  %2371 = vmatmul.f32.gmra.mxu0 %v2332
  %v2372 = vpop.f32.mrf.mxu0
  %v2373 = vadd.f32 0.0, %v2372
  %2374 = vmatmul.f32.gmra.mxu0 %v2335
  %v2375 = vpop.f32.mrf.mxu0
  %v2376 = vadd.f32 0.0, %v2375
  %2377 = vmatmul.f32.gmra.mxu0 %v2338
  %v2378 = vpop.f32.mrf.mxu0
  %v2379 = vadd.f32 0.0, %v2378
  %2380 = vmatmul.f32.gmra.mxu0 %v2341
  %v2381 = vpop.f32.mrf.mxu0
  %v2382 = vadd.f32 0.0, %v2381
  %2383 = vmatmul.f32.gmra.mxu0 %v2344
  %v2384 = vpop.f32.mrf.mxu0
  %v2385 = vadd.f32 0.0, %v2384
  %2386 = vmatmul.f32.gmra.mxu0 %v2347
  %v2387 = vpop.f32.mrf.mxu0
  %v2388 = vadd.f32 0.0, %v2387
  %2389 = vdwg.mxu0
  %2390 = vmatpush.msra.mxu0 0.0
  %2391 = vmatpush.msra.mxu0 0.0
  %2392 = vmatpush.msra.mxu0 0.0
  %2393 = vmatpush.msra.mxu0 0.0
  %2394 = vmatpush.msra.mxu0 0.0
  %2395 = vmatpush.msra.mxu0 0.0
  %2396 = vmatpush.msra.mxu0 0.0
  %2397 = vmatpush.msra.mxu0 0.0
  %2398 = vmatpush.msra.mxu0 0.0
  %2399 = vmatpush.msra.mxu0 0.0
  %2400 = vmatpush.msra.mxu0 0.0
  %2401 = vmatpush.msra.mxu0 0.0
  %2402 = vmatpush.msra.mxu0 0.0
  %2403 = vmatpush.msra.mxu0 0.0
  %2404 = vmatpush.msra.mxu0 %v2290
  %2405 = vmatpush.msra.mxu0 %v2278
  %2406 = vmatmul.f32.gmra.mxu0 %v2326
  %v2407 = vpop.f32.mrf.mxu0
  %v2408 = vadd.f32 0.0, %v2407
  %2409 = vmatmul.f32.gmra.mxu0 %v2329
  %v2410 = vpop.f32.mrf.mxu0
  %v2411 = vadd.f32 0.0, %v2410
  %2412 = vmatmul.f32.gmra.mxu0 %v2332
  %v2413 = vpop.f32.mrf.mxu0
  %v2414 = vadd.f32 0.0, %v2413
  %2415 = vmatmul.f32.gmra.mxu0 %v2335
  %v2416 = vpop.f32.mrf.mxu0
  %v2417 = vadd.f32 0.0, %v2416
  %2418 = vmatmul.f32.gmra.mxu0 %v2338
  %v2419 = vpop.f32.mrf.mxu0
  %v2420 = vadd.f32 0.0, %v2419
  %2421 = vmatmul.f32.gmra.mxu0 %v2341
  %v2422 = vpop.f32.mrf.mxu0
  %v2423 = vadd.f32 0.0, %v2422
  %2424 = vmatmul.f32.gmra.mxu0 %v2344
  %v2425 = vpop.f32.mrf.mxu0
  %v2426 = vadd.f32 0.0, %v2425
  %2427 = vmatmul.f32.gmra.mxu0 %v2347
  %v2428 = vpop.f32.mrf.mxu0
  %v2429 = vadd.f32 0.0, %v2428
  %2430 = vdwg.mxu0
  %2431 = vmatpush.msra.mxu0 0.0
  %2432 = vmatpush.msra.mxu0 0.0
  %2433 = vmatpush.msra.mxu0 0.0
  %2434 = vmatpush.msra.mxu0 0.0
  %2435 = vmatpush.msra.mxu0 0.0
  %2436 = vmatpush.msra.mxu0 0.0
  %2437 = vmatpush.msra.mxu0 0.0
  %2438 = vmatpush.msra.mxu0 0.0
  %2439 = vmatpush.msra.mxu0 0.0
  %2440 = vmatpush.msra.mxu0 0.0
  %2441 = vmatpush.msra.mxu0 0.0
  %2442 = vmatpush.msra.mxu0 0.0
  %2443 = vmatpush.msra.mxu0 0.0
  %2444 = vmatpush.msra.mxu0 0.0
  %2445 = vmatpush.msra.mxu0 %v2291
  %2446 = vmatpush.msra.mxu0 %v2279
  %2447 = vmatmul.f32.gmra.mxu0 %v2326
  %v2448 = vpop.f32.mrf.mxu0
  %v2449 = vadd.f32 0.0, %v2448
  %2450 = vmatmul.f32.gmra.mxu0 %v2329
  %v2451 = vpop.f32.mrf.mxu0
  %v2452 = vadd.f32 0.0, %v2451
  %2453 = vmatmul.f32.gmra.mxu0 %v2332
  %v2454 = vpop.f32.mrf.mxu0
  %v2455 = vadd.f32 0.0, %v2454
  %2456 = vmatmul.f32.gmra.mxu0 %v2335
  %v2457 = vpop.f32.mrf.mxu0
  %v2458 = vadd.f32 0.0, %v2457
  %2459 = vmatmul.f32.gmra.mxu0 %v2338
  %v2460 = vpop.f32.mrf.mxu0
  %v2461 = vadd.f32 0.0, %v2460
  %2462 = vmatmul.f32.gmra.mxu0 %v2341
  %v2463 = vpop.f32.mrf.mxu0
  %v2464 = vadd.f32 0.0, %v2463
  %2465 = vmatmul.f32.gmra.mxu0 %v2344
  %v2466 = vpop.f32.mrf.mxu0
  %v2467 = vadd.f32 0.0, %v2466
  %2468 = vmatmul.f32.gmra.mxu0 %v2347
  %v2469 = vpop.f32.mrf.mxu0
  %v2470 = vadd.f32 0.0, %v2469
  %2471 = vdwg.mxu0
  %2472 = vmatpush.msra.mxu0 0.0
  %2473 = vmatpush.msra.mxu0 0.0
  %2474 = vmatpush.msra.mxu0 0.0
  %2475 = vmatpush.msra.mxu0 0.0
  %2476 = vmatpush.msra.mxu0 0.0
  %2477 = vmatpush.msra.mxu0 0.0
  %2478 = vmatpush.msra.mxu0 0.0
  %2479 = vmatpush.msra.mxu0 0.0
  %2480 = vmatpush.msra.mxu0 0.0
  %2481 = vmatpush.msra.mxu0 0.0
  %2482 = vmatpush.msra.mxu0 0.0
  %2483 = vmatpush.msra.mxu0 0.0
  %2484 = vmatpush.msra.mxu0 0.0
  %2485 = vmatpush.msra.mxu0 0.0
  %2486 = vmatpush.msra.mxu0 %v2292
  %2487 = vmatpush.msra.mxu0 %v2280
  %2488 = vmatmul.f32.gmra.mxu0 %v2326
  %v2489 = vpop.f32.mrf.mxu0
  %v2490 = vadd.f32 0.0, %v2489
  %2491 = vmatmul.f32.gmra.mxu0 %v2329
  %v2492 = vpop.f32.mrf.mxu0
  %v2493 = vadd.f32 0.0, %v2492
  %2494 = vmatmul.f32.gmra.mxu0 %v2332
  %v2495 = vpop.f32.mrf.mxu0
  %v2496 = vadd.f32 0.0, %v2495
  %2497 = vmatmul.f32.gmra.mxu0 %v2335
  %v2498 = vpop.f32.mrf.mxu0
  %v2499 = vadd.f32 0.0, %v2498
  %2500 = vmatmul.f32.gmra.mxu0 %v2338
  %v2501 = vpop.f32.mrf.mxu0
  %v2502 = vadd.f32 0.0, %v2501
  %2503 = vmatmul.f32.gmra.mxu0 %v2341
  %v2504 = vpop.f32.mrf.mxu0
  %v2505 = vadd.f32 0.0, %v2504
  %2506 = vmatmul.f32.gmra.mxu0 %v2344
  %v2507 = vpop.f32.mrf.mxu0
  %v2508 = vadd.f32 0.0, %v2507
  %2509 = vmatmul.f32.gmra.mxu0 %v2347
  %v2510 = vpop.f32.mrf.mxu0
  %v2511 = vadd.f32 0.0, %v2510
  %2512 = vdwg.mxu0
  %2513 = vmatpush.msra.mxu0 0.0
  %2514 = vmatpush.msra.mxu0 0.0
  %2515 = vmatpush.msra.mxu0 0.0
  %2516 = vmatpush.msra.mxu0 0.0
  %2517 = vmatpush.msra.mxu0 0.0
  %2518 = vmatpush.msra.mxu0 0.0
  %2519 = vmatpush.msra.mxu0 0.0
  %2520 = vmatpush.msra.mxu0 0.0
  %2521 = vmatpush.msra.mxu0 0.0
  %2522 = vmatpush.msra.mxu0 0.0
  %2523 = vmatpush.msra.mxu0 0.0
  %2524 = vmatpush.msra.mxu0 0.0
  %2525 = vmatpush.msra.mxu0 0.0
  %2526 = vmatpush.msra.mxu0 0.0
  %2527 = vmatpush.msra.mxu0 %v2293
  %2528 = vmatpush.msra.mxu0 %v2281
  %2529 = vmatmul.f32.gmra.mxu0 %v2326
  %v2530 = vpop.f32.mrf.mxu0
  %v2531 = vadd.f32 0.0, %v2530
  %2532 = vmatmul.f32.gmra.mxu0 %v2329
  %v2533 = vpop.f32.mrf.mxu0
  %v2534 = vadd.f32 0.0, %v2533
  %2535 = vmatmul.f32.gmra.mxu0 %v2332
  %v2536 = vpop.f32.mrf.mxu0
  %v2537 = vadd.f32 0.0, %v2536
  %2538 = vmatmul.f32.gmra.mxu0 %v2335
  %v2539 = vpop.f32.mrf.mxu0
  %v2540 = vadd.f32 0.0, %v2539
  %2541 = vmatmul.f32.gmra.mxu0 %v2338
  %v2542 = vpop.f32.mrf.mxu0
  %v2543 = vadd.f32 0.0, %v2542
  %2544 = vmatmul.f32.gmra.mxu0 %v2341
  %v2545 = vpop.f32.mrf.mxu0
  %v2546 = vadd.f32 0.0, %v2545
  %2547 = vmatmul.f32.gmra.mxu0 %v2344
  %v2548 = vpop.f32.mrf.mxu0
  %v2549 = vadd.f32 0.0, %v2548
  %2550 = vmatmul.f32.gmra.mxu0 %v2347
  %v2551 = vpop.f32.mrf.mxu0
  %v2552 = vadd.f32 0.0, %v2551
  %2553 = vdwg.mxu0
  %2554 = vmatpush.msra.mxu0 0.0
  %2555 = vmatpush.msra.mxu0 0.0
  %2556 = vmatpush.msra.mxu0 0.0
  %2557 = vmatpush.msra.mxu0 0.0
  %2558 = vmatpush.msra.mxu0 0.0
  %2559 = vmatpush.msra.mxu0 0.0
  %2560 = vmatpush.msra.mxu0 0.0
  %2561 = vmatpush.msra.mxu0 0.0
  %2562 = vmatpush.msra.mxu0 0.0
  %2563 = vmatpush.msra.mxu0 0.0
  %2564 = vmatpush.msra.mxu0 0.0
  %2565 = vmatpush.msra.mxu0 0.0
  %2566 = vmatpush.msra.mxu0 0.0
  %2567 = vmatpush.msra.mxu0 0.0
  %2568 = vmatpush.msra.mxu0 %v2294
  %2569 = vmatpush.msra.mxu0 %v2282
  %2570 = vmatmul.f32.gmra.mxu0 %v2326
  %v2571 = vpop.f32.mrf.mxu0
  %v2572 = vadd.f32 0.0, %v2571
  %2573 = vmatmul.f32.gmra.mxu0 %v2329
  %v2574 = vpop.f32.mrf.mxu0
  %v2575 = vadd.f32 0.0, %v2574
  %2576 = vmatmul.f32.gmra.mxu0 %v2332
  %v2577 = vpop.f32.mrf.mxu0
  %v2578 = vadd.f32 0.0, %v2577
  %2579 = vmatmul.f32.gmra.mxu0 %v2335
  %v2580 = vpop.f32.mrf.mxu0
  %v2581 = vadd.f32 0.0, %v2580
  %2582 = vmatmul.f32.gmra.mxu0 %v2338
  %v2583 = vpop.f32.mrf.mxu0
  %v2584 = vadd.f32 0.0, %v2583
  %2585 = vmatmul.f32.gmra.mxu0 %v2341
  %v2586 = vpop.f32.mrf.mxu0
  %v2587 = vadd.f32 0.0, %v2586
  %2588 = vmatmul.f32.gmra.mxu0 %v2344
  %v2589 = vpop.f32.mrf.mxu0
  %v2590 = vadd.f32 0.0, %v2589
  %2591 = vmatmul.f32.gmra.mxu0 %v2347
  %v2592 = vpop.f32.mrf.mxu0
  %v2593 = vadd.f32 0.0, %v2592
  %2594 = vdwg.mxu0
  %2595 = vmatpush.msra.mxu0 0.0
  %2596 = vmatpush.msra.mxu0 0.0
  %2597 = vmatpush.msra.mxu0 0.0
  %2598 = vmatpush.msra.mxu0 0.0
  %2599 = vmatpush.msra.mxu0 0.0
  %2600 = vmatpush.msra.mxu0 0.0
  %2601 = vmatpush.msra.mxu0 0.0
  %2602 = vmatpush.msra.mxu0 0.0
  %2603 = vmatpush.msra.mxu0 0.0
  %2604 = vmatpush.msra.mxu0 0.0
  %2605 = vmatpush.msra.mxu0 0.0
  %2606 = vmatpush.msra.mxu0 0.0
  %2607 = vmatpush.msra.mxu0 0.0
  %2608 = vmatpush.msra.mxu0 0.0
  %2609 = vmatpush.msra.mxu0 %v2295
  %2610 = vmatpush.msra.mxu0 %v2283
  %2611 = vmatmul.f32.gmra.mxu0 %v2326
  %v2612 = vpop.f32.mrf.mxu0
  %v2613 = vadd.f32 0.0, %v2612
  %2614 = vmatmul.f32.gmra.mxu0 %v2329
  %v2615 = vpop.f32.mrf.mxu0
  %v2616 = vadd.f32 0.0, %v2615
  %2617 = vmatmul.f32.gmra.mxu0 %v2332
  %v2618 = vpop.f32.mrf.mxu0
  %v2619 = vadd.f32 0.0, %v2618
  %2620 = vmatmul.f32.gmra.mxu0 %v2335
  %v2621 = vpop.f32.mrf.mxu0
  %v2622 = vadd.f32 0.0, %v2621
  %2623 = vmatmul.f32.gmra.mxu0 %v2338
  %v2624 = vpop.f32.mrf.mxu0
  %v2625 = vadd.f32 0.0, %v2624
  %2626 = vmatmul.f32.gmra.mxu0 %v2341
  %v2627 = vpop.f32.mrf.mxu0
  %v2628 = vadd.f32 0.0, %v2627
  %2629 = vmatmul.f32.gmra.mxu0 %v2344
  %v2630 = vpop.f32.mrf.mxu0
  %v2631 = vadd.f32 0.0, %v2630
  %2632 = vmatmul.f32.gmra.mxu0 %v2347
  %v2633 = vpop.f32.mrf.mxu0
  %v2634 = vadd.f32 0.0, %v2633
  %2635 = vdwg.mxu0
  %2636 = vmatpush.msra.mxu0 0.0
  %2637 = vmatpush.msra.mxu0 0.0
  %2638 = vmatpush.msra.mxu0 0.0
  %2639 = vmatpush.msra.mxu0 0.0
  %2640 = vmatpush.msra.mxu0 0.0
  %2641 = vmatpush.msra.mxu0 0.0
  %2642 = vmatpush.msra.mxu0 0.0
  %2643 = vmatpush.msra.mxu0 0.0
  %2644 = vmatpush.msra.mxu0 0.0
  %2645 = vmatpush.msra.mxu0 0.0
  %2646 = vmatpush.msra.mxu0 0.0
  %2647 = vmatpush.msra.mxu0 0.0
  %2648 = vmatpush.msra.mxu0 0.0
  %2649 = vmatpush.msra.mxu0 0.0
  %2650 = vmatpush.msra.mxu0 %v2296
  %2651 = vmatpush.msra.mxu0 %v2284
  %2652 = vmatmul.f32.gmra.mxu0 %v2326
  %v2653 = vpop.f32.mrf.mxu0
  %v2654 = vadd.f32 0.0, %v2653
  %2655 = vmatmul.f32.gmra.mxu0 %v2329
  %v2656 = vpop.f32.mrf.mxu0
  %v2657 = vadd.f32 0.0, %v2656
  %2658 = vmatmul.f32.gmra.mxu0 %v2332
  %v2659 = vpop.f32.mrf.mxu0
  %v2660 = vadd.f32 0.0, %v2659
  %2661 = vmatmul.f32.gmra.mxu0 %v2335
  %v2662 = vpop.f32.mrf.mxu0
  %v2663 = vadd.f32 0.0, %v2662
  %2664 = vmatmul.f32.gmra.mxu0 %v2338
  %v2665 = vpop.f32.mrf.mxu0
  %v2666 = vadd.f32 0.0, %v2665
  %2667 = vmatmul.f32.gmra.mxu0 %v2341
  %v2668 = vpop.f32.mrf.mxu0
  %v2669 = vadd.f32 0.0, %v2668
  %2670 = vmatmul.f32.gmra.mxu0 %v2344
  %v2671 = vpop.f32.mrf.mxu0
  %v2672 = vadd.f32 0.0, %v2671
  %2673 = vmatmul.f32.gmra.mxu0 %v2347
  %v2674 = vpop.f32.mrf.mxu0
  %v2675 = vadd.f32 0.0, %v2674
  %2676 = vdwg.mxu0
  %2677 = vmatpush.msra.mxu0 0.0
  %2678 = vmatpush.msra.mxu0 0.0
  %2679 = vmatpush.msra.mxu0 0.0
  %2680 = vmatpush.msra.mxu0 0.0
  %2681 = vmatpush.msra.mxu0 0.0
  %2682 = vmatpush.msra.mxu0 0.0
  %2683 = vmatpush.msra.mxu0 0.0
  %2684 = vmatpush.msra.mxu0 0.0
  %2685 = vmatpush.msra.mxu0 0.0
  %2686 = vmatpush.msra.mxu0 0.0
  %2687 = vmatpush.msra.mxu0 0.0
  %2688 = vmatpush.msra.mxu0 0.0
  %2689 = vmatpush.msra.mxu0 0.0
  %2690 = vmatpush.msra.mxu0 0.0
  %2691 = vmatpush.msra.mxu0 %v2297
  %2692 = vmatpush.msra.mxu0 %v2285
  %2693 = vmatmul.f32.gmra.mxu0 %v2326
  %v2694 = vpop.f32.mrf.mxu0
  %v2695 = vadd.f32 0.0, %v2694
  %2696 = vmatmul.f32.gmra.mxu0 %v2329
  %v2697 = vpop.f32.mrf.mxu0
  %v2698 = vadd.f32 0.0, %v2697
  %2699 = vmatmul.f32.gmra.mxu0 %v2332
  %v2700 = vpop.f32.mrf.mxu0
  %v2701 = vadd.f32 0.0, %v2700
  %2702 = vmatmul.f32.gmra.mxu0 %v2335
  %v2703 = vpop.f32.mrf.mxu0
  %v2704 = vadd.f32 0.0, %v2703
  %2705 = vmatmul.f32.gmra.mxu0 %v2338
  %v2706 = vpop.f32.mrf.mxu0
  %v2707 = vadd.f32 0.0, %v2706
  %2708 = vmatmul.f32.gmra.mxu0 %v2341
  %v2709 = vpop.f32.mrf.mxu0
  %v2710 = vadd.f32 0.0, %v2709
  %2711 = vmatmul.f32.gmra.mxu0 %v2344
  %v2712 = vpop.f32.mrf.mxu0
  %v2713 = vadd.f32 0.0, %v2712
  %2714 = vmatmul.f32.gmra.mxu0 %v2347
  %v2715 = vpop.f32.mrf.mxu0
  %v2716 = vadd.f32 0.0, %v2715
  %2717 = vdwg.mxu0
  %2718 = vmatpush.msra.mxu0 0.0
  %2719 = vmatpush.msra.mxu0 0.0
  %2720 = vmatpush.msra.mxu0 0.0
  %2721 = vmatpush.msra.mxu0 0.0
  %2722 = vmatpush.msra.mxu0 0.0
  %2723 = vmatpush.msra.mxu0 0.0
  %2724 = vmatpush.msra.mxu0 0.0
  %2725 = vmatpush.msra.mxu0 0.0
  %2726 = vmatpush.msra.mxu0 0.0
  %2727 = vmatpush.msra.mxu0 0.0
  %2728 = vmatpush.msra.mxu0 0.0
  %2729 = vmatpush.msra.mxu0 0.0
  %2730 = vmatpush.msra.mxu0 0.0
  %2731 = vmatpush.msra.mxu0 0.0
  %2732 = vmatpush.msra.mxu0 %v2298
  %2733 = vmatpush.msra.mxu0 %v2286
  %2734 = vmatmul.f32.gmra.mxu0 %v2326
  %v2735 = vpop.f32.mrf.mxu0
  %v2736 = vadd.f32 0.0, %v2735
  %2737 = vmatmul.f32.gmra.mxu0 %v2329
  %v2738 = vpop.f32.mrf.mxu0
  %v2739 = vadd.f32 0.0, %v2738
  %2740 = vmatmul.f32.gmra.mxu0 %v2332
  %v2741 = vpop.f32.mrf.mxu0
  %v2742 = vadd.f32 0.0, %v2741
  %2743 = vmatmul.f32.gmra.mxu0 %v2335
  %v2744 = vpop.f32.mrf.mxu0
  %v2745 = vadd.f32 0.0, %v2744
  %2746 = vmatmul.f32.gmra.mxu0 %v2338
  %v2747 = vpop.f32.mrf.mxu0
  %v2748 = vadd.f32 0.0, %v2747
  %2749 = vmatmul.f32.gmra.mxu0 %v2341
  %v2750 = vpop.f32.mrf.mxu0
  %v2751 = vadd.f32 0.0, %v2750
  %2752 = vmatmul.f32.gmra.mxu0 %v2344
  %v2753 = vpop.f32.mrf.mxu0
  %v2754 = vadd.f32 0.0, %v2753
  %2755 = vmatmul.f32.gmra.mxu0 %v2347
  %v2756 = vpop.f32.mrf.mxu0
  %v2757 = vadd.f32 0.0, %v2756
  %2758 = vdwg.mxu0
  %2759 = vmatpush.msra.mxu0 0.0
  %2760 = vmatpush.msra.mxu0 0.0
  %2761 = vmatpush.msra.mxu0 0.0
  %2762 = vmatpush.msra.mxu0 0.0
  %2763 = vmatpush.msra.mxu0 0.0
  %2764 = vmatpush.msra.mxu0 0.0
  %2765 = vmatpush.msra.mxu0 0.0
  %2766 = vmatpush.msra.mxu0 0.0
  %2767 = vmatpush.msra.mxu0 0.0
  %2768 = vmatpush.msra.mxu0 0.0
  %2769 = vmatpush.msra.mxu0 0.0
  %2770 = vmatpush.msra.mxu0 0.0
  %2771 = vmatpush.msra.mxu0 0.0
  %2772 = vmatpush.msra.mxu0 0.0
  %2773 = vmatpush.msra.mxu0 %v2299
  %2774 = vmatpush.msra.mxu0 %v2287
  %2775 = vmatmul.f32.gmra.mxu0 %v2326
  %v2776 = vpop.f32.mrf.mxu0
  %v2777 = vadd.f32 0.0, %v2776
  %2778 = vmatmul.f32.gmra.mxu0 %v2329
  %v2779 = vpop.f32.mrf.mxu0
  %v2780 = vadd.f32 0.0, %v2779
  %2781 = vmatmul.f32.gmra.mxu0 %v2332
  %v2782 = vpop.f32.mrf.mxu0
  %v2783 = vadd.f32 0.0, %v2782
  %2784 = vmatmul.f32.gmra.mxu0 %v2335
  %v2785 = vpop.f32.mrf.mxu0
  %v2786 = vadd.f32 0.0, %v2785
  %2787 = vmatmul.f32.gmra.mxu0 %v2338
  %v2788 = vpop.f32.mrf.mxu0
  %v2789 = vadd.f32 0.0, %v2788
  %2790 = vmatmul.f32.gmra.mxu0 %v2341
  %v2791 = vpop.f32.mrf.mxu0
  %v2792 = vadd.f32 0.0, %v2791
  %2793 = vmatmul.f32.gmra.mxu0 %v2344
  %v2794 = vpop.f32.mrf.mxu0
  %v2795 = vadd.f32 0.0, %v2794
  %2796 = vmatmul.f32.gmra.mxu0 %v2347
  %v2797 = vpop.f32.mrf.mxu0
  %v2798 = vadd.f32 0.0, %v2797
  %2799 = vdwg.mxu0
  %2800 = vmatpush.msra.mxu0 0.0
  %2801 = vmatpush.msra.mxu0 0.0
  %2802 = vmatpush.msra.mxu0 0.0
  %2803 = vmatpush.msra.mxu0 0.0
  %2804 = vmatpush.msra.mxu0 0.0
  %2805 = vmatpush.msra.mxu0 0.0
  %2806 = vmatpush.msra.mxu0 0.0
  %2807 = vmatpush.msra.mxu0 0.0
  %2808 = vmatpush.msra.mxu0 0.0
  %2809 = vmatpush.msra.mxu0 0.0
  %2810 = vmatpush.msra.mxu0 0.0
  %2811 = vmatpush.msra.mxu0 0.0
  %2812 = vmatpush.msra.mxu0 0.0
  %2813 = vmatpush.msra.mxu0 0.0
  %2814 = vmatpush.msra.mxu0 %v2300
  %2815 = vmatpush.msra.mxu0 %v2288
  %2816 = vmatmul.f32.gmra.mxu0 %v2326
  %v2817 = vpop.f32.mrf.mxu0
  %v2818 = vadd.f32 0.0, %v2817
  %2819 = vmatmul.f32.gmra.mxu0 %v2329
  %v2820 = vpop.f32.mrf.mxu0
  %v2821 = vadd.f32 0.0, %v2820
  %2822 = vmatmul.f32.gmra.mxu0 %v2332
  %v2823 = vpop.f32.mrf.mxu0
  %v2824 = vadd.f32 0.0, %v2823
  %2825 = vmatmul.f32.gmra.mxu0 %v2335
  %v2826 = vpop.f32.mrf.mxu0
  %v2827 = vadd.f32 0.0, %v2826
  %2828 = vmatmul.f32.gmra.mxu0 %v2338
  %v2829 = vpop.f32.mrf.mxu0
  %v2830 = vadd.f32 0.0, %v2829
  %2831 = vmatmul.f32.gmra.mxu0 %v2341
  %v2832 = vpop.f32.mrf.mxu0
  %v2833 = vadd.f32 0.0, %v2832
  %2834 = vmatmul.f32.gmra.mxu0 %v2344
  %v2835 = vpop.f32.mrf.mxu0
  %v2836 = vadd.f32 0.0, %v2835
  %2837 = vmatmul.f32.gmra.mxu0 %v2347
  %v2838 = vpop.f32.mrf.mxu0
  %v2839 = vadd.f32 0.0, %v2838
  %2840 = vdwg.mxu0
  %2841 = vrot.lane.b32.xlu0 %v710, 110
  %v2842 = vpop.permute.xlu0 %2841
  %2843 = vrot.lane.b32.xlu0 %v711, 110
  %v2844 = vpop.permute.xlu0 %2843
  %2845 = vrot.lane.b32.xlu0 %v712, 110
  %v2846 = vpop.permute.xlu0 %2845
  %2847 = vrot.lane.b32.xlu0 %v713, 110
  %v2848 = vpop.permute.xlu0 %2847
  %2849 = vrot.lane.b32.xlu0 %v714, 110
  %v2850 = vpop.permute.xlu0 %2849
  %2851 = vrot.lane.b32.xlu0 %v715, 110
  %v2852 = vpop.permute.xlu0 %2851
  %2853 = vrot.lane.b32.xlu0 %v716, 110
  %v2854 = vpop.permute.xlu0 %2853
  %2855 = vrot.lane.b32.xlu0 %v717, 110
  %v2856 = vpop.permute.xlu0 %2855
  %2857 = vrot.lane.b32.xlu0 %v718, 110
  %v2858 = vpop.permute.xlu0 %2857
  %2859 = vrot.lane.b32.xlu0 %v719, 110
  %v2860 = vpop.permute.xlu0 %2859
  %2861 = vrot.lane.b32.xlu0 %v720, 110
  %v2862 = vpop.permute.xlu0 %2861
  %2863 = vrot.lane.b32.xlu0 %v721, 110
  %v2864 = vpop.permute.xlu0 %2863
  %2865 = vrot.lane.b32.xlu0 %v722, 110
  %v2866 = vpop.permute.xlu0 %2865
  %2867 = vrot.lane.b32.xlu0 %v723, 110
  %v2868 = vpop.permute.xlu0 %2867
  %2869 = vrot.lane.b32.xlu0 %v724, 110
  %v2870 = vpop.permute.xlu0 %2869
  %2871 = vrot.lane.b32.xlu0 %v725, 110
  %v2872 = vpop.permute.xlu0 %2871
  %2873 = vrot.lane.b32.xlu0 %v726, 110
  %v2874 = vpop.permute.xlu0 %2873
  %2875 = vrot.lane.b32.xlu0 %v727, 110
  %v2876 = vpop.permute.xlu0 %2875
  %2877 = vrot.lane.b32.xlu0 %v728, 110
  %v2878 = vpop.permute.xlu0 %2877
  %2879 = vrot.lane.b32.xlu0 %v729, 110
  %v2880 = vpop.permute.xlu0 %2879
  %2881 = vrot.lane.b32.xlu0 %v730, 110
  %v2882 = vpop.permute.xlu0 %2881
  %2883 = vrot.lane.b32.xlu0 %v731, 110
  %v2884 = vpop.permute.xlu0 %2883
  %2885 = vrot.lane.b32.xlu0 %v732, 110
  %v2886 = vpop.permute.xlu0 %2885
  %2887 = vrot.lane.b32.xlu0 %v733, 110
  %v2888 = vpop.permute.xlu0 %2887
  %2889 = vrot.lane.b32.xlu0 %v734, 110
  %v2890 = vpop.permute.xlu0 %2889
  %2891 = vrot.lane.b32.xlu0 %v735, 110
  %v2892 = vpop.permute.xlu0 %2891
  %vm2893 = vcmask 900096
  %v2894 = vsel %vm2893, %v2842, %v2844
  %v2895 = vsel %vm2893, %v2844, %v2846
  %v2896 = vsel %vm2893, %v2846, %v2848
  %v2897 = vsel %vm2893, %v2848, %v2850
  %v2898 = vsel %vm2893, %v2850, %v2852
  %v2899 = vsel %vm2893, %v2852, %v2854
  %v2900 = vsel %vm2893, %v2854, %v2856
  %v2901 = vsel %vm2893, %v2856, %v2858
  %v2902 = vsel %vm2893, %v2858, %v2860
  %v2903 = vsel %vm2893, %v2860, %v2862
  %v2904 = vsel %vm2893, %v2862, %v2864
  %v2905 = vsel %vm2893, %v2864, %v2866
  %v2906 = vsel %vm2893, %v2868, %v2870
  %v2907 = vsel %vm2893, %v2870, %v2872
  %v2908 = vsel %vm2893, %v2872, %v2874
  %v2909 = vsel %vm2893, %v2874, %v2876
  %v2910 = vsel %vm2893, %v2876, %v2878
  %v2911 = vsel %vm2893, %v2878, %v2880
  %v2912 = vsel %vm2893, %v2880, %v2882
  %v2913 = vsel %vm2893, %v2882, %v2884
  %v2914 = vsel %vm2893, %v2884, %v2886
  %v2915 = vsel %vm2893, %v2886, %v2888
  %v2916 = vsel %vm2893, %v2888, %v2890
  %v2917 = vsel %vm2893, %v2890, %v2892
  %v2943 = vsel %vm97, %v2207, 0
  %v2946 = vsel %vm97, %v2208, 0
  %v2949 = vsel %vm97, %v2209, 0
  %v2952 = vsel %vm97, %v2210, 0
  %v2955 = vsel %vm97, %v2211, 0
  %v2958 = vsel %vm97, %v2212, 0
  %v2961 = vsel %vm97, %v2213, 0
  %v2964 = vsel %vm97, %v2214, 0
  %2966 = vmatpush.msra.mxu0 0.0
  %2967 = vmatpush.msra.mxu0 0.0
  %2968 = vmatpush.msra.mxu0 0.0
  %2969 = vmatpush.msra.mxu0 0.0
  %2970 = vmatpush.msra.mxu0 0.0
  %2971 = vmatpush.msra.mxu0 0.0
  %2972 = vmatpush.msra.mxu0 0.0
  %2973 = vmatpush.msra.mxu0 0.0
  %2974 = vmatpush.msra.mxu0 0.0
  %2975 = vmatpush.msra.mxu0 0.0
  %2976 = vmatpush.msra.mxu0 0.0
  %2977 = vmatpush.msra.mxu0 0.0
  %2978 = vmatpush.msra.mxu0 0.0
  %2979 = vmatpush.msra.mxu0 0.0
  %2980 = vmatpush.msra.mxu0 %v2906
  %2981 = vmatpush.msra.mxu0 %v2894
  %2982 = vmatmul.f32.gmra.mxu0 %v2943
  %v2983 = vpop.f32.mrf.mxu0
  %v2984 = vadd.f32 %v2367, %v2983
  %2985 = vmatmul.f32.gmra.mxu0 %v2946
  %v2986 = vpop.f32.mrf.mxu0
  %v2987 = vadd.f32 %v2370, %v2986
  %2988 = vmatmul.f32.gmra.mxu0 %v2949
  %v2989 = vpop.f32.mrf.mxu0
  %v2990 = vadd.f32 %v2373, %v2989
  %2991 = vmatmul.f32.gmra.mxu0 %v2952
  %v2992 = vpop.f32.mrf.mxu0
  %v2993 = vadd.f32 %v2376, %v2992
  %2994 = vmatmul.f32.gmra.mxu0 %v2955
  %v2995 = vpop.f32.mrf.mxu0
  %v2996 = vadd.f32 %v2379, %v2995
  %2997 = vmatmul.f32.gmra.mxu0 %v2958
  %v2998 = vpop.f32.mrf.mxu0
  %v2999 = vadd.f32 %v2382, %v2998
  %3000 = vmatmul.f32.gmra.mxu0 %v2961
  %v3001 = vpop.f32.mrf.mxu0
  %v3002 = vadd.f32 %v2385, %v3001
  %3003 = vmatmul.f32.gmra.mxu0 %v2964
  %v3004 = vpop.f32.mrf.mxu0
  %v3005 = vadd.f32 %v2388, %v3004
  %3006 = vdwg.mxu0
  %3007 = vmatpush.msra.mxu0 0.0
  %3008 = vmatpush.msra.mxu0 0.0
  %3009 = vmatpush.msra.mxu0 0.0
  %3010 = vmatpush.msra.mxu0 0.0
  %3011 = vmatpush.msra.mxu0 0.0
  %3012 = vmatpush.msra.mxu0 0.0
  %3013 = vmatpush.msra.mxu0 0.0
  %3014 = vmatpush.msra.mxu0 0.0
  %3015 = vmatpush.msra.mxu0 0.0
  %3016 = vmatpush.msra.mxu0 0.0
  %3017 = vmatpush.msra.mxu0 0.0
  %3018 = vmatpush.msra.mxu0 0.0
  %3019 = vmatpush.msra.mxu0 0.0
  %3020 = vmatpush.msra.mxu0 0.0
  %3021 = vmatpush.msra.mxu0 %v2907
  %3022 = vmatpush.msra.mxu0 %v2895
  %3023 = vmatmul.f32.gmra.mxu0 %v2943
  %v3024 = vpop.f32.mrf.mxu0
  %v3025 = vadd.f32 %v2408, %v3024
  %3026 = vmatmul.f32.gmra.mxu0 %v2946
  %v3027 = vpop.f32.mrf.mxu0
  %v3028 = vadd.f32 %v2411, %v3027
  %3029 = vmatmul.f32.gmra.mxu0 %v2949
  %v3030 = vpop.f32.mrf.mxu0
  %v3031 = vadd.f32 %v2414, %v3030
  %3032 = vmatmul.f32.gmra.mxu0 %v2952
  %v3033 = vpop.f32.mrf.mxu0
  %v3034 = vadd.f32 %v2417, %v3033
  %3035 = vmatmul.f32.gmra.mxu0 %v2955
  %v3036 = vpop.f32.mrf.mxu0
  %v3037 = vadd.f32 %v2420, %v3036
  %3038 = vmatmul.f32.gmra.mxu0 %v2958
  %v3039 = vpop.f32.mrf.mxu0
  %v3040 = vadd.f32 %v2423, %v3039
  %3041 = vmatmul.f32.gmra.mxu0 %v2961
  %v3042 = vpop.f32.mrf.mxu0
  %v3043 = vadd.f32 %v2426, %v3042
  %3044 = vmatmul.f32.gmra.mxu0 %v2964
  %v3045 = vpop.f32.mrf.mxu0
  %v3046 = vadd.f32 %v2429, %v3045
  %3047 = vdwg.mxu0
  %3048 = vmatpush.msra.mxu0 0.0
  %3049 = vmatpush.msra.mxu0 0.0
  %3050 = vmatpush.msra.mxu0 0.0
  %3051 = vmatpush.msra.mxu0 0.0
  %3052 = vmatpush.msra.mxu0 0.0
  %3053 = vmatpush.msra.mxu0 0.0
  %3054 = vmatpush.msra.mxu0 0.0
  %3055 = vmatpush.msra.mxu0 0.0
  %3056 = vmatpush.msra.mxu0 0.0
  %3057 = vmatpush.msra.mxu0 0.0
  %3058 = vmatpush.msra.mxu0 0.0
  %3059 = vmatpush.msra.mxu0 0.0
  %3060 = vmatpush.msra.mxu0 0.0
  %3061 = vmatpush.msra.mxu0 0.0
  %3062 = vmatpush.msra.mxu0 %v2908
  %3063 = vmatpush.msra.mxu0 %v2896
  %3064 = vmatmul.f32.gmra.mxu0 %v2943
  %v3065 = vpop.f32.mrf.mxu0
  %v3066 = vadd.f32 %v2449, %v3065
  %3067 = vmatmul.f32.gmra.mxu0 %v2946
  %v3068 = vpop.f32.mrf.mxu0
  %v3069 = vadd.f32 %v2452, %v3068
  %3070 = vmatmul.f32.gmra.mxu0 %v2949
  %v3071 = vpop.f32.mrf.mxu0
  %v3072 = vadd.f32 %v2455, %v3071
  %3073 = vmatmul.f32.gmra.mxu0 %v2952
  %v3074 = vpop.f32.mrf.mxu0
  %v3075 = vadd.f32 %v2458, %v3074
  %3076 = vmatmul.f32.gmra.mxu0 %v2955
  %v3077 = vpop.f32.mrf.mxu0
  %v3078 = vadd.f32 %v2461, %v3077
  %3079 = vmatmul.f32.gmra.mxu0 %v2958
  %v3080 = vpop.f32.mrf.mxu0
  %v3081 = vadd.f32 %v2464, %v3080
  %3082 = vmatmul.f32.gmra.mxu0 %v2961
  %v3083 = vpop.f32.mrf.mxu0
  %v3084 = vadd.f32 %v2467, %v3083
  %3085 = vmatmul.f32.gmra.mxu0 %v2964
  %v3086 = vpop.f32.mrf.mxu0
  %v3087 = vadd.f32 %v2470, %v3086
  %3088 = vdwg.mxu0
  %3089 = vmatpush.msra.mxu0 0.0
  %3090 = vmatpush.msra.mxu0 0.0
  %3091 = vmatpush.msra.mxu0 0.0
  %3092 = vmatpush.msra.mxu0 0.0
  %3093 = vmatpush.msra.mxu0 0.0
  %3094 = vmatpush.msra.mxu0 0.0
  %3095 = vmatpush.msra.mxu0 0.0
  %3096 = vmatpush.msra.mxu0 0.0
  %3097 = vmatpush.msra.mxu0 0.0
  %3098 = vmatpush.msra.mxu0 0.0
  %3099 = vmatpush.msra.mxu0 0.0
  %3100 = vmatpush.msra.mxu0 0.0
  %3101 = vmatpush.msra.mxu0 0.0
  %3102 = vmatpush.msra.mxu0 0.0
  %3103 = vmatpush.msra.mxu0 %v2909
  %3104 = vmatpush.msra.mxu0 %v2897
  %3105 = vmatmul.f32.gmra.mxu0 %v2943
  %v3106 = vpop.f32.mrf.mxu0
  %v3107 = vadd.f32 %v2490, %v3106
  %3108 = vmatmul.f32.gmra.mxu0 %v2946
  %v3109 = vpop.f32.mrf.mxu0
  %v3110 = vadd.f32 %v2493, %v3109
  %3111 = vmatmul.f32.gmra.mxu0 %v2949
  %v3112 = vpop.f32.mrf.mxu0
  %v3113 = vadd.f32 %v2496, %v3112
  %3114 = vmatmul.f32.gmra.mxu0 %v2952
  %v3115 = vpop.f32.mrf.mxu0
  %v3116 = vadd.f32 %v2499, %v3115
  %3117 = vmatmul.f32.gmra.mxu0 %v2955
  %v3118 = vpop.f32.mrf.mxu0
  %v3119 = vadd.f32 %v2502, %v3118
  %3120 = vmatmul.f32.gmra.mxu0 %v2958
  %v3121 = vpop.f32.mrf.mxu0
  %v3122 = vadd.f32 %v2505, %v3121
  %3123 = vmatmul.f32.gmra.mxu0 %v2961
  %v3124 = vpop.f32.mrf.mxu0
  %v3125 = vadd.f32 %v2508, %v3124
  %3126 = vmatmul.f32.gmra.mxu0 %v2964
  %v3127 = vpop.f32.mrf.mxu0
  %v3128 = vadd.f32 %v2511, %v3127
  %3129 = vdwg.mxu0
  %3130 = vmatpush.msra.mxu0 0.0
  %3131 = vmatpush.msra.mxu0 0.0
  %3132 = vmatpush.msra.mxu0 0.0
  %3133 = vmatpush.msra.mxu0 0.0
  %3134 = vmatpush.msra.mxu0 0.0
  %3135 = vmatpush.msra.mxu0 0.0
  %3136 = vmatpush.msra.mxu0 0.0
  %3137 = vmatpush.msra.mxu0 0.0
  %3138 = vmatpush.msra.mxu0 0.0
  %3139 = vmatpush.msra.mxu0 0.0
  %3140 = vmatpush.msra.mxu0 0.0
  %3141 = vmatpush.msra.mxu0 0.0
  %3142 = vmatpush.msra.mxu0 0.0
  %3143 = vmatpush.msra.mxu0 0.0
  %3144 = vmatpush.msra.mxu0 %v2910
  %3145 = vmatpush.msra.mxu0 %v2898
  %3146 = vmatmul.f32.gmra.mxu0 %v2943
  %v3147 = vpop.f32.mrf.mxu0
  %v3148 = vadd.f32 %v2531, %v3147
  %3149 = vmatmul.f32.gmra.mxu0 %v2946
  %v3150 = vpop.f32.mrf.mxu0
  %v3151 = vadd.f32 %v2534, %v3150
  %3152 = vmatmul.f32.gmra.mxu0 %v2949
  %v3153 = vpop.f32.mrf.mxu0
  %v3154 = vadd.f32 %v2537, %v3153
  %3155 = vmatmul.f32.gmra.mxu0 %v2952
  %v3156 = vpop.f32.mrf.mxu0
  %v3157 = vadd.f32 %v2540, %v3156
  %3158 = vmatmul.f32.gmra.mxu0 %v2955
  %v3159 = vpop.f32.mrf.mxu0
  %v3160 = vadd.f32 %v2543, %v3159
  %3161 = vmatmul.f32.gmra.mxu0 %v2958
  %v3162 = vpop.f32.mrf.mxu0
  %v3163 = vadd.f32 %v2546, %v3162
  %3164 = vmatmul.f32.gmra.mxu0 %v2961
  %v3165 = vpop.f32.mrf.mxu0
  %v3166 = vadd.f32 %v2549, %v3165
  %3167 = vmatmul.f32.gmra.mxu0 %v2964
  %v3168 = vpop.f32.mrf.mxu0
  %v3169 = vadd.f32 %v2552, %v3168
  %3170 = vdwg.mxu0
  %3171 = vmatpush.msra.mxu0 0.0
  %3172 = vmatpush.msra.mxu0 0.0
  %3173 = vmatpush.msra.mxu0 0.0
  %3174 = vmatpush.msra.mxu0 0.0
  %3175 = vmatpush.msra.mxu0 0.0
  %3176 = vmatpush.msra.mxu0 0.0
  %3177 = vmatpush.msra.mxu0 0.0
  %3178 = vmatpush.msra.mxu0 0.0
  %3179 = vmatpush.msra.mxu0 0.0
  %3180 = vmatpush.msra.mxu0 0.0
  %3181 = vmatpush.msra.mxu0 0.0
  %3182 = vmatpush.msra.mxu0 0.0
  %3183 = vmatpush.msra.mxu0 0.0
  %3184 = vmatpush.msra.mxu0 0.0
  %3185 = vmatpush.msra.mxu0 %v2911
  %3186 = vmatpush.msra.mxu0 %v2899
  %3187 = vmatmul.f32.gmra.mxu0 %v2943
  %v3188 = vpop.f32.mrf.mxu0
  %v3189 = vadd.f32 %v2572, %v3188
  %3190 = vmatmul.f32.gmra.mxu0 %v2946
  %v3191 = vpop.f32.mrf.mxu0
  %v3192 = vadd.f32 %v2575, %v3191
  %3193 = vmatmul.f32.gmra.mxu0 %v2949
  %v3194 = vpop.f32.mrf.mxu0
  %v3195 = vadd.f32 %v2578, %v3194
  %3196 = vmatmul.f32.gmra.mxu0 %v2952
  %v3197 = vpop.f32.mrf.mxu0
  %v3198 = vadd.f32 %v2581, %v3197
  %3199 = vmatmul.f32.gmra.mxu0 %v2955
  %v3200 = vpop.f32.mrf.mxu0
  %v3201 = vadd.f32 %v2584, %v3200
  %3202 = vmatmul.f32.gmra.mxu0 %v2958
  %v3203 = vpop.f32.mrf.mxu0
  %v3204 = vadd.f32 %v2587, %v3203
  %3205 = vmatmul.f32.gmra.mxu0 %v2961
  %v3206 = vpop.f32.mrf.mxu0
  %v3207 = vadd.f32 %v2590, %v3206
  %3208 = vmatmul.f32.gmra.mxu0 %v2964
  %v3209 = vpop.f32.mrf.mxu0
  %v3210 = vadd.f32 %v2593, %v3209
  %3211 = vdwg.mxu0
  %3212 = vmatpush.msra.mxu0 0.0
  %3213 = vmatpush.msra.mxu0 0.0
  %3214 = vmatpush.msra.mxu0 0.0
  %3215 = vmatpush.msra.mxu0 0.0
  %3216 = vmatpush.msra.mxu0 0.0
  %3217 = vmatpush.msra.mxu0 0.0
  %3218 = vmatpush.msra.mxu0 0.0
  %3219 = vmatpush.msra.mxu0 0.0
  %3220 = vmatpush.msra.mxu0 0.0
  %3221 = vmatpush.msra.mxu0 0.0
  %3222 = vmatpush.msra.mxu0 0.0
  %3223 = vmatpush.msra.mxu0 0.0
  %3224 = vmatpush.msra.mxu0 0.0
  %3225 = vmatpush.msra.mxu0 0.0
  %3226 = vmatpush.msra.mxu0 %v2912
  %3227 = vmatpush.msra.mxu0 %v2900
  %3228 = vmatmul.f32.gmra.mxu0 %v2943
  %v3229 = vpop.f32.mrf.mxu0
  %v3230 = vadd.f32 %v2613, %v3229
  %3231 = vmatmul.f32.gmra.mxu0 %v2946
  %v3232 = vpop.f32.mrf.mxu0
  %v3233 = vadd.f32 %v2616, %v3232
  %3234 = vmatmul.f32.gmra.mxu0 %v2949
  %v3235 = vpop.f32.mrf.mxu0
  %v3236 = vadd.f32 %v2619, %v3235
  %3237 = vmatmul.f32.gmra.mxu0 %v2952
  %v3238 = vpop.f32.mrf.mxu0
  %v3239 = vadd.f32 %v2622, %v3238
  %3240 = vmatmul.f32.gmra.mxu0 %v2955
  %v3241 = vpop.f32.mrf.mxu0
  %v3242 = vadd.f32 %v2625, %v3241
  %3243 = vmatmul.f32.gmra.mxu0 %v2958
  %v3244 = vpop.f32.mrf.mxu0
  %v3245 = vadd.f32 %v2628, %v3244
  %3246 = vmatmul.f32.gmra.mxu0 %v2961
  %v3247 = vpop.f32.mrf.mxu0
  %v3248 = vadd.f32 %v2631, %v3247
  %3249 = vmatmul.f32.gmra.mxu0 %v2964
  %v3250 = vpop.f32.mrf.mxu0
  %v3251 = vadd.f32 %v2634, %v3250
  %3252 = vdwg.mxu0
  %3253 = vmatpush.msra.mxu0 0.0
  %3254 = vmatpush.msra.mxu0 0.0
  %3255 = vmatpush.msra.mxu0 0.0
  %3256 = vmatpush.msra.mxu0 0.0
  %3257 = vmatpush.msra.mxu0 0.0
  %3258 = vmatpush.msra.mxu0 0.0
  %3259 = vmatpush.msra.mxu0 0.0
  %3260 = vmatpush.msra.mxu0 0.0
  %3261 = vmatpush.msra.mxu0 0.0
  %3262 = vmatpush.msra.mxu0 0.0
  %3263 = vmatpush.msra.mxu0 0.0
  %3264 = vmatpush.msra.mxu0 0.0
  %3265 = vmatpush.msra.mxu0 0.0
  %3266 = vmatpush.msra.mxu0 0.0
  %3267 = vmatpush.msra.mxu0 %v2913
  %3268 = vmatpush.msra.mxu0 %v2901
  %3269 = vmatmul.f32.gmra.mxu0 %v2943
  %v3270 = vpop.f32.mrf.mxu0
  %v3271 = vadd.f32 %v2654, %v3270
  %3272 = vmatmul.f32.gmra.mxu0 %v2946
  %v3273 = vpop.f32.mrf.mxu0
  %v3274 = vadd.f32 %v2657, %v3273
  %3275 = vmatmul.f32.gmra.mxu0 %v2949
  %v3276 = vpop.f32.mrf.mxu0
  %v3277 = vadd.f32 %v2660, %v3276
  %3278 = vmatmul.f32.gmra.mxu0 %v2952
  %v3279 = vpop.f32.mrf.mxu0
  %v3280 = vadd.f32 %v2663, %v3279
  %3281 = vmatmul.f32.gmra.mxu0 %v2955
  %v3282 = vpop.f32.mrf.mxu0
  %v3283 = vadd.f32 %v2666, %v3282
  %3284 = vmatmul.f32.gmra.mxu0 %v2958
  %v3285 = vpop.f32.mrf.mxu0
  %v3286 = vadd.f32 %v2669, %v3285
  %3287 = vmatmul.f32.gmra.mxu0 %v2961
  %v3288 = vpop.f32.mrf.mxu0
  %v3289 = vadd.f32 %v2672, %v3288
  %3290 = vmatmul.f32.gmra.mxu0 %v2964
  %v3291 = vpop.f32.mrf.mxu0
  %v3292 = vadd.f32 %v2675, %v3291
  %3293 = vdwg.mxu0
  %3294 = vmatpush.msra.mxu0 0.0
  %3295 = vmatpush.msra.mxu0 0.0
  %3296 = vmatpush.msra.mxu0 0.0
  %3297 = vmatpush.msra.mxu0 0.0
  %3298 = vmatpush.msra.mxu0 0.0
  %3299 = vmatpush.msra.mxu0 0.0
  %3300 = vmatpush.msra.mxu0 0.0
  %3301 = vmatpush.msra.mxu0 0.0
  %3302 = vmatpush.msra.mxu0 0.0
  %3303 = vmatpush.msra.mxu0 0.0
  %3304 = vmatpush.msra.mxu0 0.0
  %3305 = vmatpush.msra.mxu0 0.0
  %3306 = vmatpush.msra.mxu0 0.0
  %3307 = vmatpush.msra.mxu0 0.0
  %3308 = vmatpush.msra.mxu0 %v2914
  %3309 = vmatpush.msra.mxu0 %v2902
  %3310 = vmatmul.f32.gmra.mxu0 %v2943
  %v3311 = vpop.f32.mrf.mxu0
  %v3312 = vadd.f32 %v2695, %v3311
  %3313 = vmatmul.f32.gmra.mxu0 %v2946
  %v3314 = vpop.f32.mrf.mxu0
  %v3315 = vadd.f32 %v2698, %v3314
  %3316 = vmatmul.f32.gmra.mxu0 %v2949
  %v3317 = vpop.f32.mrf.mxu0
  %v3318 = vadd.f32 %v2701, %v3317
  %3319 = vmatmul.f32.gmra.mxu0 %v2952
  %v3320 = vpop.f32.mrf.mxu0
  %v3321 = vadd.f32 %v2704, %v3320
  %3322 = vmatmul.f32.gmra.mxu0 %v2955
  %v3323 = vpop.f32.mrf.mxu0
  %v3324 = vadd.f32 %v2707, %v3323
  %3325 = vmatmul.f32.gmra.mxu0 %v2958
  %v3326 = vpop.f32.mrf.mxu0
  %v3327 = vadd.f32 %v2710, %v3326
  %3328 = vmatmul.f32.gmra.mxu0 %v2961
  %v3329 = vpop.f32.mrf.mxu0
  %v3330 = vadd.f32 %v2713, %v3329
  %3331 = vmatmul.f32.gmra.mxu0 %v2964
  %v3332 = vpop.f32.mrf.mxu0
  %v3333 = vadd.f32 %v2716, %v3332
  %3334 = vdwg.mxu0
  %3335 = vmatpush.msra.mxu0 0.0
  %3336 = vmatpush.msra.mxu0 0.0
  %3337 = vmatpush.msra.mxu0 0.0
  %3338 = vmatpush.msra.mxu0 0.0
  %3339 = vmatpush.msra.mxu0 0.0
  %3340 = vmatpush.msra.mxu0 0.0
  %3341 = vmatpush.msra.mxu0 0.0
  %3342 = vmatpush.msra.mxu0 0.0
  %3343 = vmatpush.msra.mxu0 0.0
  %3344 = vmatpush.msra.mxu0 0.0
  %3345 = vmatpush.msra.mxu0 0.0
  %3346 = vmatpush.msra.mxu0 0.0
  %3347 = vmatpush.msra.mxu0 0.0
  %3348 = vmatpush.msra.mxu0 0.0
  %3349 = vmatpush.msra.mxu0 %v2915
  %3350 = vmatpush.msra.mxu0 %v2903
  %3351 = vmatmul.f32.gmra.mxu0 %v2943
  %v3352 = vpop.f32.mrf.mxu0
  %v3353 = vadd.f32 %v2736, %v3352
  %3354 = vmatmul.f32.gmra.mxu0 %v2946
  %v3355 = vpop.f32.mrf.mxu0
  %v3356 = vadd.f32 %v2739, %v3355
  %3357 = vmatmul.f32.gmra.mxu0 %v2949
  %v3358 = vpop.f32.mrf.mxu0
  %v3359 = vadd.f32 %v2742, %v3358
  %3360 = vmatmul.f32.gmra.mxu0 %v2952
  %v3361 = vpop.f32.mrf.mxu0
  %v3362 = vadd.f32 %v2745, %v3361
  %3363 = vmatmul.f32.gmra.mxu0 %v2955
  %v3364 = vpop.f32.mrf.mxu0
  %v3365 = vadd.f32 %v2748, %v3364
  %3366 = vmatmul.f32.gmra.mxu0 %v2958
  %v3367 = vpop.f32.mrf.mxu0
  %v3368 = vadd.f32 %v2751, %v3367
  %3369 = vmatmul.f32.gmra.mxu0 %v2961
  %v3370 = vpop.f32.mrf.mxu0
  %v3371 = vadd.f32 %v2754, %v3370
  %3372 = vmatmul.f32.gmra.mxu0 %v2964
  %v3373 = vpop.f32.mrf.mxu0
  %v3374 = vadd.f32 %v2757, %v3373
  %3375 = vdwg.mxu0
  %3376 = vmatpush.msra.mxu0 0.0
  %3377 = vmatpush.msra.mxu0 0.0
  %3378 = vmatpush.msra.mxu0 0.0
  %3379 = vmatpush.msra.mxu0 0.0
  %3380 = vmatpush.msra.mxu0 0.0
  %3381 = vmatpush.msra.mxu0 0.0
  %3382 = vmatpush.msra.mxu0 0.0
  %3383 = vmatpush.msra.mxu0 0.0
  %3384 = vmatpush.msra.mxu0 0.0
  %3385 = vmatpush.msra.mxu0 0.0
  %3386 = vmatpush.msra.mxu0 0.0
  %3387 = vmatpush.msra.mxu0 0.0
  %3388 = vmatpush.msra.mxu0 0.0
  %3389 = vmatpush.msra.mxu0 0.0
  %3390 = vmatpush.msra.mxu0 %v2916
  %3391 = vmatpush.msra.mxu0 %v2904
  %3392 = vmatmul.f32.gmra.mxu0 %v2943
  %v3393 = vpop.f32.mrf.mxu0
  %v3394 = vadd.f32 %v2777, %v3393
  %3395 = vmatmul.f32.gmra.mxu0 %v2946
  %v3396 = vpop.f32.mrf.mxu0
  %v3397 = vadd.f32 %v2780, %v3396
  %3398 = vmatmul.f32.gmra.mxu0 %v2949
  %v3399 = vpop.f32.mrf.mxu0
  %v3400 = vadd.f32 %v2783, %v3399
  %3401 = vmatmul.f32.gmra.mxu0 %v2952
  %v3402 = vpop.f32.mrf.mxu0
  %v3403 = vadd.f32 %v2786, %v3402
  %3404 = vmatmul.f32.gmra.mxu0 %v2955
  %v3405 = vpop.f32.mrf.mxu0
  %v3406 = vadd.f32 %v2789, %v3405
  %3407 = vmatmul.f32.gmra.mxu0 %v2958
  %v3408 = vpop.f32.mrf.mxu0
  %v3409 = vadd.f32 %v2792, %v3408
  %3410 = vmatmul.f32.gmra.mxu0 %v2961
  %v3411 = vpop.f32.mrf.mxu0
  %v3412 = vadd.f32 %v2795, %v3411
  %3413 = vmatmul.f32.gmra.mxu0 %v2964
  %v3414 = vpop.f32.mrf.mxu0
  %v3415 = vadd.f32 %v2798, %v3414
  %3416 = vdwg.mxu0
  %3417 = vmatpush.msra.mxu0 0.0
  %3418 = vmatpush.msra.mxu0 0.0
  %3419 = vmatpush.msra.mxu0 0.0
  %3420 = vmatpush.msra.mxu0 0.0
  %3421 = vmatpush.msra.mxu0 0.0
  %3422 = vmatpush.msra.mxu0 0.0
  %3423 = vmatpush.msra.mxu0 0.0
  %3424 = vmatpush.msra.mxu0 0.0
  %3425 = vmatpush.msra.mxu0 0.0
  %3426 = vmatpush.msra.mxu0 0.0
  %3427 = vmatpush.msra.mxu0 0.0
  %3428 = vmatpush.msra.mxu0 0.0
  %3429 = vmatpush.msra.mxu0 0.0
  %3430 = vmatpush.msra.mxu0 0.0
  %3431 = vmatpush.msra.mxu0 %v2917
  %3432 = vmatpush.msra.mxu0 %v2905
  %3433 = vmatmul.f32.gmra.mxu0 %v2943
  %v3434 = vpop.f32.mrf.mxu0
  %v3435 = vadd.f32 %v2818, %v3434
  %3436 = vmatmul.f32.gmra.mxu0 %v2946
  %v3437 = vpop.f32.mrf.mxu0
  %v3438 = vadd.f32 %v2821, %v3437
  %3439 = vmatmul.f32.gmra.mxu0 %v2949
  %v3440 = vpop.f32.mrf.mxu0
  %v3441 = vadd.f32 %v2824, %v3440
  %3442 = vmatmul.f32.gmra.mxu0 %v2952
  %v3443 = vpop.f32.mrf.mxu0
  %v3444 = vadd.f32 %v2827, %v3443
  %3445 = vmatmul.f32.gmra.mxu0 %v2955
  %v3446 = vpop.f32.mrf.mxu0
  %v3447 = vadd.f32 %v2830, %v3446
  %3448 = vmatmul.f32.gmra.mxu0 %v2958
  %v3449 = vpop.f32.mrf.mxu0
  %v3450 = vadd.f32 %v2833, %v3449
  %3451 = vmatmul.f32.gmra.mxu0 %v2961
  %v3452 = vpop.f32.mrf.mxu0
  %v3453 = vadd.f32 %v2836, %v3452
  %3454 = vmatmul.f32.gmra.mxu0 %v2964
  %v3455 = vpop.f32.mrf.mxu0
  %v3456 = vadd.f32 %v2839, %v3455
  %3457 = vdwg.mxu0
  %s3458 = scalar_lea.vmem %s1, 320
  %v3459 = vld [vmem:[%s3458] sm:$0xff]
  %v3460 = vld [vmem:[%s3458 + $0x8] sm:$0xff]
  %v3461 = vld [vmem:[%s3458 + $0x10] sm:$0xff]
  %v3462 = vld [vmem:[%s3458 + $0x18] sm:$0xff]
  %v3463 = vld [vmem:[%s3458 + $0x20] sm:$0xff]
  %v3464 = vld [vmem:[%s3458 + $0x28] sm:$0xff]
  %v3465 = vld [vmem:[%s3458 + $0x30] sm:$0xff]
  %v3466 = vld [vmem:[%s3458 + $0x38] sm:$0xff]
  %3467 = vrot.lane.b32.xlu0 %v710, 108
  %v3468 = vpop.permute.xlu0 %3467
  %3469 = vrot.lane.b32.xlu0 %v711, 108
  %v3470 = vpop.permute.xlu0 %3469
  %3471 = vrot.lane.b32.xlu0 %v712, 108
  %v3472 = vpop.permute.xlu0 %3471
  %3473 = vrot.lane.b32.xlu0 %v713, 108
  %v3474 = vpop.permute.xlu0 %3473
  %3475 = vrot.lane.b32.xlu0 %v714, 108
  %v3476 = vpop.permute.xlu0 %3475
  %3477 = vrot.lane.b32.xlu0 %v715, 108
  %v3478 = vpop.permute.xlu0 %3477
  %3479 = vrot.lane.b32.xlu0 %v716, 108
  %v3480 = vpop.permute.xlu0 %3479
  %3481 = vrot.lane.b32.xlu0 %v717, 108
  %v3482 = vpop.permute.xlu0 %3481
  %3483 = vrot.lane.b32.xlu0 %v718, 108
  %v3484 = vpop.permute.xlu0 %3483
  %3485 = vrot.lane.b32.xlu0 %v719, 108
  %v3486 = vpop.permute.xlu0 %3485
  %3487 = vrot.lane.b32.xlu0 %v720, 108
  %v3488 = vpop.permute.xlu0 %3487
  %3489 = vrot.lane.b32.xlu0 %v721, 108
  %v3490 = vpop.permute.xlu0 %3489
  %3491 = vrot.lane.b32.xlu0 %v722, 108
  %v3492 = vpop.permute.xlu0 %3491
  %3493 = vrot.lane.b32.xlu0 %v723, 108
  %v3494 = vpop.permute.xlu0 %3493
  %3495 = vrot.lane.b32.xlu0 %v724, 108
  %v3496 = vpop.permute.xlu0 %3495
  %3497 = vrot.lane.b32.xlu0 %v725, 108
  %v3498 = vpop.permute.xlu0 %3497
  %3499 = vrot.lane.b32.xlu0 %v726, 108
  %v3500 = vpop.permute.xlu0 %3499
  %3501 = vrot.lane.b32.xlu0 %v727, 108
  %v3502 = vpop.permute.xlu0 %3501
  %3503 = vrot.lane.b32.xlu0 %v728, 108
  %v3504 = vpop.permute.xlu0 %3503
  %3505 = vrot.lane.b32.xlu0 %v729, 108
  %v3506 = vpop.permute.xlu0 %3505
  %3507 = vrot.lane.b32.xlu0 %v730, 108
  %v3508 = vpop.permute.xlu0 %3507
  %3509 = vrot.lane.b32.xlu0 %v731, 108
  %v3510 = vpop.permute.xlu0 %3509
  %3511 = vrot.lane.b32.xlu0 %v732, 108
  %v3512 = vpop.permute.xlu0 %3511
  %3513 = vrot.lane.b32.xlu0 %v733, 108
  %v3514 = vpop.permute.xlu0 %3513
  %3515 = vrot.lane.b32.xlu0 %v734, 108
  %v3516 = vpop.permute.xlu0 %3515
  %3517 = vrot.lane.b32.xlu0 %v735, 108
  %v3518 = vpop.permute.xlu0 %3517
  %vm3519 = vcmask 883712
  %v3520 = vsel %vm3519, %v3468, %v3470
  %v3521 = vsel %vm3519, %v3470, %v3472
  %v3522 = vsel %vm3519, %v3472, %v3474
  %v3523 = vsel %vm3519, %v3474, %v3476
  %v3524 = vsel %vm3519, %v3476, %v3478
  %v3525 = vsel %vm3519, %v3478, %v3480
  %v3526 = vsel %vm3519, %v3480, %v3482
  %v3527 = vsel %vm3519, %v3482, %v3484
  %v3528 = vsel %vm3519, %v3484, %v3486
  %v3529 = vsel %vm3519, %v3486, %v3488
  %v3530 = vsel %vm3519, %v3488, %v3490
  %v3531 = vsel %vm3519, %v3490, %v3492
  %v3532 = vsel %vm3519, %v3494, %v3496
  %v3533 = vsel %vm3519, %v3496, %v3498
  %v3534 = vsel %vm3519, %v3498, %v3500
  %v3535 = vsel %vm3519, %v3500, %v3502
  %v3536 = vsel %vm3519, %v3502, %v3504
  %v3537 = vsel %vm3519, %v3504, %v3506
  %v3538 = vsel %vm3519, %v3506, %v3508
  %v3539 = vsel %vm3519, %v3508, %v3510
  %v3540 = vsel %vm3519, %v3510, %v3512
  %v3541 = vsel %vm3519, %v3512, %v3514
  %v3542 = vsel %vm3519, %v3514, %v3516
  %v3543 = vsel %vm3519, %v3516, %v3518
  %v3569 = vsel %vm97, %v3459, 0
  %v3572 = vsel %vm97, %v3460, 0
  %v3575 = vsel %vm97, %v3461, 0
  %v3578 = vsel %vm97, %v3462, 0
  %v3581 = vsel %vm97, %v3463, 0
  %v3584 = vsel %vm97, %v3464, 0
  %v3587 = vsel %vm97, %v3465, 0
  %v3590 = vsel %vm97, %v3466, 0
  %3592 = vmatpush.msra.mxu0 0.0
  %3593 = vmatpush.msra.mxu0 0.0
  %3594 = vmatpush.msra.mxu0 0.0
  %3595 = vmatpush.msra.mxu0 0.0
  %3596 = vmatpush.msra.mxu0 0.0
  %3597 = vmatpush.msra.mxu0 0.0
  %3598 = vmatpush.msra.mxu0 0.0
  %3599 = vmatpush.msra.mxu0 0.0
  %3600 = vmatpush.msra.mxu0 0.0
  %3601 = vmatpush.msra.mxu0 0.0
  %3602 = vmatpush.msra.mxu0 0.0
  %3603 = vmatpush.msra.mxu0 0.0
  %3604 = vmatpush.msra.mxu0 0.0
  %3605 = vmatpush.msra.mxu0 0.0
  %3606 = vmatpush.msra.mxu0 %v3532
  %3607 = vmatpush.msra.mxu0 %v3520
  %3608 = vmatmul.f32.gmra.mxu0 %v3569
  %v3609 = vpop.f32.mrf.mxu0
  %v3610 = vadd.f32 0.0, %v3609
  %3611 = vmatmul.f32.gmra.mxu0 %v3572
  %v3612 = vpop.f32.mrf.mxu0
  %v3613 = vadd.f32 0.0, %v3612
  %3614 = vmatmul.f32.gmra.mxu0 %v3575
  %v3615 = vpop.f32.mrf.mxu0
  %v3616 = vadd.f32 0.0, %v3615
  %3617 = vmatmul.f32.gmra.mxu0 %v3578
  %v3618 = vpop.f32.mrf.mxu0
  %v3619 = vadd.f32 0.0, %v3618
  %3620 = vmatmul.f32.gmra.mxu0 %v3581
  %v3621 = vpop.f32.mrf.mxu0
  %v3622 = vadd.f32 0.0, %v3621
  %3623 = vmatmul.f32.gmra.mxu0 %v3584
  %v3624 = vpop.f32.mrf.mxu0
  %v3625 = vadd.f32 0.0, %v3624
  %3626 = vmatmul.f32.gmra.mxu0 %v3587
  %v3627 = vpop.f32.mrf.mxu0
  %v3628 = vadd.f32 0.0, %v3627
  %3629 = vmatmul.f32.gmra.mxu0 %v3590
  %v3630 = vpop.f32.mrf.mxu0
  %v3631 = vadd.f32 0.0, %v3630
  %3632 = vdwg.mxu0
  %3633 = vmatpush.msra.mxu0 0.0
  %3634 = vmatpush.msra.mxu0 0.0
  %3635 = vmatpush.msra.mxu0 0.0
  %3636 = vmatpush.msra.mxu0 0.0
  %3637 = vmatpush.msra.mxu0 0.0
  %3638 = vmatpush.msra.mxu0 0.0
  %3639 = vmatpush.msra.mxu0 0.0
  %3640 = vmatpush.msra.mxu0 0.0
  %3641 = vmatpush.msra.mxu0 0.0
  %3642 = vmatpush.msra.mxu0 0.0
  %3643 = vmatpush.msra.mxu0 0.0
  %3644 = vmatpush.msra.mxu0 0.0
  %3645 = vmatpush.msra.mxu0 0.0
  %3646 = vmatpush.msra.mxu0 0.0
  %3647 = vmatpush.msra.mxu0 %v3533
  %3648 = vmatpush.msra.mxu0 %v3521
  %3649 = vmatmul.f32.gmra.mxu0 %v3569
  %v3650 = vpop.f32.mrf.mxu0
  %v3651 = vadd.f32 0.0, %v3650
  %3652 = vmatmul.f32.gmra.mxu0 %v3572
  %v3653 = vpop.f32.mrf.mxu0
  %v3654 = vadd.f32 0.0, %v3653
  %3655 = vmatmul.f32.gmra.mxu0 %v3575
  %v3656 = vpop.f32.mrf.mxu0
  %v3657 = vadd.f32 0.0, %v3656
  %3658 = vmatmul.f32.gmra.mxu0 %v3578
  %v3659 = vpop.f32.mrf.mxu0
  %v3660 = vadd.f32 0.0, %v3659
  %3661 = vmatmul.f32.gmra.mxu0 %v3581
  %v3662 = vpop.f32.mrf.mxu0
  %v3663 = vadd.f32 0.0, %v3662
  %3664 = vmatmul.f32.gmra.mxu0 %v3584
  %v3665 = vpop.f32.mrf.mxu0
  %v3666 = vadd.f32 0.0, %v3665
  %3667 = vmatmul.f32.gmra.mxu0 %v3587
  %v3668 = vpop.f32.mrf.mxu0
  %v3669 = vadd.f32 0.0, %v3668
  %3670 = vmatmul.f32.gmra.mxu0 %v3590
  %v3671 = vpop.f32.mrf.mxu0
  %v3672 = vadd.f32 0.0, %v3671
  %3673 = vdwg.mxu0
  %3674 = vmatpush.msra.mxu0 0.0
  %3675 = vmatpush.msra.mxu0 0.0
  %3676 = vmatpush.msra.mxu0 0.0
  %3677 = vmatpush.msra.mxu0 0.0
  %3678 = vmatpush.msra.mxu0 0.0
  %3679 = vmatpush.msra.mxu0 0.0
  %3680 = vmatpush.msra.mxu0 0.0
  %3681 = vmatpush.msra.mxu0 0.0
  %3682 = vmatpush.msra.mxu0 0.0
  %3683 = vmatpush.msra.mxu0 0.0
  %3684 = vmatpush.msra.mxu0 0.0
  %3685 = vmatpush.msra.mxu0 0.0
  %3686 = vmatpush.msra.mxu0 0.0
  %3687 = vmatpush.msra.mxu0 0.0
  %3688 = vmatpush.msra.mxu0 %v3534
  %3689 = vmatpush.msra.mxu0 %v3522
  %3690 = vmatmul.f32.gmra.mxu0 %v3569
  %v3691 = vpop.f32.mrf.mxu0
  %v3692 = vadd.f32 0.0, %v3691
  %3693 = vmatmul.f32.gmra.mxu0 %v3572
  %v3694 = vpop.f32.mrf.mxu0
  %v3695 = vadd.f32 0.0, %v3694
  %3696 = vmatmul.f32.gmra.mxu0 %v3575
  %v3697 = vpop.f32.mrf.mxu0
  %v3698 = vadd.f32 0.0, %v3697
  %3699 = vmatmul.f32.gmra.mxu0 %v3578
  %v3700 = vpop.f32.mrf.mxu0
  %v3701 = vadd.f32 0.0, %v3700
  %3702 = vmatmul.f32.gmra.mxu0 %v3581
  %v3703 = vpop.f32.mrf.mxu0
  %v3704 = vadd.f32 0.0, %v3703
  %3705 = vmatmul.f32.gmra.mxu0 %v3584
  %v3706 = vpop.f32.mrf.mxu0
  %v3707 = vadd.f32 0.0, %v3706
  %3708 = vmatmul.f32.gmra.mxu0 %v3587
  %v3709 = vpop.f32.mrf.mxu0
  %v3710 = vadd.f32 0.0, %v3709
  %3711 = vmatmul.f32.gmra.mxu0 %v3590
  %v3712 = vpop.f32.mrf.mxu0
  %v3713 = vadd.f32 0.0, %v3712
  %3714 = vdwg.mxu0
  %3715 = vmatpush.msra.mxu0 0.0
  %3716 = vmatpush.msra.mxu0 0.0
  %3717 = vmatpush.msra.mxu0 0.0
  %3718 = vmatpush.msra.mxu0 0.0
  %3719 = vmatpush.msra.mxu0 0.0
  %3720 = vmatpush.msra.mxu0 0.0
  %3721 = vmatpush.msra.mxu0 0.0
  %3722 = vmatpush.msra.mxu0 0.0
  %3723 = vmatpush.msra.mxu0 0.0
  %3724 = vmatpush.msra.mxu0 0.0
  %3725 = vmatpush.msra.mxu0 0.0
  %3726 = vmatpush.msra.mxu0 0.0
  %3727 = vmatpush.msra.mxu0 0.0
  %3728 = vmatpush.msra.mxu0 0.0
  %3729 = vmatpush.msra.mxu0 %v3535
  %3730 = vmatpush.msra.mxu0 %v3523
  %3731 = vmatmul.f32.gmra.mxu0 %v3569
  %v3732 = vpop.f32.mrf.mxu0
  %v3733 = vadd.f32 0.0, %v3732
  %3734 = vmatmul.f32.gmra.mxu0 %v3572
  %v3735 = vpop.f32.mrf.mxu0
  %v3736 = vadd.f32 0.0, %v3735
  %3737 = vmatmul.f32.gmra.mxu0 %v3575
  %v3738 = vpop.f32.mrf.mxu0
  %v3739 = vadd.f32 0.0, %v3738
  %3740 = vmatmul.f32.gmra.mxu0 %v3578
  %v3741 = vpop.f32.mrf.mxu0
  %v3742 = vadd.f32 0.0, %v3741
  %3743 = vmatmul.f32.gmra.mxu0 %v3581
  %v3744 = vpop.f32.mrf.mxu0
  %v3745 = vadd.f32 0.0, %v3744
  %3746 = vmatmul.f32.gmra.mxu0 %v3584
  %v3747 = vpop.f32.mrf.mxu0
  %v3748 = vadd.f32 0.0, %v3747
  %3749 = vmatmul.f32.gmra.mxu0 %v3587
  %v3750 = vpop.f32.mrf.mxu0
  %v3751 = vadd.f32 0.0, %v3750
  %3752 = vmatmul.f32.gmra.mxu0 %v3590
  %v3753 = vpop.f32.mrf.mxu0
  %v3754 = vadd.f32 0.0, %v3753
  %3755 = vdwg.mxu0
  %3756 = vmatpush.msra.mxu0 0.0
  %3757 = vmatpush.msra.mxu0 0.0
  %3758 = vmatpush.msra.mxu0 0.0
  %3759 = vmatpush.msra.mxu0 0.0
  %3760 = vmatpush.msra.mxu0 0.0
  %3761 = vmatpush.msra.mxu0 0.0
  %3762 = vmatpush.msra.mxu0 0.0
  %3763 = vmatpush.msra.mxu0 0.0
  %3764 = vmatpush.msra.mxu0 0.0
  %3765 = vmatpush.msra.mxu0 0.0
  %3766 = vmatpush.msra.mxu0 0.0
  %3767 = vmatpush.msra.mxu0 0.0
  %3768 = vmatpush.msra.mxu0 0.0
  %3769 = vmatpush.msra.mxu0 0.0
  %3770 = vmatpush.msra.mxu0 %v3536
  %3771 = vmatpush.msra.mxu0 %v3524
  %3772 = vmatmul.f32.gmra.mxu0 %v3569
  %v3773 = vpop.f32.mrf.mxu0
  %v3774 = vadd.f32 0.0, %v3773
  %3775 = vmatmul.f32.gmra.mxu0 %v3572
  %v3776 = vpop.f32.mrf.mxu0
  %v3777 = vadd.f32 0.0, %v3776
  %3778 = vmatmul.f32.gmra.mxu0 %v3575
  %v3779 = vpop.f32.mrf.mxu0
  %v3780 = vadd.f32 0.0, %v3779
  %3781 = vmatmul.f32.gmra.mxu0 %v3578
  %v3782 = vpop.f32.mrf.mxu0
  %v3783 = vadd.f32 0.0, %v3782
  %3784 = vmatmul.f32.gmra.mxu0 %v3581
  %v3785 = vpop.f32.mrf.mxu0
  %v3786 = vadd.f32 0.0, %v3785
  %3787 = vmatmul.f32.gmra.mxu0 %v3584
  %v3788 = vpop.f32.mrf.mxu0
  %v3789 = vadd.f32 0.0, %v3788
  %3790 = vmatmul.f32.gmra.mxu0 %v3587
  %v3791 = vpop.f32.mrf.mxu0
  %v3792 = vadd.f32 0.0, %v3791
  %3793 = vmatmul.f32.gmra.mxu0 %v3590
  %v3794 = vpop.f32.mrf.mxu0
  %v3795 = vadd.f32 0.0, %v3794
  %3796 = vdwg.mxu0
  %3797 = vmatpush.msra.mxu0 0.0
  %3798 = vmatpush.msra.mxu0 0.0
  %3799 = vmatpush.msra.mxu0 0.0
  %3800 = vmatpush.msra.mxu0 0.0
  %3801 = vmatpush.msra.mxu0 0.0
  %3802 = vmatpush.msra.mxu0 0.0
  %3803 = vmatpush.msra.mxu0 0.0
  %3804 = vmatpush.msra.mxu0 0.0
  %3805 = vmatpush.msra.mxu0 0.0
  %3806 = vmatpush.msra.mxu0 0.0
  %3807 = vmatpush.msra.mxu0 0.0
  %3808 = vmatpush.msra.mxu0 0.0
  %3809 = vmatpush.msra.mxu0 0.0
  %3810 = vmatpush.msra.mxu0 0.0
  %3811 = vmatpush.msra.mxu0 %v3537
  %3812 = vmatpush.msra.mxu0 %v3525
  %3813 = vmatmul.f32.gmra.mxu0 %v3569
  %v3814 = vpop.f32.mrf.mxu0
  %v3815 = vadd.f32 0.0, %v3814
  %3816 = vmatmul.f32.gmra.mxu0 %v3572
  %v3817 = vpop.f32.mrf.mxu0
  %v3818 = vadd.f32 0.0, %v3817
  %3819 = vmatmul.f32.gmra.mxu0 %v3575
  %v3820 = vpop.f32.mrf.mxu0
  %v3821 = vadd.f32 0.0, %v3820
  %3822 = vmatmul.f32.gmra.mxu0 %v3578
  %v3823 = vpop.f32.mrf.mxu0
  %v3824 = vadd.f32 0.0, %v3823
  %3825 = vmatmul.f32.gmra.mxu0 %v3581
  %v3826 = vpop.f32.mrf.mxu0
  %v3827 = vadd.f32 0.0, %v3826
  %3828 = vmatmul.f32.gmra.mxu0 %v3584
  %v3829 = vpop.f32.mrf.mxu0
  %v3830 = vadd.f32 0.0, %v3829
  %3831 = vmatmul.f32.gmra.mxu0 %v3587
  %v3832 = vpop.f32.mrf.mxu0
  %v3833 = vadd.f32 0.0, %v3832
  %3834 = vmatmul.f32.gmra.mxu0 %v3590
  %v3835 = vpop.f32.mrf.mxu0
  %v3836 = vadd.f32 0.0, %v3835
  %3837 = vdwg.mxu0
  %3838 = vmatpush.msra.mxu0 0.0
  %3839 = vmatpush.msra.mxu0 0.0
  %3840 = vmatpush.msra.mxu0 0.0
  %3841 = vmatpush.msra.mxu0 0.0
  %3842 = vmatpush.msra.mxu0 0.0
  %3843 = vmatpush.msra.mxu0 0.0
  %3844 = vmatpush.msra.mxu0 0.0
  %3845 = vmatpush.msra.mxu0 0.0
  %3846 = vmatpush.msra.mxu0 0.0
  %3847 = vmatpush.msra.mxu0 0.0
  %3848 = vmatpush.msra.mxu0 0.0
  %3849 = vmatpush.msra.mxu0 0.0
  %3850 = vmatpush.msra.mxu0 0.0
  %3851 = vmatpush.msra.mxu0 0.0
  %3852 = vmatpush.msra.mxu0 %v3538
  %3853 = vmatpush.msra.mxu0 %v3526
  %3854 = vmatmul.f32.gmra.mxu0 %v3569
  %v3855 = vpop.f32.mrf.mxu0
  %v3856 = vadd.f32 0.0, %v3855
  %3857 = vmatmul.f32.gmra.mxu0 %v3572
  %v3858 = vpop.f32.mrf.mxu0
  %v3859 = vadd.f32 0.0, %v3858
  %3860 = vmatmul.f32.gmra.mxu0 %v3575
  %v3861 = vpop.f32.mrf.mxu0
  %v3862 = vadd.f32 0.0, %v3861
  %3863 = vmatmul.f32.gmra.mxu0 %v3578
  %v3864 = vpop.f32.mrf.mxu0
  %v3865 = vadd.f32 0.0, %v3864
  %3866 = vmatmul.f32.gmra.mxu0 %v3581
  %v3867 = vpop.f32.mrf.mxu0
  %v3868 = vadd.f32 0.0, %v3867
  %3869 = vmatmul.f32.gmra.mxu0 %v3584
  %v3870 = vpop.f32.mrf.mxu0
  %v3871 = vadd.f32 0.0, %v3870
  %3872 = vmatmul.f32.gmra.mxu0 %v3587
  %v3873 = vpop.f32.mrf.mxu0
  %v3874 = vadd.f32 0.0, %v3873
  %3875 = vmatmul.f32.gmra.mxu0 %v3590
  %v3876 = vpop.f32.mrf.mxu0
  %v3877 = vadd.f32 0.0, %v3876
  %3878 = vdwg.mxu0
  %3879 = vmatpush.msra.mxu0 0.0
  %3880 = vmatpush.msra.mxu0 0.0
  %3881 = vmatpush.msra.mxu0 0.0
  %3882 = vmatpush.msra.mxu0 0.0
  %3883 = vmatpush.msra.mxu0 0.0
  %3884 = vmatpush.msra.mxu0 0.0
  %3885 = vmatpush.msra.mxu0 0.0
  %3886 = vmatpush.msra.mxu0 0.0
  %3887 = vmatpush.msra.mxu0 0.0
  %3888 = vmatpush.msra.mxu0 0.0
  %3889 = vmatpush.msra.mxu0 0.0
  %3890 = vmatpush.msra.mxu0 0.0
  %3891 = vmatpush.msra.mxu0 0.0
  %3892 = vmatpush.msra.mxu0 0.0
  %3893 = vmatpush.msra.mxu0 %v3539
  %3894 = vmatpush.msra.mxu0 %v3527
  %3895 = vmatmul.f32.gmra.mxu0 %v3569
  %v3896 = vpop.f32.mrf.mxu0
  %v3897 = vadd.f32 0.0, %v3896
  %3898 = vmatmul.f32.gmra.mxu0 %v3572
  %v3899 = vpop.f32.mrf.mxu0
  %v3900 = vadd.f32 0.0, %v3899
  %3901 = vmatmul.f32.gmra.mxu0 %v3575
  %v3902 = vpop.f32.mrf.mxu0
  %v3903 = vadd.f32 0.0, %v3902
  %3904 = vmatmul.f32.gmra.mxu0 %v3578
  %v3905 = vpop.f32.mrf.mxu0
  %v3906 = vadd.f32 0.0, %v3905
  %3907 = vmatmul.f32.gmra.mxu0 %v3581
  %v3908 = vpop.f32.mrf.mxu0
  %v3909 = vadd.f32 0.0, %v3908
  %3910 = vmatmul.f32.gmra.mxu0 %v3584
  %v3911 = vpop.f32.mrf.mxu0
  %v3912 = vadd.f32 0.0, %v3911
  %3913 = vmatmul.f32.gmra.mxu0 %v3587
  %v3914 = vpop.f32.mrf.mxu0
  %v3915 = vadd.f32 0.0, %v3914
  %3916 = vmatmul.f32.gmra.mxu0 %v3590
  %v3917 = vpop.f32.mrf.mxu0
  %v3918 = vadd.f32 0.0, %v3917
  %3919 = vdwg.mxu0
  %3920 = vmatpush.msra.mxu0 0.0
  %3921 = vmatpush.msra.mxu0 0.0
  %3922 = vmatpush.msra.mxu0 0.0
  %3923 = vmatpush.msra.mxu0 0.0
  %3924 = vmatpush.msra.mxu0 0.0
  %3925 = vmatpush.msra.mxu0 0.0
  %3926 = vmatpush.msra.mxu0 0.0
  %3927 = vmatpush.msra.mxu0 0.0
  %3928 = vmatpush.msra.mxu0 0.0
  %3929 = vmatpush.msra.mxu0 0.0
  %3930 = vmatpush.msra.mxu0 0.0
  %3931 = vmatpush.msra.mxu0 0.0
  %3932 = vmatpush.msra.mxu0 0.0
  %3933 = vmatpush.msra.mxu0 0.0
  %3934 = vmatpush.msra.mxu0 %v3540
  %3935 = vmatpush.msra.mxu0 %v3528
  %3936 = vmatmul.f32.gmra.mxu0 %v3569
  %v3937 = vpop.f32.mrf.mxu0
  %v3938 = vadd.f32 0.0, %v3937
  %3939 = vmatmul.f32.gmra.mxu0 %v3572
  %v3940 = vpop.f32.mrf.mxu0
  %v3941 = vadd.f32 0.0, %v3940
  %3942 = vmatmul.f32.gmra.mxu0 %v3575
  %v3943 = vpop.f32.mrf.mxu0
  %v3944 = vadd.f32 0.0, %v3943
  %3945 = vmatmul.f32.gmra.mxu0 %v3578
  %v3946 = vpop.f32.mrf.mxu0
  %v3947 = vadd.f32 0.0, %v3946
  %3948 = vmatmul.f32.gmra.mxu0 %v3581
  %v3949 = vpop.f32.mrf.mxu0
  %v3950 = vadd.f32 0.0, %v3949
  %3951 = vmatmul.f32.gmra.mxu0 %v3584
  %v3952 = vpop.f32.mrf.mxu0
  %v3953 = vadd.f32 0.0, %v3952
  %3954 = vmatmul.f32.gmra.mxu0 %v3587
  %v3955 = vpop.f32.mrf.mxu0
  %v3956 = vadd.f32 0.0, %v3955
  %3957 = vmatmul.f32.gmra.mxu0 %v3590
  %v3958 = vpop.f32.mrf.mxu0
  %v3959 = vadd.f32 0.0, %v3958
  %3960 = vdwg.mxu0
  %3961 = vmatpush.msra.mxu0 0.0
  %3962 = vmatpush.msra.mxu0 0.0
  %3963 = vmatpush.msra.mxu0 0.0
  %3964 = vmatpush.msra.mxu0 0.0
  %3965 = vmatpush.msra.mxu0 0.0
  %3966 = vmatpush.msra.mxu0 0.0
  %3967 = vmatpush.msra.mxu0 0.0
  %3968 = vmatpush.msra.mxu0 0.0
  %3969 = vmatpush.msra.mxu0 0.0
  %3970 = vmatpush.msra.mxu0 0.0
  %3971 = vmatpush.msra.mxu0 0.0
  %3972 = vmatpush.msra.mxu0 0.0
  %3973 = vmatpush.msra.mxu0 0.0
  %3974 = vmatpush.msra.mxu0 0.0
  %3975 = vmatpush.msra.mxu0 %v3541
  %3976 = vmatpush.msra.mxu0 %v3529
  %3977 = vmatmul.f32.gmra.mxu0 %v3569
  %v3978 = vpop.f32.mrf.mxu0
  %v3979 = vadd.f32 0.0, %v3978
  %3980 = vmatmul.f32.gmra.mxu0 %v3572
  %v3981 = vpop.f32.mrf.mxu0
  %v3982 = vadd.f32 0.0, %v3981
  %3983 = vmatmul.f32.gmra.mxu0 %v3575
  %v3984 = vpop.f32.mrf.mxu0
  %v3985 = vadd.f32 0.0, %v3984
  %3986 = vmatmul.f32.gmra.mxu0 %v3578
  %v3987 = vpop.f32.mrf.mxu0
  %v3988 = vadd.f32 0.0, %v3987
  %3989 = vmatmul.f32.gmra.mxu0 %v3581
  %v3990 = vpop.f32.mrf.mxu0
  %v3991 = vadd.f32 0.0, %v3990
  %3992 = vmatmul.f32.gmra.mxu0 %v3584
  %v3993 = vpop.f32.mrf.mxu0
  %v3994 = vadd.f32 0.0, %v3993
  %3995 = vmatmul.f32.gmra.mxu0 %v3587
  %v3996 = vpop.f32.mrf.mxu0
  %v3997 = vadd.f32 0.0, %v3996
  %3998 = vmatmul.f32.gmra.mxu0 %v3590
  %v3999 = vpop.f32.mrf.mxu0
  %v4000 = vadd.f32 0.0, %v3999
  %4001 = vdwg.mxu0
  %4002 = vmatpush.msra.mxu0 0.0
  %4003 = vmatpush.msra.mxu0 0.0
  %4004 = vmatpush.msra.mxu0 0.0
  %4005 = vmatpush.msra.mxu0 0.0
  %4006 = vmatpush.msra.mxu0 0.0
  %4007 = vmatpush.msra.mxu0 0.0
  %4008 = vmatpush.msra.mxu0 0.0
  %4009 = vmatpush.msra.mxu0 0.0
  %4010 = vmatpush.msra.mxu0 0.0
  %4011 = vmatpush.msra.mxu0 0.0
  %4012 = vmatpush.msra.mxu0 0.0
  %4013 = vmatpush.msra.mxu0 0.0
  %4014 = vmatpush.msra.mxu0 0.0
  %4015 = vmatpush.msra.mxu0 0.0
  %4016 = vmatpush.msra.mxu0 %v3542
  %4017 = vmatpush.msra.mxu0 %v3530
  %4018 = vmatmul.f32.gmra.mxu0 %v3569
  %v4019 = vpop.f32.mrf.mxu0
  %v4020 = vadd.f32 0.0, %v4019
  %4021 = vmatmul.f32.gmra.mxu0 %v3572
  %v4022 = vpop.f32.mrf.mxu0
  %v4023 = vadd.f32 0.0, %v4022
  %4024 = vmatmul.f32.gmra.mxu0 %v3575
  %v4025 = vpop.f32.mrf.mxu0
  %v4026 = vadd.f32 0.0, %v4025
  %4027 = vmatmul.f32.gmra.mxu0 %v3578
  %v4028 = vpop.f32.mrf.mxu0
  %v4029 = vadd.f32 0.0, %v4028
  %4030 = vmatmul.f32.gmra.mxu0 %v3581
  %v4031 = vpop.f32.mrf.mxu0
  %v4032 = vadd.f32 0.0, %v4031
  %4033 = vmatmul.f32.gmra.mxu0 %v3584
  %v4034 = vpop.f32.mrf.mxu0
  %v4035 = vadd.f32 0.0, %v4034
  %4036 = vmatmul.f32.gmra.mxu0 %v3587
  %v4037 = vpop.f32.mrf.mxu0
  %v4038 = vadd.f32 0.0, %v4037
  %4039 = vmatmul.f32.gmra.mxu0 %v3590
  %v4040 = vpop.f32.mrf.mxu0
  %v4041 = vadd.f32 0.0, %v4040
  %4042 = vdwg.mxu0
  %4043 = vmatpush.msra.mxu0 0.0
  %4044 = vmatpush.msra.mxu0 0.0
  %4045 = vmatpush.msra.mxu0 0.0
  %4046 = vmatpush.msra.mxu0 0.0
  %4047 = vmatpush.msra.mxu0 0.0
  %4048 = vmatpush.msra.mxu0 0.0
  %4049 = vmatpush.msra.mxu0 0.0
  %4050 = vmatpush.msra.mxu0 0.0
  %4051 = vmatpush.msra.mxu0 0.0
  %4052 = vmatpush.msra.mxu0 0.0
  %4053 = vmatpush.msra.mxu0 0.0
  %4054 = vmatpush.msra.mxu0 0.0
  %4055 = vmatpush.msra.mxu0 0.0
  %4056 = vmatpush.msra.mxu0 0.0
  %4057 = vmatpush.msra.mxu0 %v3543
  %4058 = vmatpush.msra.mxu0 %v3531
  %4059 = vmatmul.f32.gmra.mxu0 %v3569
  %v4060 = vpop.f32.mrf.mxu0
  %v4061 = vadd.f32 0.0, %v4060
  %4062 = vmatmul.f32.gmra.mxu0 %v3572
  %v4063 = vpop.f32.mrf.mxu0
  %v4064 = vadd.f32 0.0, %v4063
  %4065 = vmatmul.f32.gmra.mxu0 %v3575
  %v4066 = vpop.f32.mrf.mxu0
  %v4067 = vadd.f32 0.0, %v4066
  %4068 = vmatmul.f32.gmra.mxu0 %v3578
  %v4069 = vpop.f32.mrf.mxu0
  %v4070 = vadd.f32 0.0, %v4069
  %4071 = vmatmul.f32.gmra.mxu0 %v3581
  %v4072 = vpop.f32.mrf.mxu0
  %v4073 = vadd.f32 0.0, %v4072
  %4074 = vmatmul.f32.gmra.mxu0 %v3584
  %v4075 = vpop.f32.mrf.mxu0
  %v4076 = vadd.f32 0.0, %v4075
  %4077 = vmatmul.f32.gmra.mxu0 %v3587
  %v4078 = vpop.f32.mrf.mxu0
  %v4079 = vadd.f32 0.0, %v4078
  %4080 = vmatmul.f32.gmra.mxu0 %v3590
  %v4081 = vpop.f32.mrf.mxu0
  %v4082 = vadd.f32 0.0, %v4081
  %4083 = vdwg.mxu0
  %v4084 = vadd.f32 %v2984, %v3610
  %v4085 = vadd.f32 %v3025, %v3651
  %v4086 = vadd.f32 %v3066, %v3692
  %v4087 = vadd.f32 %v3107, %v3733
  %v4088 = vadd.f32 %v3148, %v3774
  %v4089 = vadd.f32 %v3189, %v3815
  %v4090 = vadd.f32 %v3230, %v3856
  %v4091 = vadd.f32 %v3271, %v3897
  %v4092 = vadd.f32 %v3312, %v3938
  %v4093 = vadd.f32 %v3353, %v3979
  %v4094 = vadd.f32 %v3394, %v4020
  %v4095 = vadd.f32 %v3435, %v4061
  %v4096 = vadd.f32 %v2987, %v3613
  %v4097 = vadd.f32 %v3028, %v3654
  %v4098 = vadd.f32 %v3069, %v3695
  %v4099 = vadd.f32 %v3110, %v3736
  %v4100 = vadd.f32 %v3151, %v3777
  %v4101 = vadd.f32 %v3192, %v3818
  %v4102 = vadd.f32 %v3233, %v3859
  %v4103 = vadd.f32 %v3274, %v3900
  %v4104 = vadd.f32 %v3315, %v3941
  %v4105 = vadd.f32 %v3356, %v3982
  %v4106 = vadd.f32 %v3397, %v4023
  %v4107 = vadd.f32 %v3438, %v4064
  %v4108 = vadd.f32 %v2990, %v3616
  %v4109 = vadd.f32 %v3031, %v3657
  %v4110 = vadd.f32 %v3072, %v3698
  %v4111 = vadd.f32 %v3113, %v3739
  %v4112 = vadd.f32 %v3154, %v3780
  %v4113 = vadd.f32 %v3195, %v3821
  %v4114 = vadd.f32 %v3236, %v3862
  %v4115 = vadd.f32 %v3277, %v3903
  %v4116 = vadd.f32 %v3318, %v3944
  %v4117 = vadd.f32 %v3359, %v3985
  %v4118 = vadd.f32 %v3400, %v4026
  %v4119 = vadd.f32 %v3441, %v4067
  %v4120 = vadd.f32 %v2993, %v3619
  %v4121 = vadd.f32 %v3034, %v3660
  %v4122 = vadd.f32 %v3075, %v3701
  %v4123 = vadd.f32 %v3116, %v3742
  %v4124 = vadd.f32 %v3157, %v3783
  %v4125 = vadd.f32 %v3198, %v3824
  %v4126 = vadd.f32 %v3239, %v3865
  %v4127 = vadd.f32 %v3280, %v3906
  %v4128 = vadd.f32 %v3321, %v3947
  %v4129 = vadd.f32 %v3362, %v3988
  %v4130 = vadd.f32 %v3403, %v4029
  %v4131 = vadd.f32 %v3444, %v4070
  %v4132 = vadd.f32 %v2996, %v3622
  %v4133 = vadd.f32 %v3037, %v3663
  %v4134 = vadd.f32 %v3078, %v3704
  %v4135 = vadd.f32 %v3119, %v3745
  %v4136 = vadd.f32 %v3160, %v3786
  %v4137 = vadd.f32 %v3201, %v3827
  %v4138 = vadd.f32 %v3242, %v3868
  %v4139 = vadd.f32 %v3283, %v3909
  %v4140 = vadd.f32 %v3324, %v3950
  %v4141 = vadd.f32 %v3365, %v3991
  %v4142 = vadd.f32 %v3406, %v4032
  %v4143 = vadd.f32 %v3447, %v4073
  %v4144 = vadd.f32 %v2999, %v3625
  %v4145 = vadd.f32 %v3040, %v3666
  %v4146 = vadd.f32 %v3081, %v3707
  %v4147 = vadd.f32 %v3122, %v3748
  %v4148 = vadd.f32 %v3163, %v3789
  %v4149 = vadd.f32 %v3204, %v3830
  %v4150 = vadd.f32 %v3245, %v3871
  %v4151 = vadd.f32 %v3286, %v3912
  %v4152 = vadd.f32 %v3327, %v3953
  %v4153 = vadd.f32 %v3368, %v3994
  %v4154 = vadd.f32 %v3409, %v4035
  %v4155 = vadd.f32 %v3450, %v4076
  %v4156 = vadd.f32 %v3002, %v3628
  %v4157 = vadd.f32 %v3043, %v3669
  %v4158 = vadd.f32 %v3084, %v3710
  %v4159 = vadd.f32 %v3125, %v3751
  %v4160 = vadd.f32 %v3166, %v3792
  %v4161 = vadd.f32 %v3207, %v3833
  %v4162 = vadd.f32 %v3248, %v3874
  %v4163 = vadd.f32 %v3289, %v3915
  %v4164 = vadd.f32 %v3330, %v3956
  %v4165 = vadd.f32 %v3371, %v3997
  %v4166 = vadd.f32 %v3412, %v4038
  %v4167 = vadd.f32 %v3453, %v4079
  %v4168 = vadd.f32 %v3005, %v3631
  %v4169 = vadd.f32 %v3046, %v3672
  %v4170 = vadd.f32 %v3087, %v3713
  %v4171 = vadd.f32 %v3128, %v3754
  %v4172 = vadd.f32 %v3169, %v3795
  %v4173 = vadd.f32 %v3210, %v3836
  %v4174 = vadd.f32 %v3251, %v3877
  %v4175 = vadd.f32 %v3292, %v3918
  %v4176 = vadd.f32 %v3333, %v3959
  %v4177 = vadd.f32 %v3374, %v4000
  %v4178 = vadd.f32 %v3415, %v4041
  %v4179 = vadd.f32 %v3456, %v4082
  %s4180 = scalar_lea.vmem %s1, 384
  %v4181 = vld [vmem:[%s4180] sm:$0xff]
  %v4182 = vld [vmem:[%s4180 + $0x8] sm:$0xff]
  %v4183 = vld [vmem:[%s4180 + $0x10] sm:$0xff]
  %v4184 = vld [vmem:[%s4180 + $0x18] sm:$0xff]
  %v4185 = vld [vmem:[%s4180 + $0x20] sm:$0xff]
  %v4186 = vld [vmem:[%s4180 + $0x28] sm:$0xff]
  %v4187 = vld [vmem:[%s4180 + $0x30] sm:$0xff]
  %v4188 = vld [vmem:[%s4180 + $0x38] sm:$0xff]
  %s4189 = scalar_lea.vmem %s1, 448
  %v4190 = vld [vmem:[%s4189] sm:$0xff]
  %v4191 = vld [vmem:[%s4189 + $0x8] sm:$0xff]
  %v4192 = vld [vmem:[%s4189 + $0x10] sm:$0xff]
  %v4193 = vld [vmem:[%s4189 + $0x18] sm:$0xff]
  %v4194 = vld [vmem:[%s4189 + $0x20] sm:$0xff]
  %v4195 = vld [vmem:[%s4189 + $0x28] sm:$0xff]
  %v4196 = vld [vmem:[%s4189 + $0x30] sm:$0xff]
  %v4197 = vld [vmem:[%s4189 + $0x38] sm:$0xff]
  %4198 = vrot.lane.b32.xlu0 %v710, 91
  %v4199 = vpop.permute.xlu0 %4198
  %4200 = vrot.lane.b32.xlu0 %v711, 91
  %v4201 = vpop.permute.xlu0 %4200
  %4202 = vrot.lane.b32.xlu0 %v712, 91
  %v4203 = vpop.permute.xlu0 %4202
  %4204 = vrot.lane.b32.xlu0 %v713, 91
  %v4205 = vpop.permute.xlu0 %4204
  %4206 = vrot.lane.b32.xlu0 %v714, 91
  %v4207 = vpop.permute.xlu0 %4206
  %4208 = vrot.lane.b32.xlu0 %v715, 91
  %v4209 = vpop.permute.xlu0 %4208
  %4210 = vrot.lane.b32.xlu0 %v716, 91
  %v4211 = vpop.permute.xlu0 %4210
  %4212 = vrot.lane.b32.xlu0 %v717, 91
  %v4213 = vpop.permute.xlu0 %4212
  %4214 = vrot.lane.b32.xlu0 %v718, 91
  %v4215 = vpop.permute.xlu0 %4214
  %4216 = vrot.lane.b32.xlu0 %v719, 91
  %v4217 = vpop.permute.xlu0 %4216
  %4218 = vrot.lane.b32.xlu0 %v720, 91
  %v4219 = vpop.permute.xlu0 %4218
  %4220 = vrot.lane.b32.xlu0 %v721, 91
  %v4221 = vpop.permute.xlu0 %4220
  %4222 = vrot.lane.b32.xlu0 %v722, 91
  %v4223 = vpop.permute.xlu0 %4222
  %4224 = vrot.lane.b32.xlu0 %v723, 91
  %v4225 = vpop.permute.xlu0 %4224
  %4226 = vrot.lane.b32.xlu0 %v724, 91
  %v4227 = vpop.permute.xlu0 %4226
  %4228 = vrot.lane.b32.xlu0 %v725, 91
  %v4229 = vpop.permute.xlu0 %4228
  %4230 = vrot.lane.b32.xlu0 %v726, 91
  %v4231 = vpop.permute.xlu0 %4230
  %4232 = vrot.lane.b32.xlu0 %v727, 91
  %v4233 = vpop.permute.xlu0 %4232
  %4234 = vrot.lane.b32.xlu0 %v728, 91
  %v4235 = vpop.permute.xlu0 %4234
  %4236 = vrot.lane.b32.xlu0 %v729, 91
  %v4237 = vpop.permute.xlu0 %4236
  %4238 = vrot.lane.b32.xlu0 %v730, 91
  %v4239 = vpop.permute.xlu0 %4238
  %4240 = vrot.lane.b32.xlu0 %v731, 91
  %v4241 = vpop.permute.xlu0 %4240
  %4242 = vrot.lane.b32.xlu0 %v732, 91
  %v4243 = vpop.permute.xlu0 %4242
  %4244 = vrot.lane.b32.xlu0 %v733, 91
  %v4245 = vpop.permute.xlu0 %4244
  %4246 = vrot.lane.b32.xlu0 %v734, 91
  %v4247 = vpop.permute.xlu0 %4246
  %4248 = vrot.lane.b32.xlu0 %v735, 91
  %v4249 = vpop.permute.xlu0 %4248
  %vm4250 = vcmask 744448
  %v4251 = vsel %vm4250, %v4199, %v4201
  %v4252 = vsel %vm4250, %v4201, %v4203
  %v4253 = vsel %vm4250, %v4203, %v4205
  %v4254 = vsel %vm4250, %v4205, %v4207
  %v4255 = vsel %vm4250, %v4207, %v4209
  %v4256 = vsel %vm4250, %v4209, %v4211
  %v4257 = vsel %vm4250, %v4211, %v4213
  %v4258 = vsel %vm4250, %v4213, %v4215
  %v4259 = vsel %vm4250, %v4215, %v4217
  %v4260 = vsel %vm4250, %v4217, %v4219
  %v4261 = vsel %vm4250, %v4219, %v4221
  %v4262 = vsel %vm4250, %v4221, %v4223
  %v4263 = vsel %vm4250, %v4225, %v4227
  %v4264 = vsel %vm4250, %v4227, %v4229
  %v4265 = vsel %vm4250, %v4229, %v4231
  %v4266 = vsel %vm4250, %v4231, %v4233
  %v4267 = vsel %vm4250, %v4233, %v4235
  %v4268 = vsel %vm4250, %v4235, %v4237
  %v4269 = vsel %vm4250, %v4237, %v4239
  %v4270 = vsel %vm4250, %v4239, %v4241
  %v4271 = vsel %vm4250, %v4241, %v4243
  %v4272 = vsel %vm4250, %v4243, %v4245
  %v4273 = vsel %vm4250, %v4245, %v4247
  %v4274 = vsel %vm4250, %v4247, %v4249
  %v4300 = vsel %vm97, %v4190, 0
  %v4303 = vsel %vm97, %v4191, 0
  %v4306 = vsel %vm97, %v4192, 0
  %v4309 = vsel %vm97, %v4193, 0
  %v4312 = vsel %vm97, %v4194, 0
  %v4315 = vsel %vm97, %v4195, 0
  %v4318 = vsel %vm97, %v4196, 0
  %v4321 = vsel %vm97, %v4197, 0
  %4323 = vmatpush.msra.mxu0 0.0
  %4324 = vmatpush.msra.mxu0 0.0
  %4325 = vmatpush.msra.mxu0 0.0
  %4326 = vmatpush.msra.mxu0 0.0
  %4327 = vmatpush.msra.mxu0 0.0
  %4328 = vmatpush.msra.mxu0 0.0
  %4329 = vmatpush.msra.mxu0 0.0
  %4330 = vmatpush.msra.mxu0 0.0
  %4331 = vmatpush.msra.mxu0 0.0
  %4332 = vmatpush.msra.mxu0 0.0
  %4333 = vmatpush.msra.mxu0 0.0
  %4334 = vmatpush.msra.mxu0 0.0
  %4335 = vmatpush.msra.mxu0 0.0
  %4336 = vmatpush.msra.mxu0 0.0
  %4337 = vmatpush.msra.mxu0 %v4263
  %4338 = vmatpush.msra.mxu0 %v4251
  %4339 = vmatmul.f32.gmra.mxu0 %v4300
  %v4340 = vpop.f32.mrf.mxu0
  %v4341 = vadd.f32 0.0, %v4340
  %4342 = vmatmul.f32.gmra.mxu0 %v4303
  %v4343 = vpop.f32.mrf.mxu0
  %v4344 = vadd.f32 0.0, %v4343
  %4345 = vmatmul.f32.gmra.mxu0 %v4306
  %v4346 = vpop.f32.mrf.mxu0
  %v4347 = vadd.f32 0.0, %v4346
  %4348 = vmatmul.f32.gmra.mxu0 %v4309
  %v4349 = vpop.f32.mrf.mxu0
  %v4350 = vadd.f32 0.0, %v4349
  %4351 = vmatmul.f32.gmra.mxu0 %v4312
  %v4352 = vpop.f32.mrf.mxu0
  %v4353 = vadd.f32 0.0, %v4352
  %4354 = vmatmul.f32.gmra.mxu0 %v4315
  %v4355 = vpop.f32.mrf.mxu0
  %v4356 = vadd.f32 0.0, %v4355
  %4357 = vmatmul.f32.gmra.mxu0 %v4318
  %v4358 = vpop.f32.mrf.mxu0
  %v4359 = vadd.f32 0.0, %v4358
  %4360 = vmatmul.f32.gmra.mxu0 %v4321
  %v4361 = vpop.f32.mrf.mxu0
  %v4362 = vadd.f32 0.0, %v4361
  %4363 = vdwg.mxu0
  %4364 = vmatpush.msra.mxu0 0.0
  %4365 = vmatpush.msra.mxu0 0.0
  %4366 = vmatpush.msra.mxu0 0.0
  %4367 = vmatpush.msra.mxu0 0.0
  %4368 = vmatpush.msra.mxu0 0.0
  %4369 = vmatpush.msra.mxu0 0.0
  %4370 = vmatpush.msra.mxu0 0.0
  %4371 = vmatpush.msra.mxu0 0.0
  %4372 = vmatpush.msra.mxu0 0.0
  %4373 = vmatpush.msra.mxu0 0.0
  %4374 = vmatpush.msra.mxu0 0.0
  %4375 = vmatpush.msra.mxu0 0.0
  %4376 = vmatpush.msra.mxu0 0.0
  %4377 = vmatpush.msra.mxu0 0.0
  %4378 = vmatpush.msra.mxu0 %v4264
  %4379 = vmatpush.msra.mxu0 %v4252
  %4380 = vmatmul.f32.gmra.mxu0 %v4300
  %v4381 = vpop.f32.mrf.mxu0
  %v4382 = vadd.f32 0.0, %v4381
  %4383 = vmatmul.f32.gmra.mxu0 %v4303
  %v4384 = vpop.f32.mrf.mxu0
  %v4385 = vadd.f32 0.0, %v4384
  %4386 = vmatmul.f32.gmra.mxu0 %v4306
  %v4387 = vpop.f32.mrf.mxu0
  %v4388 = vadd.f32 0.0, %v4387
  %4389 = vmatmul.f32.gmra.mxu0 %v4309
  %v4390 = vpop.f32.mrf.mxu0
  %v4391 = vadd.f32 0.0, %v4390
  %4392 = vmatmul.f32.gmra.mxu0 %v4312
  %v4393 = vpop.f32.mrf.mxu0
  %v4394 = vadd.f32 0.0, %v4393
  %4395 = vmatmul.f32.gmra.mxu0 %v4315
  %v4396 = vpop.f32.mrf.mxu0
  %v4397 = vadd.f32 0.0, %v4396
  %4398 = vmatmul.f32.gmra.mxu0 %v4318
  %v4399 = vpop.f32.mrf.mxu0
  %v4400 = vadd.f32 0.0, %v4399
  %4401 = vmatmul.f32.gmra.mxu0 %v4321
  %v4402 = vpop.f32.mrf.mxu0
  %v4403 = vadd.f32 0.0, %v4402
  %4404 = vdwg.mxu0
  %4405 = vmatpush.msra.mxu0 0.0
  %4406 = vmatpush.msra.mxu0 0.0
  %4407 = vmatpush.msra.mxu0 0.0
  %4408 = vmatpush.msra.mxu0 0.0
  %4409 = vmatpush.msra.mxu0 0.0
  %4410 = vmatpush.msra.mxu0 0.0
  %4411 = vmatpush.msra.mxu0 0.0
  %4412 = vmatpush.msra.mxu0 0.0
  %4413 = vmatpush.msra.mxu0 0.0
  %4414 = vmatpush.msra.mxu0 0.0
  %4415 = vmatpush.msra.mxu0 0.0
  %4416 = vmatpush.msra.mxu0 0.0
  %4417 = vmatpush.msra.mxu0 0.0
  %4418 = vmatpush.msra.mxu0 0.0
  %4419 = vmatpush.msra.mxu0 %v4265
  %4420 = vmatpush.msra.mxu0 %v4253
  %4421 = vmatmul.f32.gmra.mxu0 %v4300
  %v4422 = vpop.f32.mrf.mxu0
  %v4423 = vadd.f32 0.0, %v4422
  %4424 = vmatmul.f32.gmra.mxu0 %v4303
  %v4425 = vpop.f32.mrf.mxu0
  %v4426 = vadd.f32 0.0, %v4425
  %4427 = vmatmul.f32.gmra.mxu0 %v4306
  %v4428 = vpop.f32.mrf.mxu0
  %v4429 = vadd.f32 0.0, %v4428
  %4430 = vmatmul.f32.gmra.mxu0 %v4309
  %v4431 = vpop.f32.mrf.mxu0
  %v4432 = vadd.f32 0.0, %v4431
  %4433 = vmatmul.f32.gmra.mxu0 %v4312
  %v4434 = vpop.f32.mrf.mxu0
  %v4435 = vadd.f32 0.0, %v4434
  %4436 = vmatmul.f32.gmra.mxu0 %v4315
  %v4437 = vpop.f32.mrf.mxu0
  %v4438 = vadd.f32 0.0, %v4437
  %4439 = vmatmul.f32.gmra.mxu0 %v4318
  %v4440 = vpop.f32.mrf.mxu0
  %v4441 = vadd.f32 0.0, %v4440
  %4442 = vmatmul.f32.gmra.mxu0 %v4321
  %v4443 = vpop.f32.mrf.mxu0
  %v4444 = vadd.f32 0.0, %v4443
  %4445 = vdwg.mxu0
  %4446 = vmatpush.msra.mxu0 0.0
  %4447 = vmatpush.msra.mxu0 0.0
  %4448 = vmatpush.msra.mxu0 0.0
  %4449 = vmatpush.msra.mxu0 0.0
  %4450 = vmatpush.msra.mxu0 0.0
  %4451 = vmatpush.msra.mxu0 0.0
  %4452 = vmatpush.msra.mxu0 0.0
  %4453 = vmatpush.msra.mxu0 0.0
  %4454 = vmatpush.msra.mxu0 0.0
  %4455 = vmatpush.msra.mxu0 0.0
  %4456 = vmatpush.msra.mxu0 0.0
  %4457 = vmatpush.msra.mxu0 0.0
  %4458 = vmatpush.msra.mxu0 0.0
  %4459 = vmatpush.msra.mxu0 0.0
  %4460 = vmatpush.msra.mxu0 %v4266
  %4461 = vmatpush.msra.mxu0 %v4254
  %4462 = vmatmul.f32.gmra.mxu0 %v4300
  %v4463 = vpop.f32.mrf.mxu0
  %v4464 = vadd.f32 0.0, %v4463
  %4465 = vmatmul.f32.gmra.mxu0 %v4303
  %v4466 = vpop.f32.mrf.mxu0
  %v4467 = vadd.f32 0.0, %v4466
  %4468 = vmatmul.f32.gmra.mxu0 %v4306
  %v4469 = vpop.f32.mrf.mxu0
  %v4470 = vadd.f32 0.0, %v4469
  %4471 = vmatmul.f32.gmra.mxu0 %v4309
  %v4472 = vpop.f32.mrf.mxu0
  %v4473 = vadd.f32 0.0, %v4472
  %4474 = vmatmul.f32.gmra.mxu0 %v4312
  %v4475 = vpop.f32.mrf.mxu0
  %v4476 = vadd.f32 0.0, %v4475
  %4477 = vmatmul.f32.gmra.mxu0 %v4315
  %v4478 = vpop.f32.mrf.mxu0
  %v4479 = vadd.f32 0.0, %v4478
  %4480 = vmatmul.f32.gmra.mxu0 %v4318
  %v4481 = vpop.f32.mrf.mxu0
  %v4482 = vadd.f32 0.0, %v4481
  %4483 = vmatmul.f32.gmra.mxu0 %v4321
  %v4484 = vpop.f32.mrf.mxu0
  %v4485 = vadd.f32 0.0, %v4484
  %4486 = vdwg.mxu0
  %4487 = vmatpush.msra.mxu0 0.0
  %4488 = vmatpush.msra.mxu0 0.0
  %4489 = vmatpush.msra.mxu0 0.0
  %4490 = vmatpush.msra.mxu0 0.0
  %4491 = vmatpush.msra.mxu0 0.0
  %4492 = vmatpush.msra.mxu0 0.0
  %4493 = vmatpush.msra.mxu0 0.0
  %4494 = vmatpush.msra.mxu0 0.0
  %4495 = vmatpush.msra.mxu0 0.0
  %4496 = vmatpush.msra.mxu0 0.0
  %4497 = vmatpush.msra.mxu0 0.0
  %4498 = vmatpush.msra.mxu0 0.0
  %4499 = vmatpush.msra.mxu0 0.0
  %4500 = vmatpush.msra.mxu0 0.0
  %4501 = vmatpush.msra.mxu0 %v4267
  %4502 = vmatpush.msra.mxu0 %v4255
  %4503 = vmatmul.f32.gmra.mxu0 %v4300
  %v4504 = vpop.f32.mrf.mxu0
  %v4505 = vadd.f32 0.0, %v4504
  %4506 = vmatmul.f32.gmra.mxu0 %v4303
  %v4507 = vpop.f32.mrf.mxu0
  %v4508 = vadd.f32 0.0, %v4507
  %4509 = vmatmul.f32.gmra.mxu0 %v4306
  %v4510 = vpop.f32.mrf.mxu0
  %v4511 = vadd.f32 0.0, %v4510
  %4512 = vmatmul.f32.gmra.mxu0 %v4309
  %v4513 = vpop.f32.mrf.mxu0
  %v4514 = vadd.f32 0.0, %v4513
  %4515 = vmatmul.f32.gmra.mxu0 %v4312
  %v4516 = vpop.f32.mrf.mxu0
  %v4517 = vadd.f32 0.0, %v4516
  %4518 = vmatmul.f32.gmra.mxu0 %v4315
  %v4519 = vpop.f32.mrf.mxu0
  %v4520 = vadd.f32 0.0, %v4519
  %4521 = vmatmul.f32.gmra.mxu0 %v4318
  %v4522 = vpop.f32.mrf.mxu0
  %v4523 = vadd.f32 0.0, %v4522
  %4524 = vmatmul.f32.gmra.mxu0 %v4321
  %v4525 = vpop.f32.mrf.mxu0
  %v4526 = vadd.f32 0.0, %v4525
  %4527 = vdwg.mxu0
  %4528 = vmatpush.msra.mxu0 0.0
  %4529 = vmatpush.msra.mxu0 0.0
  %4530 = vmatpush.msra.mxu0 0.0
  %4531 = vmatpush.msra.mxu0 0.0
  %4532 = vmatpush.msra.mxu0 0.0
  %4533 = vmatpush.msra.mxu0 0.0
  %4534 = vmatpush.msra.mxu0 0.0
  %4535 = vmatpush.msra.mxu0 0.0
  %4536 = vmatpush.msra.mxu0 0.0
  %4537 = vmatpush.msra.mxu0 0.0
  %4538 = vmatpush.msra.mxu0 0.0
  %4539 = vmatpush.msra.mxu0 0.0
  %4540 = vmatpush.msra.mxu0 0.0
  %4541 = vmatpush.msra.mxu0 0.0
  %4542 = vmatpush.msra.mxu0 %v4268
  %4543 = vmatpush.msra.mxu0 %v4256
  %4544 = vmatmul.f32.gmra.mxu0 %v4300
  %v4545 = vpop.f32.mrf.mxu0
  %v4546 = vadd.f32 0.0, %v4545
  %4547 = vmatmul.f32.gmra.mxu0 %v4303
  %v4548 = vpop.f32.mrf.mxu0
  %v4549 = vadd.f32 0.0, %v4548
  %4550 = vmatmul.f32.gmra.mxu0 %v4306
  %v4551 = vpop.f32.mrf.mxu0
  %v4552 = vadd.f32 0.0, %v4551
  %4553 = vmatmul.f32.gmra.mxu0 %v4309
  %v4554 = vpop.f32.mrf.mxu0
  %v4555 = vadd.f32 0.0, %v4554
  %4556 = vmatmul.f32.gmra.mxu0 %v4312
  %v4557 = vpop.f32.mrf.mxu0
  %v4558 = vadd.f32 0.0, %v4557
  %4559 = vmatmul.f32.gmra.mxu0 %v4315
  %v4560 = vpop.f32.mrf.mxu0
  %v4561 = vadd.f32 0.0, %v4560
  %4562 = vmatmul.f32.gmra.mxu0 %v4318
  %v4563 = vpop.f32.mrf.mxu0
  %v4564 = vadd.f32 0.0, %v4563
  %4565 = vmatmul.f32.gmra.mxu0 %v4321
  %v4566 = vpop.f32.mrf.mxu0
  %v4567 = vadd.f32 0.0, %v4566
  %4568 = vdwg.mxu0
  %4569 = vmatpush.msra.mxu0 0.0
  %4570 = vmatpush.msra.mxu0 0.0
  %4571 = vmatpush.msra.mxu0 0.0
  %4572 = vmatpush.msra.mxu0 0.0
  %4573 = vmatpush.msra.mxu0 0.0
  %4574 = vmatpush.msra.mxu0 0.0
  %4575 = vmatpush.msra.mxu0 0.0
  %4576 = vmatpush.msra.mxu0 0.0
  %4577 = vmatpush.msra.mxu0 0.0
  %4578 = vmatpush.msra.mxu0 0.0
  %4579 = vmatpush.msra.mxu0 0.0
  %4580 = vmatpush.msra.mxu0 0.0
  %4581 = vmatpush.msra.mxu0 0.0
  %4582 = vmatpush.msra.mxu0 0.0
  %4583 = vmatpush.msra.mxu0 %v4269
  %4584 = vmatpush.msra.mxu0 %v4257
  %4585 = vmatmul.f32.gmra.mxu0 %v4300
  %v4586 = vpop.f32.mrf.mxu0
  %v4587 = vadd.f32 0.0, %v4586
  %4588 = vmatmul.f32.gmra.mxu0 %v4303
  %v4589 = vpop.f32.mrf.mxu0
  %v4590 = vadd.f32 0.0, %v4589
  %4591 = vmatmul.f32.gmra.mxu0 %v4306
  %v4592 = vpop.f32.mrf.mxu0
  %v4593 = vadd.f32 0.0, %v4592
  %4594 = vmatmul.f32.gmra.mxu0 %v4309
  %v4595 = vpop.f32.mrf.mxu0
  %v4596 = vadd.f32 0.0, %v4595
  %4597 = vmatmul.f32.gmra.mxu0 %v4312
  %v4598 = vpop.f32.mrf.mxu0
  %v4599 = vadd.f32 0.0, %v4598
  %4600 = vmatmul.f32.gmra.mxu0 %v4315
  %v4601 = vpop.f32.mrf.mxu0
  %v4602 = vadd.f32 0.0, %v4601
  %4603 = vmatmul.f32.gmra.mxu0 %v4318
  %v4604 = vpop.f32.mrf.mxu0
  %v4605 = vadd.f32 0.0, %v4604
  %4606 = vmatmul.f32.gmra.mxu0 %v4321
  %v4607 = vpop.f32.mrf.mxu0
  %v4608 = vadd.f32 0.0, %v4607
  %4609 = vdwg.mxu0
  %4610 = vmatpush.msra.mxu0 0.0
  %4611 = vmatpush.msra.mxu0 0.0
  %4612 = vmatpush.msra.mxu0 0.0
  %4613 = vmatpush.msra.mxu0 0.0
  %4614 = vmatpush.msra.mxu0 0.0
  %4615 = vmatpush.msra.mxu0 0.0
  %4616 = vmatpush.msra.mxu0 0.0
  %4617 = vmatpush.msra.mxu0 0.0
  %4618 = vmatpush.msra.mxu0 0.0
  %4619 = vmatpush.msra.mxu0 0.0
  %4620 = vmatpush.msra.mxu0 0.0
  %4621 = vmatpush.msra.mxu0 0.0
  %4622 = vmatpush.msra.mxu0 0.0
  %4623 = vmatpush.msra.mxu0 0.0
  %4624 = vmatpush.msra.mxu0 %v4270
  %4625 = vmatpush.msra.mxu0 %v4258
  %4626 = vmatmul.f32.gmra.mxu0 %v4300
  %v4627 = vpop.f32.mrf.mxu0
  %v4628 = vadd.f32 0.0, %v4627
  %4629 = vmatmul.f32.gmra.mxu0 %v4303
  %v4630 = vpop.f32.mrf.mxu0
  %v4631 = vadd.f32 0.0, %v4630
  %4632 = vmatmul.f32.gmra.mxu0 %v4306
  %v4633 = vpop.f32.mrf.mxu0
  %v4634 = vadd.f32 0.0, %v4633
  %4635 = vmatmul.f32.gmra.mxu0 %v4309
  %v4636 = vpop.f32.mrf.mxu0
  %v4637 = vadd.f32 0.0, %v4636
  %4638 = vmatmul.f32.gmra.mxu0 %v4312
  %v4639 = vpop.f32.mrf.mxu0
  %v4640 = vadd.f32 0.0, %v4639
  %4641 = vmatmul.f32.gmra.mxu0 %v4315
  %v4642 = vpop.f32.mrf.mxu0
  %v4643 = vadd.f32 0.0, %v4642
  %4644 = vmatmul.f32.gmra.mxu0 %v4318
  %v4645 = vpop.f32.mrf.mxu0
  %v4646 = vadd.f32 0.0, %v4645
  %4647 = vmatmul.f32.gmra.mxu0 %v4321
  %v4648 = vpop.f32.mrf.mxu0
  %v4649 = vadd.f32 0.0, %v4648
  %4650 = vdwg.mxu0
  %4651 = vmatpush.msra.mxu0 0.0
  %4652 = vmatpush.msra.mxu0 0.0
  %4653 = vmatpush.msra.mxu0 0.0
  %4654 = vmatpush.msra.mxu0 0.0
  %4655 = vmatpush.msra.mxu0 0.0
  %4656 = vmatpush.msra.mxu0 0.0
  %4657 = vmatpush.msra.mxu0 0.0
  %4658 = vmatpush.msra.mxu0 0.0
  %4659 = vmatpush.msra.mxu0 0.0
  %4660 = vmatpush.msra.mxu0 0.0
  %4661 = vmatpush.msra.mxu0 0.0
  %4662 = vmatpush.msra.mxu0 0.0
  %4663 = vmatpush.msra.mxu0 0.0
  %4664 = vmatpush.msra.mxu0 0.0
  %4665 = vmatpush.msra.mxu0 %v4271
  %4666 = vmatpush.msra.mxu0 %v4259
  %4667 = vmatmul.f32.gmra.mxu0 %v4300
  %v4668 = vpop.f32.mrf.mxu0
  %v4669 = vadd.f32 0.0, %v4668
  %4670 = vmatmul.f32.gmra.mxu0 %v4303
  %v4671 = vpop.f32.mrf.mxu0
  %v4672 = vadd.f32 0.0, %v4671
  %4673 = vmatmul.f32.gmra.mxu0 %v4306
  %v4674 = vpop.f32.mrf.mxu0
  %v4675 = vadd.f32 0.0, %v4674
  %4676 = vmatmul.f32.gmra.mxu0 %v4309
  %v4677 = vpop.f32.mrf.mxu0
  %v4678 = vadd.f32 0.0, %v4677
  %4679 = vmatmul.f32.gmra.mxu0 %v4312
  %v4680 = vpop.f32.mrf.mxu0
  %v4681 = vadd.f32 0.0, %v4680
  %4682 = vmatmul.f32.gmra.mxu0 %v4315
  %v4683 = vpop.f32.mrf.mxu0
  %v4684 = vadd.f32 0.0, %v4683
  %4685 = vmatmul.f32.gmra.mxu0 %v4318
  %v4686 = vpop.f32.mrf.mxu0
  %v4687 = vadd.f32 0.0, %v4686
  %4688 = vmatmul.f32.gmra.mxu0 %v4321
  %v4689 = vpop.f32.mrf.mxu0
  %v4690 = vadd.f32 0.0, %v4689
  %4691 = vdwg.mxu0
  %4692 = vmatpush.msra.mxu0 0.0
  %4693 = vmatpush.msra.mxu0 0.0
  %4694 = vmatpush.msra.mxu0 0.0
  %4695 = vmatpush.msra.mxu0 0.0
  %4696 = vmatpush.msra.mxu0 0.0
  %4697 = vmatpush.msra.mxu0 0.0
  %4698 = vmatpush.msra.mxu0 0.0
  %4699 = vmatpush.msra.mxu0 0.0
  %4700 = vmatpush.msra.mxu0 0.0
  %4701 = vmatpush.msra.mxu0 0.0
  %4702 = vmatpush.msra.mxu0 0.0
  %4703 = vmatpush.msra.mxu0 0.0
  %4704 = vmatpush.msra.mxu0 0.0
  %4705 = vmatpush.msra.mxu0 0.0
  %4706 = vmatpush.msra.mxu0 %v4272
  %4707 = vmatpush.msra.mxu0 %v4260
  %4708 = vmatmul.f32.gmra.mxu0 %v4300
  %v4709 = vpop.f32.mrf.mxu0
  %v4710 = vadd.f32 0.0, %v4709
  %4711 = vmatmul.f32.gmra.mxu0 %v4303
  %v4712 = vpop.f32.mrf.mxu0
  %v4713 = vadd.f32 0.0, %v4712
  %4714 = vmatmul.f32.gmra.mxu0 %v4306
  %v4715 = vpop.f32.mrf.mxu0
  %v4716 = vadd.f32 0.0, %v4715
  %4717 = vmatmul.f32.gmra.mxu0 %v4309
  %v4718 = vpop.f32.mrf.mxu0
  %v4719 = vadd.f32 0.0, %v4718
  %4720 = vmatmul.f32.gmra.mxu0 %v4312
  %v4721 = vpop.f32.mrf.mxu0
  %v4722 = vadd.f32 0.0, %v4721
  %4723 = vmatmul.f32.gmra.mxu0 %v4315
  %v4724 = vpop.f32.mrf.mxu0
  %v4725 = vadd.f32 0.0, %v4724
  %4726 = vmatmul.f32.gmra.mxu0 %v4318
  %v4727 = vpop.f32.mrf.mxu0
  %v4728 = vadd.f32 0.0, %v4727
  %4729 = vmatmul.f32.gmra.mxu0 %v4321
  %v4730 = vpop.f32.mrf.mxu0
  %v4731 = vadd.f32 0.0, %v4730
  %4732 = vdwg.mxu0
  %4733 = vmatpush.msra.mxu0 0.0
  %4734 = vmatpush.msra.mxu0 0.0
  %4735 = vmatpush.msra.mxu0 0.0
  %4736 = vmatpush.msra.mxu0 0.0
  %4737 = vmatpush.msra.mxu0 0.0
  %4738 = vmatpush.msra.mxu0 0.0
  %4739 = vmatpush.msra.mxu0 0.0
  %4740 = vmatpush.msra.mxu0 0.0
  %4741 = vmatpush.msra.mxu0 0.0
  %4742 = vmatpush.msra.mxu0 0.0
  %4743 = vmatpush.msra.mxu0 0.0
  %4744 = vmatpush.msra.mxu0 0.0
  %4745 = vmatpush.msra.mxu0 0.0
  %4746 = vmatpush.msra.mxu0 0.0
  %4747 = vmatpush.msra.mxu0 %v4273
  %4748 = vmatpush.msra.mxu0 %v4261
  %4749 = vmatmul.f32.gmra.mxu0 %v4300
  %v4750 = vpop.f32.mrf.mxu0
  %v4751 = vadd.f32 0.0, %v4750
  %4752 = vmatmul.f32.gmra.mxu0 %v4303
  %v4753 = vpop.f32.mrf.mxu0
  %v4754 = vadd.f32 0.0, %v4753
  %4755 = vmatmul.f32.gmra.mxu0 %v4306
  %v4756 = vpop.f32.mrf.mxu0
  %v4757 = vadd.f32 0.0, %v4756
  %4758 = vmatmul.f32.gmra.mxu0 %v4309
  %v4759 = vpop.f32.mrf.mxu0
  %v4760 = vadd.f32 0.0, %v4759
  %4761 = vmatmul.f32.gmra.mxu0 %v4312
  %v4762 = vpop.f32.mrf.mxu0
  %v4763 = vadd.f32 0.0, %v4762
  %4764 = vmatmul.f32.gmra.mxu0 %v4315
  %v4765 = vpop.f32.mrf.mxu0
  %v4766 = vadd.f32 0.0, %v4765
  %4767 = vmatmul.f32.gmra.mxu0 %v4318
  %v4768 = vpop.f32.mrf.mxu0
  %v4769 = vadd.f32 0.0, %v4768
  %4770 = vmatmul.f32.gmra.mxu0 %v4321
  %v4771 = vpop.f32.mrf.mxu0
  %v4772 = vadd.f32 0.0, %v4771
  %4773 = vdwg.mxu0
  %4774 = vmatpush.msra.mxu0 0.0
  %4775 = vmatpush.msra.mxu0 0.0
  %4776 = vmatpush.msra.mxu0 0.0
  %4777 = vmatpush.msra.mxu0 0.0
  %4778 = vmatpush.msra.mxu0 0.0
  %4779 = vmatpush.msra.mxu0 0.0
  %4780 = vmatpush.msra.mxu0 0.0
  %4781 = vmatpush.msra.mxu0 0.0
  %4782 = vmatpush.msra.mxu0 0.0
  %4783 = vmatpush.msra.mxu0 0.0
  %4784 = vmatpush.msra.mxu0 0.0
  %4785 = vmatpush.msra.mxu0 0.0
  %4786 = vmatpush.msra.mxu0 0.0
  %4787 = vmatpush.msra.mxu0 0.0
  %4788 = vmatpush.msra.mxu0 %v4274
  %4789 = vmatpush.msra.mxu0 %v4262
  %4790 = vmatmul.f32.gmra.mxu0 %v4300
  %v4791 = vpop.f32.mrf.mxu0
  %v4792 = vadd.f32 0.0, %v4791
  %4793 = vmatmul.f32.gmra.mxu0 %v4303
  %v4794 = vpop.f32.mrf.mxu0
  %v4795 = vadd.f32 0.0, %v4794
  %4796 = vmatmul.f32.gmra.mxu0 %v4306
  %v4797 = vpop.f32.mrf.mxu0
  %v4798 = vadd.f32 0.0, %v4797
  %4799 = vmatmul.f32.gmra.mxu0 %v4309
  %v4800 = vpop.f32.mrf.mxu0
  %v4801 = vadd.f32 0.0, %v4800
  %4802 = vmatmul.f32.gmra.mxu0 %v4312
  %v4803 = vpop.f32.mrf.mxu0
  %v4804 = vadd.f32 0.0, %v4803
  %4805 = vmatmul.f32.gmra.mxu0 %v4315
  %v4806 = vpop.f32.mrf.mxu0
  %v4807 = vadd.f32 0.0, %v4806
  %4808 = vmatmul.f32.gmra.mxu0 %v4318
  %v4809 = vpop.f32.mrf.mxu0
  %v4810 = vadd.f32 0.0, %v4809
  %4811 = vmatmul.f32.gmra.mxu0 %v4321
  %v4812 = vpop.f32.mrf.mxu0
  %v4813 = vadd.f32 0.0, %v4812
  %4814 = vdwg.mxu0
  %4815 = vrot.lane.b32.xlu0 %v710, 92
  %v4816 = vpop.permute.xlu0 %4815
  %4817 = vrot.lane.b32.xlu0 %v711, 92
  %v4818 = vpop.permute.xlu0 %4817
  %4819 = vrot.lane.b32.xlu0 %v712, 92
  %v4820 = vpop.permute.xlu0 %4819
  %4821 = vrot.lane.b32.xlu0 %v713, 92
  %v4822 = vpop.permute.xlu0 %4821
  %4823 = vrot.lane.b32.xlu0 %v714, 92
  %v4824 = vpop.permute.xlu0 %4823
  %4825 = vrot.lane.b32.xlu0 %v715, 92
  %v4826 = vpop.permute.xlu0 %4825
  %4827 = vrot.lane.b32.xlu0 %v716, 92
  %v4828 = vpop.permute.xlu0 %4827
  %4829 = vrot.lane.b32.xlu0 %v717, 92
  %v4830 = vpop.permute.xlu0 %4829
  %4831 = vrot.lane.b32.xlu0 %v718, 92
  %v4832 = vpop.permute.xlu0 %4831
  %4833 = vrot.lane.b32.xlu0 %v719, 92
  %v4834 = vpop.permute.xlu0 %4833
  %4835 = vrot.lane.b32.xlu0 %v720, 92
  %v4836 = vpop.permute.xlu0 %4835
  %4837 = vrot.lane.b32.xlu0 %v721, 92
  %v4838 = vpop.permute.xlu0 %4837
  %4839 = vrot.lane.b32.xlu0 %v722, 92
  %v4840 = vpop.permute.xlu0 %4839
  %4841 = vrot.lane.b32.xlu0 %v723, 92
  %v4842 = vpop.permute.xlu0 %4841
  %4843 = vrot.lane.b32.xlu0 %v724, 92
  %v4844 = vpop.permute.xlu0 %4843
  %4845 = vrot.lane.b32.xlu0 %v725, 92
  %v4846 = vpop.permute.xlu0 %4845
  %4847 = vrot.lane.b32.xlu0 %v726, 92
  %v4848 = vpop.permute.xlu0 %4847
  %4849 = vrot.lane.b32.xlu0 %v727, 92
  %v4850 = vpop.permute.xlu0 %4849
  %4851 = vrot.lane.b32.xlu0 %v728, 92
  %v4852 = vpop.permute.xlu0 %4851
  %4853 = vrot.lane.b32.xlu0 %v729, 92
  %v4854 = vpop.permute.xlu0 %4853
  %4855 = vrot.lane.b32.xlu0 %v730, 92
  %v4856 = vpop.permute.xlu0 %4855
  %4857 = vrot.lane.b32.xlu0 %v731, 92
  %v4858 = vpop.permute.xlu0 %4857
  %4859 = vrot.lane.b32.xlu0 %v732, 92
  %v4860 = vpop.permute.xlu0 %4859
  %4861 = vrot.lane.b32.xlu0 %v733, 92
  %v4862 = vpop.permute.xlu0 %4861
  %4863 = vrot.lane.b32.xlu0 %v734, 92
  %v4864 = vpop.permute.xlu0 %4863
  %4865 = vrot.lane.b32.xlu0 %v735, 92
  %v4866 = vpop.permute.xlu0 %4865
  %vm4867 = vcmask 752640
  %v4868 = vsel %vm4867, %v4816, %v4818
  %v4869 = vsel %vm4867, %v4818, %v4820
  %v4870 = vsel %vm4867, %v4820, %v4822
  %v4871 = vsel %vm4867, %v4822, %v4824
  %v4872 = vsel %vm4867, %v4824, %v4826
  %v4873 = vsel %vm4867, %v4826, %v4828
  %v4874 = vsel %vm4867, %v4828, %v4830
  %v4875 = vsel %vm4867, %v4830, %v4832
  %v4876 = vsel %vm4867, %v4832, %v4834
  %v4877 = vsel %vm4867, %v4834, %v4836
  %v4878 = vsel %vm4867, %v4836, %v4838
  %v4879 = vsel %vm4867, %v4838, %v4840
  %v4880 = vsel %vm4867, %v4842, %v4844
  %v4881 = vsel %vm4867, %v4844, %v4846
  %v4882 = vsel %vm4867, %v4846, %v4848
  %v4883 = vsel %vm4867, %v4848, %v4850
  %v4884 = vsel %vm4867, %v4850, %v4852
  %v4885 = vsel %vm4867, %v4852, %v4854
  %v4886 = vsel %vm4867, %v4854, %v4856
  %v4887 = vsel %vm4867, %v4856, %v4858
  %v4888 = vsel %vm4867, %v4858, %v4860
  %v4889 = vsel %vm4867, %v4860, %v4862
  %v4890 = vsel %vm4867, %v4862, %v4864
  %v4891 = vsel %vm4867, %v4864, %v4866
  %v4917 = vsel %vm97, %v4181, 0
  %v4920 = vsel %vm97, %v4182, 0
  %v4923 = vsel %vm97, %v4183, 0
  %v4926 = vsel %vm97, %v4184, 0
  %v4929 = vsel %vm97, %v4185, 0
  %v4932 = vsel %vm97, %v4186, 0
  %v4935 = vsel %vm97, %v4187, 0
  %v4938 = vsel %vm97, %v4188, 0
  %4940 = vmatpush.msra.mxu0 0.0
  %4941 = vmatpush.msra.mxu0 0.0
  %4942 = vmatpush.msra.mxu0 0.0
  %4943 = vmatpush.msra.mxu0 0.0
  %4944 = vmatpush.msra.mxu0 0.0
  %4945 = vmatpush.msra.mxu0 0.0
  %4946 = vmatpush.msra.mxu0 0.0
  %4947 = vmatpush.msra.mxu0 0.0
  %4948 = vmatpush.msra.mxu0 0.0
  %4949 = vmatpush.msra.mxu0 0.0
  %4950 = vmatpush.msra.mxu0 0.0
  %4951 = vmatpush.msra.mxu0 0.0
  %4952 = vmatpush.msra.mxu0 0.0
  %4953 = vmatpush.msra.mxu0 0.0
  %4954 = vmatpush.msra.mxu0 %v4880
  %4955 = vmatpush.msra.mxu0 %v4868
  %4956 = vmatmul.f32.gmra.mxu0 %v4917
  %v4957 = vpop.f32.mrf.mxu0
  %v4958 = vadd.f32 %v4341, %v4957
  %4959 = vmatmul.f32.gmra.mxu0 %v4920
  %v4960 = vpop.f32.mrf.mxu0
  %v4961 = vadd.f32 %v4344, %v4960
  %4962 = vmatmul.f32.gmra.mxu0 %v4923
  %v4963 = vpop.f32.mrf.mxu0
  %v4964 = vadd.f32 %v4347, %v4963
  %4965 = vmatmul.f32.gmra.mxu0 %v4926
  %v4966 = vpop.f32.mrf.mxu0
  %v4967 = vadd.f32 %v4350, %v4966
  %4968 = vmatmul.f32.gmra.mxu0 %v4929
  %v4969 = vpop.f32.mrf.mxu0
  %v4970 = vadd.f32 %v4353, %v4969
  %4971 = vmatmul.f32.gmra.mxu0 %v4932
  %v4972 = vpop.f32.mrf.mxu0
  %v4973 = vadd.f32 %v4356, %v4972
  %4974 = vmatmul.f32.gmra.mxu0 %v4935
  %v4975 = vpop.f32.mrf.mxu0
  %v4976 = vadd.f32 %v4359, %v4975
  %4977 = vmatmul.f32.gmra.mxu0 %v4938
  %v4978 = vpop.f32.mrf.mxu0
  %v4979 = vadd.f32 %v4362, %v4978
  %4980 = vdwg.mxu0
  %4981 = vmatpush.msra.mxu0 0.0
  %4982 = vmatpush.msra.mxu0 0.0
  %4983 = vmatpush.msra.mxu0 0.0
  %4984 = vmatpush.msra.mxu0 0.0
  %4985 = vmatpush.msra.mxu0 0.0
  %4986 = vmatpush.msra.mxu0 0.0
  %4987 = vmatpush.msra.mxu0 0.0
  %4988 = vmatpush.msra.mxu0 0.0
  %4989 = vmatpush.msra.mxu0 0.0
  %4990 = vmatpush.msra.mxu0 0.0
  %4991 = vmatpush.msra.mxu0 0.0
  %4992 = vmatpush.msra.mxu0 0.0
  %4993 = vmatpush.msra.mxu0 0.0
  %4994 = vmatpush.msra.mxu0 0.0
  %4995 = vmatpush.msra.mxu0 %v4881
  %4996 = vmatpush.msra.mxu0 %v4869
  %4997 = vmatmul.f32.gmra.mxu0 %v4917
  %v4998 = vpop.f32.mrf.mxu0
  %v4999 = vadd.f32 %v4382, %v4998
  %5000 = vmatmul.f32.gmra.mxu0 %v4920
  %v5001 = vpop.f32.mrf.mxu0
  %v5002 = vadd.f32 %v4385, %v5001
  %5003 = vmatmul.f32.gmra.mxu0 %v4923
  %v5004 = vpop.f32.mrf.mxu0
  %v5005 = vadd.f32 %v4388, %v5004
  %5006 = vmatmul.f32.gmra.mxu0 %v4926
  %v5007 = vpop.f32.mrf.mxu0
  %v5008 = vadd.f32 %v4391, %v5007
  %5009 = vmatmul.f32.gmra.mxu0 %v4929
  %v5010 = vpop.f32.mrf.mxu0
  %v5011 = vadd.f32 %v4394, %v5010
  %5012 = vmatmul.f32.gmra.mxu0 %v4932
  %v5013 = vpop.f32.mrf.mxu0
  %v5014 = vadd.f32 %v4397, %v5013
  %5015 = vmatmul.f32.gmra.mxu0 %v4935
  %v5016 = vpop.f32.mrf.mxu0
  %v5017 = vadd.f32 %v4400, %v5016
  %5018 = vmatmul.f32.gmra.mxu0 %v4938
  %v5019 = vpop.f32.mrf.mxu0
  %v5020 = vadd.f32 %v4403, %v5019
  %5021 = vdwg.mxu0
  %5022 = vmatpush.msra.mxu0 0.0
  %5023 = vmatpush.msra.mxu0 0.0
  %5024 = vmatpush.msra.mxu0 0.0
  %5025 = vmatpush.msra.mxu0 0.0
  %5026 = vmatpush.msra.mxu0 0.0
  %5027 = vmatpush.msra.mxu0 0.0
  %5028 = vmatpush.msra.mxu0 0.0
  %5029 = vmatpush.msra.mxu0 0.0
  %5030 = vmatpush.msra.mxu0 0.0
  %5031 = vmatpush.msra.mxu0 0.0
  %5032 = vmatpush.msra.mxu0 0.0
  %5033 = vmatpush.msra.mxu0 0.0
  %5034 = vmatpush.msra.mxu0 0.0
  %5035 = vmatpush.msra.mxu0 0.0
  %5036 = vmatpush.msra.mxu0 %v4882
  %5037 = vmatpush.msra.mxu0 %v4870
  %5038 = vmatmul.f32.gmra.mxu0 %v4917
  %v5039 = vpop.f32.mrf.mxu0
  %v5040 = vadd.f32 %v4423, %v5039
  %5041 = vmatmul.f32.gmra.mxu0 %v4920
  %v5042 = vpop.f32.mrf.mxu0
  %v5043 = vadd.f32 %v4426, %v5042
  %5044 = vmatmul.f32.gmra.mxu0 %v4923
  %v5045 = vpop.f32.mrf.mxu0
  %v5046 = vadd.f32 %v4429, %v5045
  %5047 = vmatmul.f32.gmra.mxu0 %v4926
  %v5048 = vpop.f32.mrf.mxu0
  %v5049 = vadd.f32 %v4432, %v5048
  %5050 = vmatmul.f32.gmra.mxu0 %v4929
  %v5051 = vpop.f32.mrf.mxu0
  %v5052 = vadd.f32 %v4435, %v5051
  %5053 = vmatmul.f32.gmra.mxu0 %v4932
  %v5054 = vpop.f32.mrf.mxu0
  %v5055 = vadd.f32 %v4438, %v5054
  %5056 = vmatmul.f32.gmra.mxu0 %v4935
  %v5057 = vpop.f32.mrf.mxu0
  %v5058 = vadd.f32 %v4441, %v5057
  %5059 = vmatmul.f32.gmra.mxu0 %v4938
  %v5060 = vpop.f32.mrf.mxu0
  %v5061 = vadd.f32 %v4444, %v5060
  %5062 = vdwg.mxu0
  %5063 = vmatpush.msra.mxu0 0.0
  %5064 = vmatpush.msra.mxu0 0.0
  %5065 = vmatpush.msra.mxu0 0.0
  %5066 = vmatpush.msra.mxu0 0.0
  %5067 = vmatpush.msra.mxu0 0.0
  %5068 = vmatpush.msra.mxu0 0.0
  %5069 = vmatpush.msra.mxu0 0.0
  %5070 = vmatpush.msra.mxu0 0.0
  %5071 = vmatpush.msra.mxu0 0.0
  %5072 = vmatpush.msra.mxu0 0.0
  %5073 = vmatpush.msra.mxu0 0.0
  %5074 = vmatpush.msra.mxu0 0.0
  %5075 = vmatpush.msra.mxu0 0.0
  %5076 = vmatpush.msra.mxu0 0.0
  %5077 = vmatpush.msra.mxu0 %v4883
  %5078 = vmatpush.msra.mxu0 %v4871
  %5079 = vmatmul.f32.gmra.mxu0 %v4917
  %v5080 = vpop.f32.mrf.mxu0
  %v5081 = vadd.f32 %v4464, %v5080
  %5082 = vmatmul.f32.gmra.mxu0 %v4920
  %v5083 = vpop.f32.mrf.mxu0
  %v5084 = vadd.f32 %v4467, %v5083
  %5085 = vmatmul.f32.gmra.mxu0 %v4923
  %v5086 = vpop.f32.mrf.mxu0
  %v5087 = vadd.f32 %v4470, %v5086
  %5088 = vmatmul.f32.gmra.mxu0 %v4926
  %v5089 = vpop.f32.mrf.mxu0
  %v5090 = vadd.f32 %v4473, %v5089
  %5091 = vmatmul.f32.gmra.mxu0 %v4929
  %v5092 = vpop.f32.mrf.mxu0
  %v5093 = vadd.f32 %v4476, %v5092
  %5094 = vmatmul.f32.gmra.mxu0 %v4932
  %v5095 = vpop.f32.mrf.mxu0
  %v5096 = vadd.f32 %v4479, %v5095
  %5097 = vmatmul.f32.gmra.mxu0 %v4935
  %v5098 = vpop.f32.mrf.mxu0
  %v5099 = vadd.f32 %v4482, %v5098
  %5100 = vmatmul.f32.gmra.mxu0 %v4938
  %v5101 = vpop.f32.mrf.mxu0
  %v5102 = vadd.f32 %v4485, %v5101
  %5103 = vdwg.mxu0
  %5104 = vmatpush.msra.mxu0 0.0
  %5105 = vmatpush.msra.mxu0 0.0
  %5106 = vmatpush.msra.mxu0 0.0
  %5107 = vmatpush.msra.mxu0 0.0
  %5108 = vmatpush.msra.mxu0 0.0
  %5109 = vmatpush.msra.mxu0 0.0
  %5110 = vmatpush.msra.mxu0 0.0
  %5111 = vmatpush.msra.mxu0 0.0
  %5112 = vmatpush.msra.mxu0 0.0
  %5113 = vmatpush.msra.mxu0 0.0
  %5114 = vmatpush.msra.mxu0 0.0
  %5115 = vmatpush.msra.mxu0 0.0
  %5116 = vmatpush.msra.mxu0 0.0
  %5117 = vmatpush.msra.mxu0 0.0
  %5118 = vmatpush.msra.mxu0 %v4884
  %5119 = vmatpush.msra.mxu0 %v4872
  %5120 = vmatmul.f32.gmra.mxu0 %v4917
  %v5121 = vpop.f32.mrf.mxu0
  %v5122 = vadd.f32 %v4505, %v5121
  %5123 = vmatmul.f32.gmra.mxu0 %v4920
  %v5124 = vpop.f32.mrf.mxu0
  %v5125 = vadd.f32 %v4508, %v5124
  %5126 = vmatmul.f32.gmra.mxu0 %v4923
  %v5127 = vpop.f32.mrf.mxu0
  %v5128 = vadd.f32 %v4511, %v5127
  %5129 = vmatmul.f32.gmra.mxu0 %v4926
  %v5130 = vpop.f32.mrf.mxu0
  %v5131 = vadd.f32 %v4514, %v5130
  %5132 = vmatmul.f32.gmra.mxu0 %v4929
  %v5133 = vpop.f32.mrf.mxu0
  %v5134 = vadd.f32 %v4517, %v5133
  %5135 = vmatmul.f32.gmra.mxu0 %v4932
  %v5136 = vpop.f32.mrf.mxu0
  %v5137 = vadd.f32 %v4520, %v5136
  %5138 = vmatmul.f32.gmra.mxu0 %v4935
  %v5139 = vpop.f32.mrf.mxu0
  %v5140 = vadd.f32 %v4523, %v5139
  %5141 = vmatmul.f32.gmra.mxu0 %v4938
  %v5142 = vpop.f32.mrf.mxu0
  %v5143 = vadd.f32 %v4526, %v5142
  %5144 = vdwg.mxu0
  %5145 = vmatpush.msra.mxu0 0.0
  %5146 = vmatpush.msra.mxu0 0.0
  %5147 = vmatpush.msra.mxu0 0.0
  %5148 = vmatpush.msra.mxu0 0.0
  %5149 = vmatpush.msra.mxu0 0.0
  %5150 = vmatpush.msra.mxu0 0.0
  %5151 = vmatpush.msra.mxu0 0.0
  %5152 = vmatpush.msra.mxu0 0.0
  %5153 = vmatpush.msra.mxu0 0.0
  %5154 = vmatpush.msra.mxu0 0.0
  %5155 = vmatpush.msra.mxu0 0.0
  %5156 = vmatpush.msra.mxu0 0.0
  %5157 = vmatpush.msra.mxu0 0.0
  %5158 = vmatpush.msra.mxu0 0.0
  %5159 = vmatpush.msra.mxu0 %v4885
  %5160 = vmatpush.msra.mxu0 %v4873
  %5161 = vmatmul.f32.gmra.mxu0 %v4917
  %v5162 = vpop.f32.mrf.mxu0
  %v5163 = vadd.f32 %v4546, %v5162
  %5164 = vmatmul.f32.gmra.mxu0 %v4920
  %v5165 = vpop.f32.mrf.mxu0
  %v5166 = vadd.f32 %v4549, %v5165
  %5167 = vmatmul.f32.gmra.mxu0 %v4923
  %v5168 = vpop.f32.mrf.mxu0
  %v5169 = vadd.f32 %v4552, %v5168
  %5170 = vmatmul.f32.gmra.mxu0 %v4926
  %v5171 = vpop.f32.mrf.mxu0
  %v5172 = vadd.f32 %v4555, %v5171
  %5173 = vmatmul.f32.gmra.mxu0 %v4929
  %v5174 = vpop.f32.mrf.mxu0
  %v5175 = vadd.f32 %v4558, %v5174
  %5176 = vmatmul.f32.gmra.mxu0 %v4932
  %v5177 = vpop.f32.mrf.mxu0
  %v5178 = vadd.f32 %v4561, %v5177
  %5179 = vmatmul.f32.gmra.mxu0 %v4935
  %v5180 = vpop.f32.mrf.mxu0
  %v5181 = vadd.f32 %v4564, %v5180
  %5182 = vmatmul.f32.gmra.mxu0 %v4938
  %v5183 = vpop.f32.mrf.mxu0
  %v5184 = vadd.f32 %v4567, %v5183
  %5185 = vdwg.mxu0
  %5186 = vmatpush.msra.mxu0 0.0
  %5187 = vmatpush.msra.mxu0 0.0
  %5188 = vmatpush.msra.mxu0 0.0
  %5189 = vmatpush.msra.mxu0 0.0
  %5190 = vmatpush.msra.mxu0 0.0
  %5191 = vmatpush.msra.mxu0 0.0
  %5192 = vmatpush.msra.mxu0 0.0
  %5193 = vmatpush.msra.mxu0 0.0
  %5194 = vmatpush.msra.mxu0 0.0
  %5195 = vmatpush.msra.mxu0 0.0
  %5196 = vmatpush.msra.mxu0 0.0
  %5197 = vmatpush.msra.mxu0 0.0
  %5198 = vmatpush.msra.mxu0 0.0
  %5199 = vmatpush.msra.mxu0 0.0
  %5200 = vmatpush.msra.mxu0 %v4886
  %5201 = vmatpush.msra.mxu0 %v4874
  %5202 = vmatmul.f32.gmra.mxu0 %v4917
  %v5203 = vpop.f32.mrf.mxu0
  %v5204 = vadd.f32 %v4587, %v5203
  %5205 = vmatmul.f32.gmra.mxu0 %v4920
  %v5206 = vpop.f32.mrf.mxu0
  %v5207 = vadd.f32 %v4590, %v5206
  %5208 = vmatmul.f32.gmra.mxu0 %v4923
  %v5209 = vpop.f32.mrf.mxu0
  %v5210 = vadd.f32 %v4593, %v5209
  %5211 = vmatmul.f32.gmra.mxu0 %v4926
  %v5212 = vpop.f32.mrf.mxu0
  %v5213 = vadd.f32 %v4596, %v5212
  %5214 = vmatmul.f32.gmra.mxu0 %v4929
  %v5215 = vpop.f32.mrf.mxu0
  %v5216 = vadd.f32 %v4599, %v5215
  %5217 = vmatmul.f32.gmra.mxu0 %v4932
  %v5218 = vpop.f32.mrf.mxu0
  %v5219 = vadd.f32 %v4602, %v5218
  %5220 = vmatmul.f32.gmra.mxu0 %v4935
  %v5221 = vpop.f32.mrf.mxu0
  %v5222 = vadd.f32 %v4605, %v5221
  %5223 = vmatmul.f32.gmra.mxu0 %v4938
  %v5224 = vpop.f32.mrf.mxu0
  %v5225 = vadd.f32 %v4608, %v5224
  %5226 = vdwg.mxu0
  %5227 = vmatpush.msra.mxu0 0.0
  %5228 = vmatpush.msra.mxu0 0.0
  %5229 = vmatpush.msra.mxu0 0.0
  %5230 = vmatpush.msra.mxu0 0.0
  %5231 = vmatpush.msra.mxu0 0.0
  %5232 = vmatpush.msra.mxu0 0.0
  %5233 = vmatpush.msra.mxu0 0.0
  %5234 = vmatpush.msra.mxu0 0.0
  %5235 = vmatpush.msra.mxu0 0.0
  %5236 = vmatpush.msra.mxu0 0.0
  %5237 = vmatpush.msra.mxu0 0.0
  %5238 = vmatpush.msra.mxu0 0.0
  %5239 = vmatpush.msra.mxu0 0.0
  %5240 = vmatpush.msra.mxu0 0.0
  %5241 = vmatpush.msra.mxu0 %v4887
  %5242 = vmatpush.msra.mxu0 %v4875
  %5243 = vmatmul.f32.gmra.mxu0 %v4917
  %v5244 = vpop.f32.mrf.mxu0
  %v5245 = vadd.f32 %v4628, %v5244
  %5246 = vmatmul.f32.gmra.mxu0 %v4920
  %v5247 = vpop.f32.mrf.mxu0
  %v5248 = vadd.f32 %v4631, %v5247
  %5249 = vmatmul.f32.gmra.mxu0 %v4923
  %v5250 = vpop.f32.mrf.mxu0
  %v5251 = vadd.f32 %v4634, %v5250
  %5252 = vmatmul.f32.gmra.mxu0 %v4926
  %v5253 = vpop.f32.mrf.mxu0
  %v5254 = vadd.f32 %v4637, %v5253
  %5255 = vmatmul.f32.gmra.mxu0 %v4929
  %v5256 = vpop.f32.mrf.mxu0
  %v5257 = vadd.f32 %v4640, %v5256
  %5258 = vmatmul.f32.gmra.mxu0 %v4932
  %v5259 = vpop.f32.mrf.mxu0
  %v5260 = vadd.f32 %v4643, %v5259
  %5261 = vmatmul.f32.gmra.mxu0 %v4935
  %v5262 = vpop.f32.mrf.mxu0
  %v5263 = vadd.f32 %v4646, %v5262
  %5264 = vmatmul.f32.gmra.mxu0 %v4938
  %v5265 = vpop.f32.mrf.mxu0
  %v5266 = vadd.f32 %v4649, %v5265
  %5267 = vdwg.mxu0
  %5268 = vmatpush.msra.mxu0 0.0
  %5269 = vmatpush.msra.mxu0 0.0
  %5270 = vmatpush.msra.mxu0 0.0
  %5271 = vmatpush.msra.mxu0 0.0
  %5272 = vmatpush.msra.mxu0 0.0
  %5273 = vmatpush.msra.mxu0 0.0
  %5274 = vmatpush.msra.mxu0 0.0
  %5275 = vmatpush.msra.mxu0 0.0
  %5276 = vmatpush.msra.mxu0 0.0
  %5277 = vmatpush.msra.mxu0 0.0
  %5278 = vmatpush.msra.mxu0 0.0
  %5279 = vmatpush.msra.mxu0 0.0
  %5280 = vmatpush.msra.mxu0 0.0
  %5281 = vmatpush.msra.mxu0 0.0
  %5282 = vmatpush.msra.mxu0 %v4888
  %5283 = vmatpush.msra.mxu0 %v4876
  %5284 = vmatmul.f32.gmra.mxu0 %v4917
  %v5285 = vpop.f32.mrf.mxu0
  %v5286 = vadd.f32 %v4669, %v5285
  %5287 = vmatmul.f32.gmra.mxu0 %v4920
  %v5288 = vpop.f32.mrf.mxu0
  %v5289 = vadd.f32 %v4672, %v5288
  %5290 = vmatmul.f32.gmra.mxu0 %v4923
  %v5291 = vpop.f32.mrf.mxu0
  %v5292 = vadd.f32 %v4675, %v5291
  %5293 = vmatmul.f32.gmra.mxu0 %v4926
  %v5294 = vpop.f32.mrf.mxu0
  %v5295 = vadd.f32 %v4678, %v5294
  %5296 = vmatmul.f32.gmra.mxu0 %v4929
  %v5297 = vpop.f32.mrf.mxu0
  %v5298 = vadd.f32 %v4681, %v5297
  %5299 = vmatmul.f32.gmra.mxu0 %v4932
  %v5300 = vpop.f32.mrf.mxu0
  %v5301 = vadd.f32 %v4684, %v5300
  %5302 = vmatmul.f32.gmra.mxu0 %v4935
  %v5303 = vpop.f32.mrf.mxu0
  %v5304 = vadd.f32 %v4687, %v5303
  %5305 = vmatmul.f32.gmra.mxu0 %v4938
  %v5306 = vpop.f32.mrf.mxu0
  %v5307 = vadd.f32 %v4690, %v5306
  %5308 = vdwg.mxu0
  %5309 = vmatpush.msra.mxu0 0.0
  %5310 = vmatpush.msra.mxu0 0.0
  %5311 = vmatpush.msra.mxu0 0.0
  %5312 = vmatpush.msra.mxu0 0.0
  %5313 = vmatpush.msra.mxu0 0.0
  %5314 = vmatpush.msra.mxu0 0.0
  %5315 = vmatpush.msra.mxu0 0.0
  %5316 = vmatpush.msra.mxu0 0.0
  %5317 = vmatpush.msra.mxu0 0.0
  %5318 = vmatpush.msra.mxu0 0.0
  %5319 = vmatpush.msra.mxu0 0.0
  %5320 = vmatpush.msra.mxu0 0.0
  %5321 = vmatpush.msra.mxu0 0.0
  %5322 = vmatpush.msra.mxu0 0.0
  %5323 = vmatpush.msra.mxu0 %v4889
  %5324 = vmatpush.msra.mxu0 %v4877
  %5325 = vmatmul.f32.gmra.mxu0 %v4917
  %v5326 = vpop.f32.mrf.mxu0
  %v5327 = vadd.f32 %v4710, %v5326
  %5328 = vmatmul.f32.gmra.mxu0 %v4920
  %v5329 = vpop.f32.mrf.mxu0
  %v5330 = vadd.f32 %v4713, %v5329
  %5331 = vmatmul.f32.gmra.mxu0 %v4923
  %v5332 = vpop.f32.mrf.mxu0
  %v5333 = vadd.f32 %v4716, %v5332
  %5334 = vmatmul.f32.gmra.mxu0 %v4926
  %v5335 = vpop.f32.mrf.mxu0
  %v5336 = vadd.f32 %v4719, %v5335
  %5337 = vmatmul.f32.gmra.mxu0 %v4929
  %v5338 = vpop.f32.mrf.mxu0
  %v5339 = vadd.f32 %v4722, %v5338
  %5340 = vmatmul.f32.gmra.mxu0 %v4932
  %v5341 = vpop.f32.mrf.mxu0
  %v5342 = vadd.f32 %v4725, %v5341
  %5343 = vmatmul.f32.gmra.mxu0 %v4935
  %v5344 = vpop.f32.mrf.mxu0
  %v5345 = vadd.f32 %v4728, %v5344
  %5346 = vmatmul.f32.gmra.mxu0 %v4938
  %v5347 = vpop.f32.mrf.mxu0
  %v5348 = vadd.f32 %v4731, %v5347
  %5349 = vdwg.mxu0
  %5350 = vmatpush.msra.mxu0 0.0
  %5351 = vmatpush.msra.mxu0 0.0
  %5352 = vmatpush.msra.mxu0 0.0
  %5353 = vmatpush.msra.mxu0 0.0
  %5354 = vmatpush.msra.mxu0 0.0
  %5355 = vmatpush.msra.mxu0 0.0
  %5356 = vmatpush.msra.mxu0 0.0
  %5357 = vmatpush.msra.mxu0 0.0
  %5358 = vmatpush.msra.mxu0 0.0
  %5359 = vmatpush.msra.mxu0 0.0
  %5360 = vmatpush.msra.mxu0 0.0
  %5361 = vmatpush.msra.mxu0 0.0
  %5362 = vmatpush.msra.mxu0 0.0
  %5363 = vmatpush.msra.mxu0 0.0
  %5364 = vmatpush.msra.mxu0 %v4890
  %5365 = vmatpush.msra.mxu0 %v4878
  %5366 = vmatmul.f32.gmra.mxu0 %v4917
  %v5367 = vpop.f32.mrf.mxu0
  %v5368 = vadd.f32 %v4751, %v5367
  %5369 = vmatmul.f32.gmra.mxu0 %v4920
  %v5370 = vpop.f32.mrf.mxu0
  %v5371 = vadd.f32 %v4754, %v5370
  %5372 = vmatmul.f32.gmra.mxu0 %v4923
  %v5373 = vpop.f32.mrf.mxu0
  %v5374 = vadd.f32 %v4757, %v5373
  %5375 = vmatmul.f32.gmra.mxu0 %v4926
  %v5376 = vpop.f32.mrf.mxu0
  %v5377 = vadd.f32 %v4760, %v5376
  %5378 = vmatmul.f32.gmra.mxu0 %v4929
  %v5379 = vpop.f32.mrf.mxu0
  %v5380 = vadd.f32 %v4763, %v5379
  %5381 = vmatmul.f32.gmra.mxu0 %v4932
  %v5382 = vpop.f32.mrf.mxu0
  %v5383 = vadd.f32 %v4766, %v5382
  %5384 = vmatmul.f32.gmra.mxu0 %v4935
  %v5385 = vpop.f32.mrf.mxu0
  %v5386 = vadd.f32 %v4769, %v5385
  %5387 = vmatmul.f32.gmra.mxu0 %v4938
  %v5388 = vpop.f32.mrf.mxu0
  %v5389 = vadd.f32 %v4772, %v5388
  %5390 = vdwg.mxu0
  %5391 = vmatpush.msra.mxu0 0.0
  %5392 = vmatpush.msra.mxu0 0.0
  %5393 = vmatpush.msra.mxu0 0.0
  %5394 = vmatpush.msra.mxu0 0.0
  %5395 = vmatpush.msra.mxu0 0.0
  %5396 = vmatpush.msra.mxu0 0.0
  %5397 = vmatpush.msra.mxu0 0.0
  %5398 = vmatpush.msra.mxu0 0.0
  %5399 = vmatpush.msra.mxu0 0.0
  %5400 = vmatpush.msra.mxu0 0.0
  %5401 = vmatpush.msra.mxu0 0.0
  %5402 = vmatpush.msra.mxu0 0.0
  %5403 = vmatpush.msra.mxu0 0.0
  %5404 = vmatpush.msra.mxu0 0.0
  %5405 = vmatpush.msra.mxu0 %v4891
  %5406 = vmatpush.msra.mxu0 %v4879
  %5407 = vmatmul.f32.gmra.mxu0 %v4917
  %v5408 = vpop.f32.mrf.mxu0
  %v5409 = vadd.f32 %v4792, %v5408
  %5410 = vmatmul.f32.gmra.mxu0 %v4920
  %v5411 = vpop.f32.mrf.mxu0
  %v5412 = vadd.f32 %v4795, %v5411
  %5413 = vmatmul.f32.gmra.mxu0 %v4923
  %v5414 = vpop.f32.mrf.mxu0
  %v5415 = vadd.f32 %v4798, %v5414
  %5416 = vmatmul.f32.gmra.mxu0 %v4926
  %v5417 = vpop.f32.mrf.mxu0
  %v5418 = vadd.f32 %v4801, %v5417
  %5419 = vmatmul.f32.gmra.mxu0 %v4929
  %v5420 = vpop.f32.mrf.mxu0
  %v5421 = vadd.f32 %v4804, %v5420
  %5422 = vmatmul.f32.gmra.mxu0 %v4932
  %v5423 = vpop.f32.mrf.mxu0
  %v5424 = vadd.f32 %v4807, %v5423
  %5425 = vmatmul.f32.gmra.mxu0 %v4935
  %v5426 = vpop.f32.mrf.mxu0
  %v5427 = vadd.f32 %v4810, %v5426
  %5428 = vmatmul.f32.gmra.mxu0 %v4938
  %v5429 = vpop.f32.mrf.mxu0
  %v5430 = vadd.f32 %v4813, %v5429
  %5431 = vdwg.mxu0
  %s5432 = scalar_lea.vmem %s1, 512
  %v5433 = vld [vmem:[%s5432] sm:$0xff]
  %v5434 = vld [vmem:[%s5432 + $0x8] sm:$0xff]
  %v5435 = vld [vmem:[%s5432 + $0x10] sm:$0xff]
  %v5436 = vld [vmem:[%s5432 + $0x18] sm:$0xff]
  %v5437 = vld [vmem:[%s5432 + $0x20] sm:$0xff]
  %v5438 = vld [vmem:[%s5432 + $0x28] sm:$0xff]
  %v5439 = vld [vmem:[%s5432 + $0x30] sm:$0xff]
  %v5440 = vld [vmem:[%s5432 + $0x38] sm:$0xff]
  %5441 = vrot.lane.b32.xlu0 %v710, 90
  %v5442 = vpop.permute.xlu0 %5441
  %5443 = vrot.lane.b32.xlu0 %v711, 90
  %v5444 = vpop.permute.xlu0 %5443
  %5445 = vrot.lane.b32.xlu0 %v712, 90
  %v5446 = vpop.permute.xlu0 %5445
  %5447 = vrot.lane.b32.xlu0 %v713, 90
  %v5448 = vpop.permute.xlu0 %5447
  %5449 = vrot.lane.b32.xlu0 %v714, 90
  %v5450 = vpop.permute.xlu0 %5449
  %5451 = vrot.lane.b32.xlu0 %v715, 90
  %v5452 = vpop.permute.xlu0 %5451
  %5453 = vrot.lane.b32.xlu0 %v716, 90
  %v5454 = vpop.permute.xlu0 %5453
  %5455 = vrot.lane.b32.xlu0 %v717, 90
  %v5456 = vpop.permute.xlu0 %5455
  %5457 = vrot.lane.b32.xlu0 %v718, 90
  %v5458 = vpop.permute.xlu0 %5457
  %5459 = vrot.lane.b32.xlu0 %v719, 90
  %v5460 = vpop.permute.xlu0 %5459
  %5461 = vrot.lane.b32.xlu0 %v720, 90
  %v5462 = vpop.permute.xlu0 %5461
  %5463 = vrot.lane.b32.xlu0 %v721, 90
  %v5464 = vpop.permute.xlu0 %5463
  %5465 = vrot.lane.b32.xlu0 %v722, 90
  %v5466 = vpop.permute.xlu0 %5465
  %5467 = vrot.lane.b32.xlu0 %v723, 90
  %v5468 = vpop.permute.xlu0 %5467
  %5469 = vrot.lane.b32.xlu0 %v724, 90
  %v5470 = vpop.permute.xlu0 %5469
  %5471 = vrot.lane.b32.xlu0 %v725, 90
  %v5472 = vpop.permute.xlu0 %5471
  %5473 = vrot.lane.b32.xlu0 %v726, 90
  %v5474 = vpop.permute.xlu0 %5473
  %5475 = vrot.lane.b32.xlu0 %v727, 90
  %v5476 = vpop.permute.xlu0 %5475
  %5477 = vrot.lane.b32.xlu0 %v728, 90
  %v5478 = vpop.permute.xlu0 %5477
  %5479 = vrot.lane.b32.xlu0 %v729, 90
  %v5480 = vpop.permute.xlu0 %5479
  %5481 = vrot.lane.b32.xlu0 %v730, 90
  %v5482 = vpop.permute.xlu0 %5481
  %5483 = vrot.lane.b32.xlu0 %v731, 90
  %v5484 = vpop.permute.xlu0 %5483
  %5485 = vrot.lane.b32.xlu0 %v732, 90
  %v5486 = vpop.permute.xlu0 %5485
  %5487 = vrot.lane.b32.xlu0 %v733, 90
  %v5488 = vpop.permute.xlu0 %5487
  %5489 = vrot.lane.b32.xlu0 %v734, 90
  %v5490 = vpop.permute.xlu0 %5489
  %5491 = vrot.lane.b32.xlu0 %v735, 90
  %v5492 = vpop.permute.xlu0 %5491
  %vm5493 = vcmask 736256
  %v5494 = vsel %vm5493, %v5442, %v5444
  %v5495 = vsel %vm5493, %v5444, %v5446
  %v5496 = vsel %vm5493, %v5446, %v5448
  %v5497 = vsel %vm5493, %v5448, %v5450
  %v5498 = vsel %vm5493, %v5450, %v5452
  %v5499 = vsel %vm5493, %v5452, %v5454
  %v5500 = vsel %vm5493, %v5454, %v5456
  %v5501 = vsel %vm5493, %v5456, %v5458
  %v5502 = vsel %vm5493, %v5458, %v5460
  %v5503 = vsel %vm5493, %v5460, %v5462
  %v5504 = vsel %vm5493, %v5462, %v5464
  %v5505 = vsel %vm5493, %v5464, %v5466
  %v5506 = vsel %vm5493, %v5468, %v5470
  %v5507 = vsel %vm5493, %v5470, %v5472
  %v5508 = vsel %vm5493, %v5472, %v5474
  %v5509 = vsel %vm5493, %v5474, %v5476
  %v5510 = vsel %vm5493, %v5476, %v5478
  %v5511 = vsel %vm5493, %v5478, %v5480
  %v5512 = vsel %vm5493, %v5480, %v5482
  %v5513 = vsel %vm5493, %v5482, %v5484
  %v5514 = vsel %vm5493, %v5484, %v5486
  %v5515 = vsel %vm5493, %v5486, %v5488
  %v5516 = vsel %vm5493, %v5488, %v5490
  %v5517 = vsel %vm5493, %v5490, %v5492
  %v5543 = vsel %vm97, %v5433, 0
  %v5546 = vsel %vm97, %v5434, 0
  %v5549 = vsel %vm97, %v5435, 0
  %v5552 = vsel %vm97, %v5436, 0
  %v5555 = vsel %vm97, %v5437, 0
  %v5558 = vsel %vm97, %v5438, 0
  %v5561 = vsel %vm97, %v5439, 0
  %v5564 = vsel %vm97, %v5440, 0
  %5566 = vmatpush.msra.mxu0 0.0
  %5567 = vmatpush.msra.mxu0 0.0
  %5568 = vmatpush.msra.mxu0 0.0
  %5569 = vmatpush.msra.mxu0 0.0
  %5570 = vmatpush.msra.mxu0 0.0
  %5571 = vmatpush.msra.mxu0 0.0
  %5572 = vmatpush.msra.mxu0 0.0
  %5573 = vmatpush.msra.mxu0 0.0
  %5574 = vmatpush.msra.mxu0 0.0
  %5575 = vmatpush.msra.mxu0 0.0
  %5576 = vmatpush.msra.mxu0 0.0
  %5577 = vmatpush.msra.mxu0 0.0
  %5578 = vmatpush.msra.mxu0 0.0
  %5579 = vmatpush.msra.mxu0 0.0
  %5580 = vmatpush.msra.mxu0 %v5506
  %5581 = vmatpush.msra.mxu0 %v5494
  %5582 = vmatmul.f32.gmra.mxu0 %v5543
  %v5583 = vpop.f32.mrf.mxu0
  %v5584 = vadd.f32 0.0, %v5583
  %5585 = vmatmul.f32.gmra.mxu0 %v5546
  %v5586 = vpop.f32.mrf.mxu0
  %v5587 = vadd.f32 0.0, %v5586
  %5588 = vmatmul.f32.gmra.mxu0 %v5549
  %v5589 = vpop.f32.mrf.mxu0
  %v5590 = vadd.f32 0.0, %v5589
  %5591 = vmatmul.f32.gmra.mxu0 %v5552
  %v5592 = vpop.f32.mrf.mxu0
  %v5593 = vadd.f32 0.0, %v5592
  %5594 = vmatmul.f32.gmra.mxu0 %v5555
  %v5595 = vpop.f32.mrf.mxu0
  %v5596 = vadd.f32 0.0, %v5595
  %5597 = vmatmul.f32.gmra.mxu0 %v5558
  %v5598 = vpop.f32.mrf.mxu0
  %v5599 = vadd.f32 0.0, %v5598
  %5600 = vmatmul.f32.gmra.mxu0 %v5561
  %v5601 = vpop.f32.mrf.mxu0
  %v5602 = vadd.f32 0.0, %v5601
  %5603 = vmatmul.f32.gmra.mxu0 %v5564
  %v5604 = vpop.f32.mrf.mxu0
  %v5605 = vadd.f32 0.0, %v5604
  %5606 = vdwg.mxu0
  %5607 = vmatpush.msra.mxu0 0.0
  %5608 = vmatpush.msra.mxu0 0.0
  %5609 = vmatpush.msra.mxu0 0.0
  %5610 = vmatpush.msra.mxu0 0.0
  %5611 = vmatpush.msra.mxu0 0.0
  %5612 = vmatpush.msra.mxu0 0.0
  %5613 = vmatpush.msra.mxu0 0.0
  %5614 = vmatpush.msra.mxu0 0.0
  %5615 = vmatpush.msra.mxu0 0.0
  %5616 = vmatpush.msra.mxu0 0.0
  %5617 = vmatpush.msra.mxu0 0.0
  %5618 = vmatpush.msra.mxu0 0.0
  %5619 = vmatpush.msra.mxu0 0.0
  %5620 = vmatpush.msra.mxu0 0.0
  %5621 = vmatpush.msra.mxu0 %v5507
  %5622 = vmatpush.msra.mxu0 %v5495
  %5623 = vmatmul.f32.gmra.mxu0 %v5543
  %v5624 = vpop.f32.mrf.mxu0
  %v5625 = vadd.f32 0.0, %v5624
  %5626 = vmatmul.f32.gmra.mxu0 %v5546
  %v5627 = vpop.f32.mrf.mxu0
  %v5628 = vadd.f32 0.0, %v5627
  %5629 = vmatmul.f32.gmra.mxu0 %v5549
  %v5630 = vpop.f32.mrf.mxu0
  %v5631 = vadd.f32 0.0, %v5630
  %5632 = vmatmul.f32.gmra.mxu0 %v5552
  %v5633 = vpop.f32.mrf.mxu0
  %v5634 = vadd.f32 0.0, %v5633
  %5635 = vmatmul.f32.gmra.mxu0 %v5555
  %v5636 = vpop.f32.mrf.mxu0
  %v5637 = vadd.f32 0.0, %v5636
  %5638 = vmatmul.f32.gmra.mxu0 %v5558
  %v5639 = vpop.f32.mrf.mxu0
  %v5640 = vadd.f32 0.0, %v5639
  %5641 = vmatmul.f32.gmra.mxu0 %v5561
  %v5642 = vpop.f32.mrf.mxu0
  %v5643 = vadd.f32 0.0, %v5642
  %5644 = vmatmul.f32.gmra.mxu0 %v5564
  %v5645 = vpop.f32.mrf.mxu0
  %v5646 = vadd.f32 0.0, %v5645
  %5647 = vdwg.mxu0
  %5648 = vmatpush.msra.mxu0 0.0
  %5649 = vmatpush.msra.mxu0 0.0
  %5650 = vmatpush.msra.mxu0 0.0
  %5651 = vmatpush.msra.mxu0 0.0
  %5652 = vmatpush.msra.mxu0 0.0
  %5653 = vmatpush.msra.mxu0 0.0
  %5654 = vmatpush.msra.mxu0 0.0
  %5655 = vmatpush.msra.mxu0 0.0
  %5656 = vmatpush.msra.mxu0 0.0
  %5657 = vmatpush.msra.mxu0 0.0
  %5658 = vmatpush.msra.mxu0 0.0
  %5659 = vmatpush.msra.mxu0 0.0
  %5660 = vmatpush.msra.mxu0 0.0
  %5661 = vmatpush.msra.mxu0 0.0
  %5662 = vmatpush.msra.mxu0 %v5508
  %5663 = vmatpush.msra.mxu0 %v5496
  %5664 = vmatmul.f32.gmra.mxu0 %v5543
  %v5665 = vpop.f32.mrf.mxu0
  %v5666 = vadd.f32 0.0, %v5665
  %5667 = vmatmul.f32.gmra.mxu0 %v5546
  %v5668 = vpop.f32.mrf.mxu0
  %v5669 = vadd.f32 0.0, %v5668
  %5670 = vmatmul.f32.gmra.mxu0 %v5549
  %v5671 = vpop.f32.mrf.mxu0
  %v5672 = vadd.f32 0.0, %v5671
  %5673 = vmatmul.f32.gmra.mxu0 %v5552
  %v5674 = vpop.f32.mrf.mxu0
  %v5675 = vadd.f32 0.0, %v5674
  %5676 = vmatmul.f32.gmra.mxu0 %v5555
  %v5677 = vpop.f32.mrf.mxu0
  %v5678 = vadd.f32 0.0, %v5677
  %5679 = vmatmul.f32.gmra.mxu0 %v5558
  %v5680 = vpop.f32.mrf.mxu0
  %v5681 = vadd.f32 0.0, %v5680
  %5682 = vmatmul.f32.gmra.mxu0 %v5561
  %v5683 = vpop.f32.mrf.mxu0
  %v5684 = vadd.f32 0.0, %v5683
  %5685 = vmatmul.f32.gmra.mxu0 %v5564
  %v5686 = vpop.f32.mrf.mxu0
  %v5687 = vadd.f32 0.0, %v5686
  %5688 = vdwg.mxu0
  %5689 = vmatpush.msra.mxu0 0.0
  %5690 = vmatpush.msra.mxu0 0.0
  %5691 = vmatpush.msra.mxu0 0.0
  %5692 = vmatpush.msra.mxu0 0.0
  %5693 = vmatpush.msra.mxu0 0.0
  %5694 = vmatpush.msra.mxu0 0.0
  %5695 = vmatpush.msra.mxu0 0.0
  %5696 = vmatpush.msra.mxu0 0.0
  %5697 = vmatpush.msra.mxu0 0.0
  %5698 = vmatpush.msra.mxu0 0.0
  %5699 = vmatpush.msra.mxu0 0.0
  %5700 = vmatpush.msra.mxu0 0.0
  %5701 = vmatpush.msra.mxu0 0.0
  %5702 = vmatpush.msra.mxu0 0.0
  %5703 = vmatpush.msra.mxu0 %v5509
  %5704 = vmatpush.msra.mxu0 %v5497
  %5705 = vmatmul.f32.gmra.mxu0 %v5543
  %v5706 = vpop.f32.mrf.mxu0
  %v5707 = vadd.f32 0.0, %v5706
  %5708 = vmatmul.f32.gmra.mxu0 %v5546
  %v5709 = vpop.f32.mrf.mxu0
  %v5710 = vadd.f32 0.0, %v5709
  %5711 = vmatmul.f32.gmra.mxu0 %v5549
  %v5712 = vpop.f32.mrf.mxu0
  %v5713 = vadd.f32 0.0, %v5712
  %5714 = vmatmul.f32.gmra.mxu0 %v5552
  %v5715 = vpop.f32.mrf.mxu0
  %v5716 = vadd.f32 0.0, %v5715
  %5717 = vmatmul.f32.gmra.mxu0 %v5555
  %v5718 = vpop.f32.mrf.mxu0
  %v5719 = vadd.f32 0.0, %v5718
  %5720 = vmatmul.f32.gmra.mxu0 %v5558
  %v5721 = vpop.f32.mrf.mxu0
  %v5722 = vadd.f32 0.0, %v5721
  %5723 = vmatmul.f32.gmra.mxu0 %v5561
  %v5724 = vpop.f32.mrf.mxu0
  %v5725 = vadd.f32 0.0, %v5724
  %5726 = vmatmul.f32.gmra.mxu0 %v5564
  %v5727 = vpop.f32.mrf.mxu0
  %v5728 = vadd.f32 0.0, %v5727
  %5729 = vdwg.mxu0
  %5730 = vmatpush.msra.mxu0 0.0
  %5731 = vmatpush.msra.mxu0 0.0
  %5732 = vmatpush.msra.mxu0 0.0
  %5733 = vmatpush.msra.mxu0 0.0
  %5734 = vmatpush.msra.mxu0 0.0
  %5735 = vmatpush.msra.mxu0 0.0
  %5736 = vmatpush.msra.mxu0 0.0
  %5737 = vmatpush.msra.mxu0 0.0
  %5738 = vmatpush.msra.mxu0 0.0
  %5739 = vmatpush.msra.mxu0 0.0
  %5740 = vmatpush.msra.mxu0 0.0
  %5741 = vmatpush.msra.mxu0 0.0
  %5742 = vmatpush.msra.mxu0 0.0
  %5743 = vmatpush.msra.mxu0 0.0
  %5744 = vmatpush.msra.mxu0 %v5510
  %5745 = vmatpush.msra.mxu0 %v5498
  %5746 = vmatmul.f32.gmra.mxu0 %v5543
  %v5747 = vpop.f32.mrf.mxu0
  %v5748 = vadd.f32 0.0, %v5747
  %5749 = vmatmul.f32.gmra.mxu0 %v5546
  %v5750 = vpop.f32.mrf.mxu0
  %v5751 = vadd.f32 0.0, %v5750
  %5752 = vmatmul.f32.gmra.mxu0 %v5549
  %v5753 = vpop.f32.mrf.mxu0
  %v5754 = vadd.f32 0.0, %v5753
  %5755 = vmatmul.f32.gmra.mxu0 %v5552
  %v5756 = vpop.f32.mrf.mxu0
  %v5757 = vadd.f32 0.0, %v5756
  %5758 = vmatmul.f32.gmra.mxu0 %v5555
  %v5759 = vpop.f32.mrf.mxu0
  %v5760 = vadd.f32 0.0, %v5759
  %5761 = vmatmul.f32.gmra.mxu0 %v5558
  %v5762 = vpop.f32.mrf.mxu0
  %v5763 = vadd.f32 0.0, %v5762
  %5764 = vmatmul.f32.gmra.mxu0 %v5561
  %v5765 = vpop.f32.mrf.mxu0
  %v5766 = vadd.f32 0.0, %v5765
  %5767 = vmatmul.f32.gmra.mxu0 %v5564
  %v5768 = vpop.f32.mrf.mxu0
  %v5769 = vadd.f32 0.0, %v5768
  %5770 = vdwg.mxu0
  %5771 = vmatpush.msra.mxu0 0.0
  %5772 = vmatpush.msra.mxu0 0.0
  %5773 = vmatpush.msra.mxu0 0.0
  %5774 = vmatpush.msra.mxu0 0.0
  %5775 = vmatpush.msra.mxu0 0.0
  %5776 = vmatpush.msra.mxu0 0.0
  %5777 = vmatpush.msra.mxu0 0.0
  %5778 = vmatpush.msra.mxu0 0.0
  %5779 = vmatpush.msra.mxu0 0.0
  %5780 = vmatpush.msra.mxu0 0.0
  %5781 = vmatpush.msra.mxu0 0.0
  %5782 = vmatpush.msra.mxu0 0.0
  %5783 = vmatpush.msra.mxu0 0.0
  %5784 = vmatpush.msra.mxu0 0.0
  %5785 = vmatpush.msra.mxu0 %v5511
  %5786 = vmatpush.msra.mxu0 %v5499
  %5787 = vmatmul.f32.gmra.mxu0 %v5543
  %v5788 = vpop.f32.mrf.mxu0
  %v5789 = vadd.f32 0.0, %v5788
  %5790 = vmatmul.f32.gmra.mxu0 %v5546
  %v5791 = vpop.f32.mrf.mxu0
  %v5792 = vadd.f32 0.0, %v5791
  %5793 = vmatmul.f32.gmra.mxu0 %v5549
  %v5794 = vpop.f32.mrf.mxu0
  %v5795 = vadd.f32 0.0, %v5794
  %5796 = vmatmul.f32.gmra.mxu0 %v5552
  %v5797 = vpop.f32.mrf.mxu0
  %v5798 = vadd.f32 0.0, %v5797
  %5799 = vmatmul.f32.gmra.mxu0 %v5555
  %v5800 = vpop.f32.mrf.mxu0
  %v5801 = vadd.f32 0.0, %v5800
  %5802 = vmatmul.f32.gmra.mxu0 %v5558
  %v5803 = vpop.f32.mrf.mxu0
  %v5804 = vadd.f32 0.0, %v5803
  %5805 = vmatmul.f32.gmra.mxu0 %v5561
  %v5806 = vpop.f32.mrf.mxu0
  %v5807 = vadd.f32 0.0, %v5806
  %5808 = vmatmul.f32.gmra.mxu0 %v5564
  %v5809 = vpop.f32.mrf.mxu0
  %v5810 = vadd.f32 0.0, %v5809
  %5811 = vdwg.mxu0
  %5812 = vmatpush.msra.mxu0 0.0
  %5813 = vmatpush.msra.mxu0 0.0
  %5814 = vmatpush.msra.mxu0 0.0
  %5815 = vmatpush.msra.mxu0 0.0
  %5816 = vmatpush.msra.mxu0 0.0
  %5817 = vmatpush.msra.mxu0 0.0
  %5818 = vmatpush.msra.mxu0 0.0
  %5819 = vmatpush.msra.mxu0 0.0
  %5820 = vmatpush.msra.mxu0 0.0
  %5821 = vmatpush.msra.mxu0 0.0
  %5822 = vmatpush.msra.mxu0 0.0
  %5823 = vmatpush.msra.mxu0 0.0
  %5824 = vmatpush.msra.mxu0 0.0
  %5825 = vmatpush.msra.mxu0 0.0
  %5826 = vmatpush.msra.mxu0 %v5512
  %5827 = vmatpush.msra.mxu0 %v5500
  %5828 = vmatmul.f32.gmra.mxu0 %v5543
  %v5829 = vpop.f32.mrf.mxu0
  %v5830 = vadd.f32 0.0, %v5829
  %5831 = vmatmul.f32.gmra.mxu0 %v5546
  %v5832 = vpop.f32.mrf.mxu0
  %v5833 = vadd.f32 0.0, %v5832
  %5834 = vmatmul.f32.gmra.mxu0 %v5549
  %v5835 = vpop.f32.mrf.mxu0
  %v5836 = vadd.f32 0.0, %v5835
  %5837 = vmatmul.f32.gmra.mxu0 %v5552
  %v5838 = vpop.f32.mrf.mxu0
  %v5839 = vadd.f32 0.0, %v5838
  %5840 = vmatmul.f32.gmra.mxu0 %v5555
  %v5841 = vpop.f32.mrf.mxu0
  %v5842 = vadd.f32 0.0, %v5841
  %5843 = vmatmul.f32.gmra.mxu0 %v5558
  %v5844 = vpop.f32.mrf.mxu0
  %v5845 = vadd.f32 0.0, %v5844
  %5846 = vmatmul.f32.gmra.mxu0 %v5561
  %v5847 = vpop.f32.mrf.mxu0
  %v5848 = vadd.f32 0.0, %v5847
  %5849 = vmatmul.f32.gmra.mxu0 %v5564
  %v5850 = vpop.f32.mrf.mxu0
  %v5851 = vadd.f32 0.0, %v5850
  %5852 = vdwg.mxu0
  %5853 = vmatpush.msra.mxu0 0.0
  %5854 = vmatpush.msra.mxu0 0.0
  %5855 = vmatpush.msra.mxu0 0.0
  %5856 = vmatpush.msra.mxu0 0.0
  %5857 = vmatpush.msra.mxu0 0.0
  %5858 = vmatpush.msra.mxu0 0.0
  %5859 = vmatpush.msra.mxu0 0.0
  %5860 = vmatpush.msra.mxu0 0.0
  %5861 = vmatpush.msra.mxu0 0.0
  %5862 = vmatpush.msra.mxu0 0.0
  %5863 = vmatpush.msra.mxu0 0.0
  %5864 = vmatpush.msra.mxu0 0.0
  %5865 = vmatpush.msra.mxu0 0.0
  %5866 = vmatpush.msra.mxu0 0.0
  %5867 = vmatpush.msra.mxu0 %v5513
  %5868 = vmatpush.msra.mxu0 %v5501
  %5869 = vmatmul.f32.gmra.mxu0 %v5543
  %v5870 = vpop.f32.mrf.mxu0
  %v5871 = vadd.f32 0.0, %v5870
  %5872 = vmatmul.f32.gmra.mxu0 %v5546
  %v5873 = vpop.f32.mrf.mxu0
  %v5874 = vadd.f32 0.0, %v5873
  %5875 = vmatmul.f32.gmra.mxu0 %v5549
  %v5876 = vpop.f32.mrf.mxu0
  %v5877 = vadd.f32 0.0, %v5876
  %5878 = vmatmul.f32.gmra.mxu0 %v5552
  %v5879 = vpop.f32.mrf.mxu0
  %v5880 = vadd.f32 0.0, %v5879
  %5881 = vmatmul.f32.gmra.mxu0 %v5555
  %v5882 = vpop.f32.mrf.mxu0
  %v5883 = vadd.f32 0.0, %v5882
  %5884 = vmatmul.f32.gmra.mxu0 %v5558
  %v5885 = vpop.f32.mrf.mxu0
  %v5886 = vadd.f32 0.0, %v5885
  %5887 = vmatmul.f32.gmra.mxu0 %v5561
  %v5888 = vpop.f32.mrf.mxu0
  %v5889 = vadd.f32 0.0, %v5888
  %5890 = vmatmul.f32.gmra.mxu0 %v5564
  %v5891 = vpop.f32.mrf.mxu0
  %v5892 = vadd.f32 0.0, %v5891
  %5893 = vdwg.mxu0
  %5894 = vmatpush.msra.mxu0 0.0
  %5895 = vmatpush.msra.mxu0 0.0
  %5896 = vmatpush.msra.mxu0 0.0
  %5897 = vmatpush.msra.mxu0 0.0
  %5898 = vmatpush.msra.mxu0 0.0
  %5899 = vmatpush.msra.mxu0 0.0
  %5900 = vmatpush.msra.mxu0 0.0
  %5901 = vmatpush.msra.mxu0 0.0
  %5902 = vmatpush.msra.mxu0 0.0
  %5903 = vmatpush.msra.mxu0 0.0
  %5904 = vmatpush.msra.mxu0 0.0
  %5905 = vmatpush.msra.mxu0 0.0
  %5906 = vmatpush.msra.mxu0 0.0
  %5907 = vmatpush.msra.mxu0 0.0
  %5908 = vmatpush.msra.mxu0 %v5514
  %5909 = vmatpush.msra.mxu0 %v5502
  %5910 = vmatmul.f32.gmra.mxu0 %v5543
  %v5911 = vpop.f32.mrf.mxu0
  %v5912 = vadd.f32 0.0, %v5911
  %5913 = vmatmul.f32.gmra.mxu0 %v5546
  %v5914 = vpop.f32.mrf.mxu0
  %v5915 = vadd.f32 0.0, %v5914
  %5916 = vmatmul.f32.gmra.mxu0 %v5549
  %v5917 = vpop.f32.mrf.mxu0
  %v5918 = vadd.f32 0.0, %v5917
  %5919 = vmatmul.f32.gmra.mxu0 %v5552
  %v5920 = vpop.f32.mrf.mxu0
  %v5921 = vadd.f32 0.0, %v5920
  %5922 = vmatmul.f32.gmra.mxu0 %v5555
  %v5923 = vpop.f32.mrf.mxu0
  %v5924 = vadd.f32 0.0, %v5923
  %5925 = vmatmul.f32.gmra.mxu0 %v5558
  %v5926 = vpop.f32.mrf.mxu0
  %v5927 = vadd.f32 0.0, %v5926
  %5928 = vmatmul.f32.gmra.mxu0 %v5561
  %v5929 = vpop.f32.mrf.mxu0
  %v5930 = vadd.f32 0.0, %v5929
  %5931 = vmatmul.f32.gmra.mxu0 %v5564
  %v5932 = vpop.f32.mrf.mxu0
  %v5933 = vadd.f32 0.0, %v5932
  %5934 = vdwg.mxu0
  %5935 = vmatpush.msra.mxu0 0.0
  %5936 = vmatpush.msra.mxu0 0.0
  %5937 = vmatpush.msra.mxu0 0.0
  %5938 = vmatpush.msra.mxu0 0.0
  %5939 = vmatpush.msra.mxu0 0.0
  %5940 = vmatpush.msra.mxu0 0.0
  %5941 = vmatpush.msra.mxu0 0.0
  %5942 = vmatpush.msra.mxu0 0.0
  %5943 = vmatpush.msra.mxu0 0.0
  %5944 = vmatpush.msra.mxu0 0.0
  %5945 = vmatpush.msra.mxu0 0.0
  %5946 = vmatpush.msra.mxu0 0.0
  %5947 = vmatpush.msra.mxu0 0.0
  %5948 = vmatpush.msra.mxu0 0.0
  %5949 = vmatpush.msra.mxu0 %v5515
  %5950 = vmatpush.msra.mxu0 %v5503
  %5951 = vmatmul.f32.gmra.mxu0 %v5543
  %v5952 = vpop.f32.mrf.mxu0
  %v5953 = vadd.f32 0.0, %v5952
  %5954 = vmatmul.f32.gmra.mxu0 %v5546
  %v5955 = vpop.f32.mrf.mxu0
  %v5956 = vadd.f32 0.0, %v5955
  %5957 = vmatmul.f32.gmra.mxu0 %v5549
  %v5958 = vpop.f32.mrf.mxu0
  %v5959 = vadd.f32 0.0, %v5958
  %5960 = vmatmul.f32.gmra.mxu0 %v5552
  %v5961 = vpop.f32.mrf.mxu0
  %v5962 = vadd.f32 0.0, %v5961
  %5963 = vmatmul.f32.gmra.mxu0 %v5555
  %v5964 = vpop.f32.mrf.mxu0
  %v5965 = vadd.f32 0.0, %v5964
  %5966 = vmatmul.f32.gmra.mxu0 %v5558
  %v5967 = vpop.f32.mrf.mxu0
  %v5968 = vadd.f32 0.0, %v5967
  %5969 = vmatmul.f32.gmra.mxu0 %v5561
  %v5970 = vpop.f32.mrf.mxu0
  %v5971 = vadd.f32 0.0, %v5970
  %5972 = vmatmul.f32.gmra.mxu0 %v5564
  %v5973 = vpop.f32.mrf.mxu0
  %v5974 = vadd.f32 0.0, %v5973
  %5975 = vdwg.mxu0
  %5976 = vmatpush.msra.mxu0 0.0
  %5977 = vmatpush.msra.mxu0 0.0
  %5978 = vmatpush.msra.mxu0 0.0
  %5979 = vmatpush.msra.mxu0 0.0
  %5980 = vmatpush.msra.mxu0 0.0
  %5981 = vmatpush.msra.mxu0 0.0
  %5982 = vmatpush.msra.mxu0 0.0
  %5983 = vmatpush.msra.mxu0 0.0
  %5984 = vmatpush.msra.mxu0 0.0
  %5985 = vmatpush.msra.mxu0 0.0
  %5986 = vmatpush.msra.mxu0 0.0
  %5987 = vmatpush.msra.mxu0 0.0
  %5988 = vmatpush.msra.mxu0 0.0
  %5989 = vmatpush.msra.mxu0 0.0
  %5990 = vmatpush.msra.mxu0 %v5516
  %5991 = vmatpush.msra.mxu0 %v5504
  %5992 = vmatmul.f32.gmra.mxu0 %v5543
  %v5993 = vpop.f32.mrf.mxu0
  %v5994 = vadd.f32 0.0, %v5993
  %5995 = vmatmul.f32.gmra.mxu0 %v5546
  %v5996 = vpop.f32.mrf.mxu0
  %v5997 = vadd.f32 0.0, %v5996
  %5998 = vmatmul.f32.gmra.mxu0 %v5549
  %v5999 = vpop.f32.mrf.mxu0
  %v6000 = vadd.f32 0.0, %v5999
  %6001 = vmatmul.f32.gmra.mxu0 %v5552
  %v6002 = vpop.f32.mrf.mxu0
  %v6003 = vadd.f32 0.0, %v6002
  %6004 = vmatmul.f32.gmra.mxu0 %v5555
  %v6005 = vpop.f32.mrf.mxu0
  %v6006 = vadd.f32 0.0, %v6005
  %6007 = vmatmul.f32.gmra.mxu0 %v5558
  %v6008 = vpop.f32.mrf.mxu0
  %v6009 = vadd.f32 0.0, %v6008
  %6010 = vmatmul.f32.gmra.mxu0 %v5561
  %v6011 = vpop.f32.mrf.mxu0
  %v6012 = vadd.f32 0.0, %v6011
  %6013 = vmatmul.f32.gmra.mxu0 %v5564
  %v6014 = vpop.f32.mrf.mxu0
  %v6015 = vadd.f32 0.0, %v6014
  %6016 = vdwg.mxu0
  %6017 = vmatpush.msra.mxu0 0.0
  %6018 = vmatpush.msra.mxu0 0.0
  %6019 = vmatpush.msra.mxu0 0.0
  %6020 = vmatpush.msra.mxu0 0.0
  %6021 = vmatpush.msra.mxu0 0.0
  %6022 = vmatpush.msra.mxu0 0.0
  %6023 = vmatpush.msra.mxu0 0.0
  %6024 = vmatpush.msra.mxu0 0.0
  %6025 = vmatpush.msra.mxu0 0.0
  %6026 = vmatpush.msra.mxu0 0.0
  %6027 = vmatpush.msra.mxu0 0.0
  %6028 = vmatpush.msra.mxu0 0.0
  %6029 = vmatpush.msra.mxu0 0.0
  %6030 = vmatpush.msra.mxu0 0.0
  %6031 = vmatpush.msra.mxu0 %v5517
  %6032 = vmatpush.msra.mxu0 %v5505
  %6033 = vmatmul.f32.gmra.mxu0 %v5543
  %v6034 = vpop.f32.mrf.mxu0
  %v6035 = vadd.f32 0.0, %v6034
  %6036 = vmatmul.f32.gmra.mxu0 %v5546
  %v6037 = vpop.f32.mrf.mxu0
  %v6038 = vadd.f32 0.0, %v6037
  %6039 = vmatmul.f32.gmra.mxu0 %v5549
  %v6040 = vpop.f32.mrf.mxu0
  %v6041 = vadd.f32 0.0, %v6040
  %6042 = vmatmul.f32.gmra.mxu0 %v5552
  %v6043 = vpop.f32.mrf.mxu0
  %v6044 = vadd.f32 0.0, %v6043
  %6045 = vmatmul.f32.gmra.mxu0 %v5555
  %v6046 = vpop.f32.mrf.mxu0
  %v6047 = vadd.f32 0.0, %v6046
  %6048 = vmatmul.f32.gmra.mxu0 %v5558
  %v6049 = vpop.f32.mrf.mxu0
  %v6050 = vadd.f32 0.0, %v6049
  %6051 = vmatmul.f32.gmra.mxu0 %v5561
  %v6052 = vpop.f32.mrf.mxu0
  %v6053 = vadd.f32 0.0, %v6052
  %6054 = vmatmul.f32.gmra.mxu0 %v5564
  %v6055 = vpop.f32.mrf.mxu0
  %v6056 = vadd.f32 0.0, %v6055
  %6057 = vdwg.mxu0
  %v6058 = vadd.f32 %v4958, %v5584
  %v6059 = vadd.f32 %v4999, %v5625
  %v6060 = vadd.f32 %v5040, %v5666
  %v6061 = vadd.f32 %v5081, %v5707
  %v6062 = vadd.f32 %v5122, %v5748
  %v6063 = vadd.f32 %v5163, %v5789
  %v6064 = vadd.f32 %v5204, %v5830
  %v6065 = vadd.f32 %v5245, %v5871
  %v6066 = vadd.f32 %v5286, %v5912
  %v6067 = vadd.f32 %v5327, %v5953
  %v6068 = vadd.f32 %v5368, %v5994
  %v6069 = vadd.f32 %v5409, %v6035
  %v6070 = vadd.f32 %v4961, %v5587
  %v6071 = vadd.f32 %v5002, %v5628
  %v6072 = vadd.f32 %v5043, %v5669
  %v6073 = vadd.f32 %v5084, %v5710
  %v6074 = vadd.f32 %v5125, %v5751
  %v6075 = vadd.f32 %v5166, %v5792
  %v6076 = vadd.f32 %v5207, %v5833
  %v6077 = vadd.f32 %v5248, %v5874
  %v6078 = vadd.f32 %v5289, %v5915
  %v6079 = vadd.f32 %v5330, %v5956
  %v6080 = vadd.f32 %v5371, %v5997
  %v6081 = vadd.f32 %v5412, %v6038
  %v6082 = vadd.f32 %v4964, %v5590
  %v6083 = vadd.f32 %v5005, %v5631
  %v6084 = vadd.f32 %v5046, %v5672
  %v6085 = vadd.f32 %v5087, %v5713
  %v6086 = vadd.f32 %v5128, %v5754
  %v6087 = vadd.f32 %v5169, %v5795
  %v6088 = vadd.f32 %v5210, %v5836
  %v6089 = vadd.f32 %v5251, %v5877
  %v6090 = vadd.f32 %v5292, %v5918
  %v6091 = vadd.f32 %v5333, %v5959
  %v6092 = vadd.f32 %v5374, %v6000
  %v6093 = vadd.f32 %v5415, %v6041
  %v6094 = vadd.f32 %v4967, %v5593
  %v6095 = vadd.f32 %v5008, %v5634
  %v6096 = vadd.f32 %v5049, %v5675
  %v6097 = vadd.f32 %v5090, %v5716
  %v6098 = vadd.f32 %v5131, %v5757
  %v6099 = vadd.f32 %v5172, %v5798
  %v6100 = vadd.f32 %v5213, %v5839
  %v6101 = vadd.f32 %v5254, %v5880
  %v6102 = vadd.f32 %v5295, %v5921
  %v6103 = vadd.f32 %v5336, %v5962
  %v6104 = vadd.f32 %v5377, %v6003
  %v6105 = vadd.f32 %v5418, %v6044
  %v6106 = vadd.f32 %v4970, %v5596
  %v6107 = vadd.f32 %v5011, %v5637
  %v6108 = vadd.f32 %v5052, %v5678
  %v6109 = vadd.f32 %v5093, %v5719
  %v6110 = vadd.f32 %v5134, %v5760
  %v6111 = vadd.f32 %v5175, %v5801
  %v6112 = vadd.f32 %v5216, %v5842
  %v6113 = vadd.f32 %v5257, %v5883
  %v6114 = vadd.f32 %v5298, %v5924
  %v6115 = vadd.f32 %v5339, %v5965
  %v6116 = vadd.f32 %v5380, %v6006
  %v6117 = vadd.f32 %v5421, %v6047
  %v6118 = vadd.f32 %v4973, %v5599
  %v6119 = vadd.f32 %v5014, %v5640
  %v6120 = vadd.f32 %v5055, %v5681
  %v6121 = vadd.f32 %v5096, %v5722
  %v6122 = vadd.f32 %v5137, %v5763
  %v6123 = vadd.f32 %v5178, %v5804
  %v6124 = vadd.f32 %v5219, %v5845
  %v6125 = vadd.f32 %v5260, %v5886
  %v6126 = vadd.f32 %v5301, %v5927
  %v6127 = vadd.f32 %v5342, %v5968
  %v6128 = vadd.f32 %v5383, %v6009
  %v6129 = vadd.f32 %v5424, %v6050
  %v6130 = vadd.f32 %v4976, %v5602
  %v6131 = vadd.f32 %v5017, %v5643
  %v6132 = vadd.f32 %v5058, %v5684
  %v6133 = vadd.f32 %v5099, %v5725
  %v6134 = vadd.f32 %v5140, %v5766
  %v6135 = vadd.f32 %v5181, %v5807
  %v6136 = vadd.f32 %v5222, %v5848
  %v6137 = vadd.f32 %v5263, %v5889
  %v6138 = vadd.f32 %v5304, %v5930
  %v6139 = vadd.f32 %v5345, %v5971
  %v6140 = vadd.f32 %v5386, %v6012
  %v6141 = vadd.f32 %v5427, %v6053
  %v6142 = vadd.f32 %v4979, %v5605
  %v6143 = vadd.f32 %v5020, %v5646
  %v6144 = vadd.f32 %v5061, %v5687
  %v6145 = vadd.f32 %v5102, %v5728
  %v6146 = vadd.f32 %v5143, %v5769
  %v6147 = vadd.f32 %v5184, %v5810
  %v6148 = vadd.f32 %v5225, %v5851
  %v6149 = vadd.f32 %v5266, %v5892
  %v6150 = vadd.f32 %v5307, %v5933
  %v6151 = vadd.f32 %v5348, %v5974
  %v6152 = vadd.f32 %v5389, %v6015
  %v6153 = vadd.f32 %v5430, %v6056
  %v6154 = vadd.f32 %v4084, %v6058
  %v6155 = vadd.f32 %v4085, %v6059
  %v6156 = vadd.f32 %v4086, %v6060
  %v6157 = vadd.f32 %v4087, %v6061
  %v6158 = vadd.f32 %v4088, %v6062
  %v6159 = vadd.f32 %v4089, %v6063
  %v6160 = vadd.f32 %v4090, %v6064
  %v6161 = vadd.f32 %v4091, %v6065
  %v6162 = vadd.f32 %v4092, %v6066
  %v6163 = vadd.f32 %v4093, %v6067
  %v6164 = vadd.f32 %v4094, %v6068
  %v6165 = vadd.f32 %v4095, %v6069
  %v6166 = vadd.f32 %v4096, %v6070
  %v6167 = vadd.f32 %v4097, %v6071
  %v6168 = vadd.f32 %v4098, %v6072
  %v6169 = vadd.f32 %v4099, %v6073
  %v6170 = vadd.f32 %v4100, %v6074
  %v6171 = vadd.f32 %v4101, %v6075
  %v6172 = vadd.f32 %v4102, %v6076
  %v6173 = vadd.f32 %v4103, %v6077
  %v6174 = vadd.f32 %v4104, %v6078
  %v6175 = vadd.f32 %v4105, %v6079
  %v6176 = vadd.f32 %v4106, %v6080
  %v6177 = vadd.f32 %v4107, %v6081
  %v6178 = vadd.f32 %v4108, %v6082
  %v6179 = vadd.f32 %v4109, %v6083
  %v6180 = vadd.f32 %v4110, %v6084
  %v6181 = vadd.f32 %v4111, %v6085
  %v6182 = vadd.f32 %v4112, %v6086
  %v6183 = vadd.f32 %v4113, %v6087
  %v6184 = vadd.f32 %v4114, %v6088
  %v6185 = vadd.f32 %v4115, %v6089
  %v6186 = vadd.f32 %v4116, %v6090
  %v6187 = vadd.f32 %v4117, %v6091
  %v6188 = vadd.f32 %v4118, %v6092
  %v6189 = vadd.f32 %v4119, %v6093
  %v6190 = vadd.f32 %v4120, %v6094
  %v6191 = vadd.f32 %v4121, %v6095
  %v6192 = vadd.f32 %v4122, %v6096
  %v6193 = vadd.f32 %v4123, %v6097
  %v6194 = vadd.f32 %v4124, %v6098
  %v6195 = vadd.f32 %v4125, %v6099
  %v6196 = vadd.f32 %v4126, %v6100
  %v6197 = vadd.f32 %v4127, %v6101
  %v6198 = vadd.f32 %v4128, %v6102
  %v6199 = vadd.f32 %v4129, %v6103
  %v6200 = vadd.f32 %v4130, %v6104
  %v6201 = vadd.f32 %v4131, %v6105
  %v6202 = vadd.f32 %v4132, %v6106
  %v6203 = vadd.f32 %v4133, %v6107
  %v6204 = vadd.f32 %v4134, %v6108
  %v6205 = vadd.f32 %v4135, %v6109
  %v6206 = vadd.f32 %v4136, %v6110
  %v6207 = vadd.f32 %v4137, %v6111
  %v6208 = vadd.f32 %v4138, %v6112
  %v6209 = vadd.f32 %v4139, %v6113
  %v6210 = vadd.f32 %v4140, %v6114
  %v6211 = vadd.f32 %v4141, %v6115
  %v6212 = vadd.f32 %v4142, %v6116
  %v6213 = vadd.f32 %v4143, %v6117
  %v6214 = vadd.f32 %v4144, %v6118
  %v6215 = vadd.f32 %v4145, %v6119
  %v6216 = vadd.f32 %v4146, %v6120
  %v6217 = vadd.f32 %v4147, %v6121
  %v6218 = vadd.f32 %v4148, %v6122
  %v6219 = vadd.f32 %v4149, %v6123
  %v6220 = vadd.f32 %v4150, %v6124
  %v6221 = vadd.f32 %v4151, %v6125
  %v6222 = vadd.f32 %v4152, %v6126
  %v6223 = vadd.f32 %v4153, %v6127
  %v6224 = vadd.f32 %v4154, %v6128
  %v6225 = vadd.f32 %v4155, %v6129
  %v6226 = vadd.f32 %v4156, %v6130
  %v6227 = vadd.f32 %v4157, %v6131
  %v6228 = vadd.f32 %v4158, %v6132
  %v6229 = vadd.f32 %v4159, %v6133
  %v6230 = vadd.f32 %v4160, %v6134
  %v6231 = vadd.f32 %v4161, %v6135
  %v6232 = vadd.f32 %v4162, %v6136
  %v6233 = vadd.f32 %v4163, %v6137
  %v6234 = vadd.f32 %v4164, %v6138
  %v6235 = vadd.f32 %v4165, %v6139
  %v6236 = vadd.f32 %v4166, %v6140
  %v6237 = vadd.f32 %v4167, %v6141
  %v6238 = vadd.f32 %v4168, %v6142
  %v6239 = vadd.f32 %v4169, %v6143
  %v6240 = vadd.f32 %v4170, %v6144
  %v6241 = vadd.f32 %v4171, %v6145
  %v6242 = vadd.f32 %v4172, %v6146
  %v6243 = vadd.f32 %v4173, %v6147
  %v6244 = vadd.f32 %v4174, %v6148
  %v6245 = vadd.f32 %v4175, %v6149
  %v6246 = vadd.f32 %v4176, %v6150
  %v6247 = vadd.f32 %v4177, %v6151
  %v6248 = vadd.f32 %v4178, %v6152
  %v6249 = vadd.f32 %v4179, %v6153
  %v6250 = vadd.f32 %v2110, %v6154
  %v6251 = vadd.f32 %v2111, %v6155
  %v6252 = vadd.f32 %v2112, %v6156
  %v6253 = vadd.f32 %v2113, %v6157
  %v6254 = vadd.f32 %v2114, %v6158
  %v6255 = vadd.f32 %v2115, %v6159
  %v6256 = vadd.f32 %v2116, %v6160
  %v6257 = vadd.f32 %v2117, %v6161
  %v6258 = vadd.f32 %v2118, %v6162
  %v6259 = vadd.f32 %v2119, %v6163
  %v6260 = vadd.f32 %v2120, %v6164
  %v6261 = vadd.f32 %v2121, %v6165
  %v6262 = vadd.f32 %v2122, %v6166
  %v6263 = vadd.f32 %v2123, %v6167
  %v6264 = vadd.f32 %v2124, %v6168
  %v6265 = vadd.f32 %v2125, %v6169
  %v6266 = vadd.f32 %v2126, %v6170
  %v6267 = vadd.f32 %v2127, %v6171
  %v6268 = vadd.f32 %v2128, %v6172
  %v6269 = vadd.f32 %v2129, %v6173
  %v6270 = vadd.f32 %v2130, %v6174
  %v6271 = vadd.f32 %v2131, %v6175
  %v6272 = vadd.f32 %v2132, %v6176
  %v6273 = vadd.f32 %v2133, %v6177
  %v6274 = vadd.f32 %v2134, %v6178
  %v6275 = vadd.f32 %v2135, %v6179
  %v6276 = vadd.f32 %v2136, %v6180
  %v6277 = vadd.f32 %v2137, %v6181
  %v6278 = vadd.f32 %v2138, %v6182
  %v6279 = vadd.f32 %v2139, %v6183
  %v6280 = vadd.f32 %v2140, %v6184
  %v6281 = vadd.f32 %v2141, %v6185
  %v6282 = vadd.f32 %v2142, %v6186
  %v6283 = vadd.f32 %v2143, %v6187
  %v6284 = vadd.f32 %v2144, %v6188
  %v6285 = vadd.f32 %v2145, %v6189
  %v6286 = vadd.f32 %v2146, %v6190
  %v6287 = vadd.f32 %v2147, %v6191
  %v6288 = vadd.f32 %v2148, %v6192
  %v6289 = vadd.f32 %v2149, %v6193
  %v6290 = vadd.f32 %v2150, %v6194
  %v6291 = vadd.f32 %v2151, %v6195
  %v6292 = vadd.f32 %v2152, %v6196
  %v6293 = vadd.f32 %v2153, %v6197
  %v6294 = vadd.f32 %v2154, %v6198
  %v6295 = vadd.f32 %v2155, %v6199
  %v6296 = vadd.f32 %v2156, %v6200
  %v6297 = vadd.f32 %v2157, %v6201
  %v6298 = vadd.f32 %v2158, %v6202
  %v6299 = vadd.f32 %v2159, %v6203
  %v6300 = vadd.f32 %v2160, %v6204
  %v6301 = vadd.f32 %v2161, %v6205
  %v6302 = vadd.f32 %v2162, %v6206
  %v6303 = vadd.f32 %v2163, %v6207
  %v6304 = vadd.f32 %v2164, %v6208
  %v6305 = vadd.f32 %v2165, %v6209
  %v6306 = vadd.f32 %v2166, %v6210
  %v6307 = vadd.f32 %v2167, %v6211
  %v6308 = vadd.f32 %v2168, %v6212
  %v6309 = vadd.f32 %v2169, %v6213
  %v6310 = vadd.f32 %v2170, %v6214
  %v6311 = vadd.f32 %v2171, %v6215
  %v6312 = vadd.f32 %v2172, %v6216
  %v6313 = vadd.f32 %v2173, %v6217
  %v6314 = vadd.f32 %v2174, %v6218
  %v6315 = vadd.f32 %v2175, %v6219
  %v6316 = vadd.f32 %v2176, %v6220
  %v6317 = vadd.f32 %v2177, %v6221
  %v6318 = vadd.f32 %v2178, %v6222
  %v6319 = vadd.f32 %v2179, %v6223
  %v6320 = vadd.f32 %v2180, %v6224
  %v6321 = vadd.f32 %v2181, %v6225
  %v6322 = vadd.f32 %v2182, %v6226
  %v6323 = vadd.f32 %v2183, %v6227
  %v6324 = vadd.f32 %v2184, %v6228
  %v6325 = vadd.f32 %v2185, %v6229
  %v6326 = vadd.f32 %v2186, %v6230
  %v6327 = vadd.f32 %v2187, %v6231
  %v6328 = vadd.f32 %v2188, %v6232
  %v6329 = vadd.f32 %v2189, %v6233
  %v6330 = vadd.f32 %v2190, %v6234
  %v6331 = vadd.f32 %v2191, %v6235
  %v6332 = vadd.f32 %v2192, %v6236
  %v6333 = vadd.f32 %v2193, %v6237
  %v6334 = vadd.f32 %v2194, %v6238
  %v6335 = vadd.f32 %v2195, %v6239
  %v6336 = vadd.f32 %v2196, %v6240
  %v6337 = vadd.f32 %v2197, %v6241
  %v6338 = vadd.f32 %v2198, %v6242
  %v6339 = vadd.f32 %v2199, %v6243
  %v6340 = vadd.f32 %v2200, %v6244
  %v6341 = vadd.f32 %v2201, %v6245
  %v6342 = vadd.f32 %v2202, %v6246
  %v6343 = vadd.f32 %v2203, %v6247
  %v6344 = vadd.f32 %v2204, %v6248
  %v6345 = vadd.f32 %v2205, %v6249
  %v6346 = vmax.f32 %v6250, 0.0
  %v6347 = vmax.f32 %v6251, 0.0
  %v6348 = vmax.f32 %v6252, 0.0
  %v6349 = vmax.f32 %v6253, 0.0
  %v6350 = vmax.f32 %v6254, 0.0
  %v6351 = vmax.f32 %v6255, 0.0
  %v6352 = vmax.f32 %v6256, 0.0
  %v6353 = vmax.f32 %v6257, 0.0
  %v6354 = vmax.f32 %v6258, 0.0
  %v6355 = vmax.f32 %v6259, 0.0
  %v6356 = vmax.f32 %v6260, 0.0
  %v6357 = vmax.f32 %v6261, 0.0
  %v6358 = vmax.f32 %v6262, 0.0
  %v6359 = vmax.f32 %v6263, 0.0
  %v6360 = vmax.f32 %v6264, 0.0
  %v6361 = vmax.f32 %v6265, 0.0
  %v6362 = vmax.f32 %v6266, 0.0
  %v6363 = vmax.f32 %v6267, 0.0
  %v6364 = vmax.f32 %v6268, 0.0
  %v6365 = vmax.f32 %v6269, 0.0
  %v6366 = vmax.f32 %v6270, 0.0
  %v6367 = vmax.f32 %v6271, 0.0
  %v6368 = vmax.f32 %v6272, 0.0
  %v6369 = vmax.f32 %v6273, 0.0
  %v6370 = vmax.f32 %v6274, 0.0
  %v6371 = vmax.f32 %v6275, 0.0
  %v6372 = vmax.f32 %v6276, 0.0
  %v6373 = vmax.f32 %v6277, 0.0
  %v6374 = vmax.f32 %v6278, 0.0
  %v6375 = vmax.f32 %v6279, 0.0
  %v6376 = vmax.f32 %v6280, 0.0
  %v6377 = vmax.f32 %v6281, 0.0
  %v6378 = vmax.f32 %v6282, 0.0
  %v6379 = vmax.f32 %v6283, 0.0
  %v6380 = vmax.f32 %v6284, 0.0
  %v6381 = vmax.f32 %v6285, 0.0
  %v6382 = vmax.f32 %v6286, 0.0
  %v6383 = vmax.f32 %v6287, 0.0
  %v6384 = vmax.f32 %v6288, 0.0
  %v6385 = vmax.f32 %v6289, 0.0
  %v6386 = vmax.f32 %v6290, 0.0
  %v6387 = vmax.f32 %v6291, 0.0
  %v6388 = vmax.f32 %v6292, 0.0
  %v6389 = vmax.f32 %v6293, 0.0
  %v6390 = vmax.f32 %v6294, 0.0
  %v6391 = vmax.f32 %v6295, 0.0
  %v6392 = vmax.f32 %v6296, 0.0
  %v6393 = vmax.f32 %v6297, 0.0
  %v6394 = vmax.f32 %v6298, 0.0
  %v6395 = vmax.f32 %v6299, 0.0
  %v6396 = vmax.f32 %v6300, 0.0
  %v6397 = vmax.f32 %v6301, 0.0
  %v6398 = vmax.f32 %v6302, 0.0
  %v6399 = vmax.f32 %v6303, 0.0
  %v6400 = vmax.f32 %v6304, 0.0
  %v6401 = vmax.f32 %v6305, 0.0
  %v6402 = vmax.f32 %v6306, 0.0
  %v6403 = vmax.f32 %v6307, 0.0
  %v6404 = vmax.f32 %v6308, 0.0
  %v6405 = vmax.f32 %v6309, 0.0
  %v6406 = vmax.f32 %v6310, 0.0
  %v6407 = vmax.f32 %v6311, 0.0
  %v6408 = vmax.f32 %v6312, 0.0
  %v6409 = vmax.f32 %v6313, 0.0
  %v6410 = vmax.f32 %v6314, 0.0
  %v6411 = vmax.f32 %v6315, 0.0
  %v6412 = vmax.f32 %v6316, 0.0
  %v6413 = vmax.f32 %v6317, 0.0
  %v6414 = vmax.f32 %v6318, 0.0
  %v6415 = vmax.f32 %v6319, 0.0
  %v6416 = vmax.f32 %v6320, 0.0
  %v6417 = vmax.f32 %v6321, 0.0
  %v6418 = vmax.f32 %v6322, 0.0
  %v6419 = vmax.f32 %v6323, 0.0
  %v6420 = vmax.f32 %v6324, 0.0
  %v6421 = vmax.f32 %v6325, 0.0
  %v6422 = vmax.f32 %v6326, 0.0
  %v6423 = vmax.f32 %v6327, 0.0
  %v6424 = vmax.f32 %v6328, 0.0
  %v6425 = vmax.f32 %v6329, 0.0
  %v6426 = vmax.f32 %v6330, 0.0
  %v6427 = vmax.f32 %v6331, 0.0
  %v6428 = vmax.f32 %v6332, 0.0
  %v6429 = vmax.f32 %v6333, 0.0
  %v6430 = vmax.f32 %v6334, 0.0
  %v6431 = vmax.f32 %v6335, 0.0
  %v6432 = vmax.f32 %v6336, 0.0
  %v6433 = vmax.f32 %v6337, 0.0
  %v6434 = vmax.f32 %v6338, 0.0
  %v6435 = vmax.f32 %v6339, 0.0
  %v6436 = vmax.f32 %v6340, 0.0
  %v6437 = vmax.f32 %v6341, 0.0
  %v6438 = vmax.f32 %v6342, 0.0
  %v6439 = vmax.f32 %v6343, 0.0
  %v6440 = vmax.f32 %v6344, 0.0
  %v6441 = vmax.f32 %v6345, 0.0
  %v6442 = vld [vmem:[%s3] sm:$0xff]
  %v6443 = vld [vmem:[%s3 + $0x8] sm:$0xff]
  %vm6444 = vcmask 523264
  %v6446 = vsel %vm6444, %v6442, 0
  %v6449 = vsel %vm6444, %v6443, 0
  %6451 = vmatpush.msra.mxu0 0.0
  %6452 = vmatpush.msra.mxu0 0.0
  %6453 = vmatpush.msra.mxu0 0.0
  %6454 = vmatpush.msra.mxu0 0.0
  %6455 = vmatpush.msra.mxu0 0.0
  %6456 = vmatpush.msra.mxu0 0.0
  %6457 = vmatpush.msra.mxu0 0.0
  %6458 = vmatpush.msra.mxu0 0.0
  %6459 = vmatpush.msra.mxu0 %v6430
  %6460 = vmatpush.msra.mxu0 %v6418
  %6461 = vmatpush.msra.mxu0 %v6406
  %6462 = vmatpush.msra.mxu0 %v6394
  %6463 = vmatpush.msra.mxu0 %v6382
  %6464 = vmatpush.msra.mxu0 %v6370
  %6465 = vmatpush.msra.mxu0 %v6358
  %6466 = vmatpush.msra.mxu0 %v6346
  %6467 = vmatmul.f32.gmra.mxu0 %v6446
  %v6468 = vpop.f32.mrf.mxu0
  %v6469 = vadd.f32 0.0, %v6468
  %6470 = vmatmul.f32.gmra.mxu0 %v6449
  %v6471 = vpop.f32.mrf.mxu0
  %v6472 = vadd.f32 0.0, %v6471
  %6473 = vdwg.mxu0
  %6474 = vmatpush.msra.mxu0 0.0
  %6475 = vmatpush.msra.mxu0 0.0
  %6476 = vmatpush.msra.mxu0 0.0
  %6477 = vmatpush.msra.mxu0 0.0
  %6478 = vmatpush.msra.mxu0 0.0
  %6479 = vmatpush.msra.mxu0 0.0
  %6480 = vmatpush.msra.mxu0 0.0
  %6481 = vmatpush.msra.mxu0 0.0
  %6482 = vmatpush.msra.mxu0 %v6431
  %6483 = vmatpush.msra.mxu0 %v6419
  %6484 = vmatpush.msra.mxu0 %v6407
  %6485 = vmatpush.msra.mxu0 %v6395
  %6486 = vmatpush.msra.mxu0 %v6383
  %6487 = vmatpush.msra.mxu0 %v6371
  %6488 = vmatpush.msra.mxu0 %v6359
  %6489 = vmatpush.msra.mxu0 %v6347
  %6490 = vmatmul.f32.gmra.mxu0 %v6446
  %v6491 = vpop.f32.mrf.mxu0
  %v6492 = vadd.f32 0.0, %v6491
  %6493 = vmatmul.f32.gmra.mxu0 %v6449
  %v6494 = vpop.f32.mrf.mxu0
  %v6495 = vadd.f32 0.0, %v6494
  %6496 = vdwg.mxu0
  %6497 = vmatpush.msra.mxu0 0.0
  %6498 = vmatpush.msra.mxu0 0.0
  %6499 = vmatpush.msra.mxu0 0.0
  %6500 = vmatpush.msra.mxu0 0.0
  %6501 = vmatpush.msra.mxu0 0.0
  %6502 = vmatpush.msra.mxu0 0.0
  %6503 = vmatpush.msra.mxu0 0.0
  %6504 = vmatpush.msra.mxu0 0.0
  %6505 = vmatpush.msra.mxu0 %v6432
  %6506 = vmatpush.msra.mxu0 %v6420
  %6507 = vmatpush.msra.mxu0 %v6408
  %6508 = vmatpush.msra.mxu0 %v6396
  %6509 = vmatpush.msra.mxu0 %v6384
  %6510 = vmatpush.msra.mxu0 %v6372
  %6511 = vmatpush.msra.mxu0 %v6360
  %6512 = vmatpush.msra.mxu0 %v6348
  %6513 = vmatmul.f32.gmra.mxu0 %v6446
  %v6514 = vpop.f32.mrf.mxu0
  %v6515 = vadd.f32 0.0, %v6514
  %6516 = vmatmul.f32.gmra.mxu0 %v6449
  %v6517 = vpop.f32.mrf.mxu0
  %v6518 = vadd.f32 0.0, %v6517
  %6519 = vdwg.mxu0
  %6520 = vmatpush.msra.mxu0 0.0
  %6521 = vmatpush.msra.mxu0 0.0
  %6522 = vmatpush.msra.mxu0 0.0
  %6523 = vmatpush.msra.mxu0 0.0
  %6524 = vmatpush.msra.mxu0 0.0
  %6525 = vmatpush.msra.mxu0 0.0
  %6526 = vmatpush.msra.mxu0 0.0
  %6527 = vmatpush.msra.mxu0 0.0
  %6528 = vmatpush.msra.mxu0 %v6433
  %6529 = vmatpush.msra.mxu0 %v6421
  %6530 = vmatpush.msra.mxu0 %v6409
  %6531 = vmatpush.msra.mxu0 %v6397
  %6532 = vmatpush.msra.mxu0 %v6385
  %6533 = vmatpush.msra.mxu0 %v6373
  %6534 = vmatpush.msra.mxu0 %v6361
  %6535 = vmatpush.msra.mxu0 %v6349
  %6536 = vmatmul.f32.gmra.mxu0 %v6446
  %v6537 = vpop.f32.mrf.mxu0
  %v6538 = vadd.f32 0.0, %v6537
  %6539 = vmatmul.f32.gmra.mxu0 %v6449
  %v6540 = vpop.f32.mrf.mxu0
  %v6541 = vadd.f32 0.0, %v6540
  %6542 = vdwg.mxu0
  %6543 = vmatpush.msra.mxu0 0.0
  %6544 = vmatpush.msra.mxu0 0.0
  %6545 = vmatpush.msra.mxu0 0.0
  %6546 = vmatpush.msra.mxu0 0.0
  %6547 = vmatpush.msra.mxu0 0.0
  %6548 = vmatpush.msra.mxu0 0.0
  %6549 = vmatpush.msra.mxu0 0.0
  %6550 = vmatpush.msra.mxu0 0.0
  %6551 = vmatpush.msra.mxu0 %v6434
  %6552 = vmatpush.msra.mxu0 %v6422
  %6553 = vmatpush.msra.mxu0 %v6410
  %6554 = vmatpush.msra.mxu0 %v6398
  %6555 = vmatpush.msra.mxu0 %v6386
  %6556 = vmatpush.msra.mxu0 %v6374
  %6557 = vmatpush.msra.mxu0 %v6362
  %6558 = vmatpush.msra.mxu0 %v6350
  %6559 = vmatmul.f32.gmra.mxu0 %v6446
  %v6560 = vpop.f32.mrf.mxu0
  %v6561 = vadd.f32 0.0, %v6560
  %6562 = vmatmul.f32.gmra.mxu0 %v6449
  %v6563 = vpop.f32.mrf.mxu0
  %v6564 = vadd.f32 0.0, %v6563
  %6565 = vdwg.mxu0
  %6566 = vmatpush.msra.mxu0 0.0
  %6567 = vmatpush.msra.mxu0 0.0
  %6568 = vmatpush.msra.mxu0 0.0
  %6569 = vmatpush.msra.mxu0 0.0
  %6570 = vmatpush.msra.mxu0 0.0
  %6571 = vmatpush.msra.mxu0 0.0
  %6572 = vmatpush.msra.mxu0 0.0
  %6573 = vmatpush.msra.mxu0 0.0
  %6574 = vmatpush.msra.mxu0 %v6435
  %6575 = vmatpush.msra.mxu0 %v6423
  %6576 = vmatpush.msra.mxu0 %v6411
  %6577 = vmatpush.msra.mxu0 %v6399
  %6578 = vmatpush.msra.mxu0 %v6387
  %6579 = vmatpush.msra.mxu0 %v6375
  %6580 = vmatpush.msra.mxu0 %v6363
  %6581 = vmatpush.msra.mxu0 %v6351
  %6582 = vmatmul.f32.gmra.mxu0 %v6446
  %v6583 = vpop.f32.mrf.mxu0
  %v6584 = vadd.f32 0.0, %v6583
  %6585 = vmatmul.f32.gmra.mxu0 %v6449
  %v6586 = vpop.f32.mrf.mxu0
  %v6587 = vadd.f32 0.0, %v6586
  %6588 = vdwg.mxu0
  %6589 = vmatpush.msra.mxu0 0.0
  %6590 = vmatpush.msra.mxu0 0.0
  %6591 = vmatpush.msra.mxu0 0.0
  %6592 = vmatpush.msra.mxu0 0.0
  %6593 = vmatpush.msra.mxu0 0.0
  %6594 = vmatpush.msra.mxu0 0.0
  %6595 = vmatpush.msra.mxu0 0.0
  %6596 = vmatpush.msra.mxu0 0.0
  %6597 = vmatpush.msra.mxu0 %v6436
  %6598 = vmatpush.msra.mxu0 %v6424
  %6599 = vmatpush.msra.mxu0 %v6412
  %6600 = vmatpush.msra.mxu0 %v6400
  %6601 = vmatpush.msra.mxu0 %v6388
  %6602 = vmatpush.msra.mxu0 %v6376
  %6603 = vmatpush.msra.mxu0 %v6364
  %6604 = vmatpush.msra.mxu0 %v6352
  %6605 = vmatmul.f32.gmra.mxu0 %v6446
  %v6606 = vpop.f32.mrf.mxu0
  %v6607 = vadd.f32 0.0, %v6606
  %6608 = vmatmul.f32.gmra.mxu0 %v6449
  %v6609 = vpop.f32.mrf.mxu0
  %v6610 = vadd.f32 0.0, %v6609
  %6611 = vdwg.mxu0
  %6612 = vmatpush.msra.mxu0 0.0
  %6613 = vmatpush.msra.mxu0 0.0
  %6614 = vmatpush.msra.mxu0 0.0
  %6615 = vmatpush.msra.mxu0 0.0
  %6616 = vmatpush.msra.mxu0 0.0
  %6617 = vmatpush.msra.mxu0 0.0
  %6618 = vmatpush.msra.mxu0 0.0
  %6619 = vmatpush.msra.mxu0 0.0
  %6620 = vmatpush.msra.mxu0 %v6437
  %6621 = vmatpush.msra.mxu0 %v6425
  %6622 = vmatpush.msra.mxu0 %v6413
  %6623 = vmatpush.msra.mxu0 %v6401
  %6624 = vmatpush.msra.mxu0 %v6389
  %6625 = vmatpush.msra.mxu0 %v6377
  %6626 = vmatpush.msra.mxu0 %v6365
  %6627 = vmatpush.msra.mxu0 %v6353
  %6628 = vmatmul.f32.gmra.mxu0 %v6446
  %v6629 = vpop.f32.mrf.mxu0
  %v6630 = vadd.f32 0.0, %v6629
  %6631 = vmatmul.f32.gmra.mxu0 %v6449
  %v6632 = vpop.f32.mrf.mxu0
  %v6633 = vadd.f32 0.0, %v6632
  %6634 = vdwg.mxu0
  %6635 = vmatpush.msra.mxu0 0.0
  %6636 = vmatpush.msra.mxu0 0.0
  %6637 = vmatpush.msra.mxu0 0.0
  %6638 = vmatpush.msra.mxu0 0.0
  %6639 = vmatpush.msra.mxu0 0.0
  %6640 = vmatpush.msra.mxu0 0.0
  %6641 = vmatpush.msra.mxu0 0.0
  %6642 = vmatpush.msra.mxu0 0.0
  %6643 = vmatpush.msra.mxu0 %v6438
  %6644 = vmatpush.msra.mxu0 %v6426
  %6645 = vmatpush.msra.mxu0 %v6414
  %6646 = vmatpush.msra.mxu0 %v6402
  %6647 = vmatpush.msra.mxu0 %v6390
  %6648 = vmatpush.msra.mxu0 %v6378
  %6649 = vmatpush.msra.mxu0 %v6366
  %6650 = vmatpush.msra.mxu0 %v6354
  %6651 = vmatmul.f32.gmra.mxu0 %v6446
  %v6652 = vpop.f32.mrf.mxu0
  %v6653 = vadd.f32 0.0, %v6652
  %6654 = vmatmul.f32.gmra.mxu0 %v6449
  %v6655 = vpop.f32.mrf.mxu0
  %v6656 = vadd.f32 0.0, %v6655
  %6657 = vdwg.mxu0
  %6658 = vmatpush.msra.mxu0 0.0
  %6659 = vmatpush.msra.mxu0 0.0
  %6660 = vmatpush.msra.mxu0 0.0
  %6661 = vmatpush.msra.mxu0 0.0
  %6662 = vmatpush.msra.mxu0 0.0
  %6663 = vmatpush.msra.mxu0 0.0
  %6664 = vmatpush.msra.mxu0 0.0
  %6665 = vmatpush.msra.mxu0 0.0
  %6666 = vmatpush.msra.mxu0 %v6439
  %6667 = vmatpush.msra.mxu0 %v6427
  %6668 = vmatpush.msra.mxu0 %v6415
  %6669 = vmatpush.msra.mxu0 %v6403
  %6670 = vmatpush.msra.mxu0 %v6391
  %6671 = vmatpush.msra.mxu0 %v6379
  %6672 = vmatpush.msra.mxu0 %v6367
  %6673 = vmatpush.msra.mxu0 %v6355
  %6674 = vmatmul.f32.gmra.mxu0 %v6446
  %v6675 = vpop.f32.mrf.mxu0
  %v6676 = vadd.f32 0.0, %v6675
  %6677 = vmatmul.f32.gmra.mxu0 %v6449
  %v6678 = vpop.f32.mrf.mxu0
  %v6679 = vadd.f32 0.0, %v6678
  %6680 = vdwg.mxu0
  %6681 = vmatpush.msra.mxu0 0.0
  %6682 = vmatpush.msra.mxu0 0.0
  %6683 = vmatpush.msra.mxu0 0.0
  %6684 = vmatpush.msra.mxu0 0.0
  %6685 = vmatpush.msra.mxu0 0.0
  %6686 = vmatpush.msra.mxu0 0.0
  %6687 = vmatpush.msra.mxu0 0.0
  %6688 = vmatpush.msra.mxu0 0.0
  %6689 = vmatpush.msra.mxu0 %v6440
  %6690 = vmatpush.msra.mxu0 %v6428
  %6691 = vmatpush.msra.mxu0 %v6416
  %6692 = vmatpush.msra.mxu0 %v6404
  %6693 = vmatpush.msra.mxu0 %v6392
  %6694 = vmatpush.msra.mxu0 %v6380
  %6695 = vmatpush.msra.mxu0 %v6368
  %6696 = vmatpush.msra.mxu0 %v6356
  %6697 = vmatmul.f32.gmra.mxu0 %v6446
  %v6698 = vpop.f32.mrf.mxu0
  %v6699 = vadd.f32 0.0, %v6698
  %6700 = vmatmul.f32.gmra.mxu0 %v6449
  %v6701 = vpop.f32.mrf.mxu0
  %v6702 = vadd.f32 0.0, %v6701
  %6703 = vdwg.mxu0
  %6704 = vmatpush.msra.mxu0 0.0
  %6705 = vmatpush.msra.mxu0 0.0
  %6706 = vmatpush.msra.mxu0 0.0
  %6707 = vmatpush.msra.mxu0 0.0
  %6708 = vmatpush.msra.mxu0 0.0
  %6709 = vmatpush.msra.mxu0 0.0
  %6710 = vmatpush.msra.mxu0 0.0
  %6711 = vmatpush.msra.mxu0 0.0
  %6712 = vmatpush.msra.mxu0 %v6441
  %6713 = vmatpush.msra.mxu0 %v6429
  %6714 = vmatpush.msra.mxu0 %v6417
  %6715 = vmatpush.msra.mxu0 %v6405
  %6716 = vmatpush.msra.mxu0 %v6393
  %6717 = vmatpush.msra.mxu0 %v6381
  %6718 = vmatpush.msra.mxu0 %v6369
  %6719 = vmatpush.msra.mxu0 %v6357
  %6720 = vmatmul.f32.gmra.mxu0 %v6446
  %v6721 = vpop.f32.mrf.mxu0
  %v6722 = vadd.f32 0.0, %v6721
  %6723 = vmatmul.f32.gmra.mxu0 %v6449
  %v6724 = vpop.f32.mrf.mxu0
  %v6725 = vadd.f32 0.0, %v6724
  %6726 = vdwg.mxu0
  %6727 = vst [vmem:[%s4] sm:$0xff] %v6469
  %6728 = vst [vmem:[%s4 + $0x8] sm:$0xff] %v6492
  %6729 = vst [vmem:[%s4 + $0x10] sm:$0xff] %v6515
  %6730 = vst [vmem:[%s4 + $0x18] sm:$0xff] %v6538
  %6731 = vst [vmem:[%s4 + $0x20] sm:$0xff] %v6561
  %6732 = vst [vmem:[%s4 + $0x28] sm:$0xff] %v6584
  %6733 = vst [vmem:[%s4 + $0x30] sm:$0xff] %v6607
  %6734 = vst [vmem:[%s4 + $0x38] sm:$0xff] %v6630
  %6735 = vst [vmem:[%s4 + $0x40] sm:$0xff] %v6653
  %6736 = vst [vmem:[%s4 + $0x48] sm:$0xff] %v6676
  %6737 = vst [vmem:[%s4 + $0x50] sm:$0xff] %v6699
  %6738 = vst [vmem:[%s4 + $0x58] sm:$0xff] %v6722
  %6739 = vst [vmem:[%s4 + $0x60] sm:$0xff] %v6472
  %6740 = vst [vmem:[%s4 + $0x68] sm:$0xff] %v6495
  %6741 = vst [vmem:[%s4 + $0x70] sm:$0xff] %v6518
  %6742 = vst [vmem:[%s4 + $0x78] sm:$0xff] %v6541
  %6743 = vst [vmem:[%s4 + $0x80] sm:$0xff] %v6564
  %6744 = vst [vmem:[%s4 + $0x88] sm:$0xff] %v6587
  %6745 = vst [vmem:[%s4 + $0x90] sm:$0xff] %v6610
  %6746 = vst [vmem:[%s4 + $0x98] sm:$0xff] %v6633
  %6747 = vst [vmem:[%s4 + $0xa0] sm:$0xff] %v6656
  %6748 = vst [vmem:[%s4 + $0xa8] sm:$0xff] %v6679
  %6749 = vst [vmem:[%s4 + $0xb0] sm:$0xff] %v6702
  %6750 = vst [vmem:[%s4 + $0xb8] sm:$0xff] %v6725
  // Predicated region
  $region18: #{mlp_forward.1} parent=0 // pred_check
    _
  $region19: #{mlp_forward.1} parent=0 // pred_check_branch
    %6752 = sbr.rel (0) target = $region21
  $region20: #{mlp_forward.1} parent=0 // pred_region
    _
  $region21: #{mlp_forward.1} parent=0 // pred_fallthru
    _
  // Predicated region
  $region22: #{mlp_forward.1} parent=0 // pred_check
    _
  $region23: #{mlp_forward.1} parent=0 // pred_check_branch
    %6754 = sbr.rel (0) target = $region25
  $region24: #{mlp_forward.1} parent=0 // pred_region
    _
  $region25: #{mlp_forward.1} parent=0 // pred_fallthru
    _

</llo_original>
